<compile_context>
chip_gen: v6e
topology: v6e:2x2x1
jax: 0.10.0
libtpu: 0.0.40
codegen_flags: <defaults>
</compile_context>

<pallas_src>
import math

import jax
import jax.numpy as jnp
import numpy as np
from jax.experimental import pallas as pl
from jax.experimental.pallas import tpu as pltpu

EPS = 1e-8
_LANE = 128


# ----------------------------------------------------------------------------
# Pallas kernel: all matmuls / tanh / softmax / weighted reduction hot path.
# Every activation has the sample axis (SB tile) on the lane dimension.
# ----------------------------------------------------------------------------
def enc_apg_mu_kernel(ob_ref, z_ref,
                      w12ob_ref, w12z_ref, b12_ref,   # fused first layer of nss1|nss2
                      w1b_ref, b1b_ref,               # nss1 second layer
                      w2b_ref, b2b_ref,               # nss2 second layer (logits)
                      wh1_ref, bh1_ref,               # fused head first layer (prior folded in)
                      wh2_ref, bh2_ref,               # fused block-diag head second layer
                      out_ref):
    N = ob_ref.shape[0]
    H = w1b_ref.shape[2]
    f32 = jnp.float32
    cdt = w1b_ref.dtype                 # matmul operand dtype (f32 by default)

    ob = ob_ref[...]                    # (N, D, T)  -- T lanes, dense
    z = z_ref[...]                      # (N, K, T)

    # Fused first layer of both per-point MLPs, batched over the N points; the
    # ob / z contractions are kept separate so no concat is ever materialized.
    h = jnp.tanh(
        jnp.einsum('ncd,ndt->nct', w12ob_ref[...], ob, preferred_element_type=f32)
        + jnp.einsum('nck,nkt->nct', w12z_ref[...], z, preferred_element_type=f32)
        + b12_ref[...])                                                      # (N, 2H, T)

    nss1 = (jnp.einsum('njc,nct->njt', w1b_ref[...], h[:, :H, :].astype(cdt),
                       preferred_element_type=f32) + b1b_ref[...])           # (N, J, T)
    logits = (jnp.einsum('nkc,nct->nkt', w2b_ref[...], h[:, H:, :].astype(cdt),
                         preferred_element_type=f32) + b2b_ref[...])         # (N, K, T)

    # Softmax over the K clusters (sublane axis of each point's slab); the
    # normalisation uses the EUP reciprocal instead of a VPU divide.
    m = jnp.max(logits, axis=1, keepdims=True)                               # (N, 1, T)
    e = jnp.exp(logits - m)
    p = e * pl.reciprocal(jnp.sum(e, axis=1, keepdims=True), approx=False)   # (N, K, T)

    # Cluster-weighted mean of nss1 over the N points: broadcast multiply-adds
    # vectorized over (K, J, lanes).  Only the N accumulation is unrolled and it
    # is pure VPU elementwise work (no MXU pushes, no stores) -- this replaces
    # the old per-K loop of matmuls / XLU reductions / masked stores.
    num = p[0, :, None, :] * nss1[0, None, :, :]                             # (K, J, T)
    den = p[0]                                                               # (K, T)
    for n in range(1, N):
        num = num + p[n, :, None, :] * nss1[n, None, :, :]
        den = den + p[n]
    nss = num * pl.reciprocal(den + EPS, approx=False)[:, None, :]           # (K, J, T)

    # Fused heads (mu | log_sigma), batched over the K clusters: one batched
    # matmul + one tanh + one batched matmul + ONE wide lane-dense store.
    hh = jnp.tanh(jnp.einsum('kcj,kjt->kct', wh1_ref[...], nss.astype(cdt),
                             preferred_element_type=f32) + bh1_ref[...])     # (K, 2H, T)
    out_ref[...] = (jnp.einsum('kdc,kct->kdt', wh2_ref[...], hh.astype(cdt),
                               preferred_element_type=f32) + bh2_ref[...])   # (K, 2D, T)


# ----------------------------------------------------------------------------
# Wrapper: layout transposes, parameter fusion / prior folding + pallas_call.
# ----------------------------------------------------------------------------
def enc_apg_mu_pallas(ob, z, prior_mu, prior_sigma, params, *, sb_tile=1024,
                      matmul_dtype=jnp.float32):
    """Returns (q_mu_mu, q_mu_log_sigma), each of shape (S, B, K, D)."""
    S, B, N, D = ob.shape
    K = z.shape[-1]
    H, J = params['w1b'].shape
    SB = S * B
    f32 = jnp.float32
    cdt = jnp.dtype(matmul_dtype)

    # --- Tile / grid selection: the lane axis (SB) must be 128-aligned ----------
    sb_tile = max(_LANE, (int(sb_tile) // _LANE) * _LANE)     # multiple of 128
    if SB > _LANE and math.ceil(SB / sb_tile) < 2:
        # Keep >= 2 parallel grid steps so v7x can shard across its 2 TensorCores.
        sb_tile = _LANE * math.ceil(SB / (2 * _LANE))
    sb_ceil = _LANE * math.ceil(SB / _LANE)                   # smallest 128-aligned cover
    SB_TILE = min(sb_tile, sb_ceil)
    num_tiles = math.ceil(SB / SB_TILE)
    SB_pad = num_tiles * SB_TILE

    # --- Inputs: feature-major, SB on the trailing (lane) axis ------------------
    ob_t = jnp.transpose(ob.reshape(SB, N, D), (1, 2, 0)).astype(cdt)   # (N, D, SB)
    z_t = jnp.transpose(z.reshape(SB, N, K), (1, 2, 0)).astype(cdt)     # (N, K, SB)
    pad = SB_pad - SB
    if pad:
        # Padded lanes are independent finite garbage; sliced off after the call.
        ob_t = jnp.pad(ob_t, ((0, 0), (0, 0), (0, pad)))
        z_t = jnp.pad(z_t, ((0, 0), (0, 0), (0, pad)))

    # --- Fold / fuse parameters (tiny, done once in XLA outside the kernel) -----
    w1a, b1a, w1b, b1b = params['w1a'], params['b1a'], params['w1b'], params['b1b']
    w2a, b2a, w2b, b2b = params['w2a'], params['b2a'], params['w2b'], params['b2b']
    wm1, bm1, wm2, bm2 = params['wm1'], params['bm1'], params['wm2'], params['bm2']
    ws1, bs1, ws2, bs2 = params['ws1'], params['bs1'], params['ws2'], params['bs2']

    def tile_n(w):   # (r, c) -> (N, r, c): batch operand for the per-point matmuls
        return jnp.broadcast_to(w[None], (N,) + w.shape)

    def tile_k(w):   # (r, c) -> (K, r, c): batch operand for the per-cluster heads
        return jnp.broadcast_to(w[None], (K,) + w.shape)

    # Fused first layer of nss1|nss2, transposed (channel-major), split ob/z part.
    w12_T = jnp.concatenate([w1a, w2a], axis=1).T.astype(cdt)             # (2H, D+K)
    w12ob_b = tile_n(w12_T[:, :D])                                        # (N, 2H, D)
    w12z_b = tile_n(w12_T[:, D:])                                         # (N, 2H, K)
    b12 = jnp.concatenate([b1a, b2a], axis=1).T.astype(f32)               # (2H, 1)

    w1b_b = tile_n(w1b.T.astype(cdt))                                     # (N, J, H)
    b1b_t = b1b.T.astype(f32)                                             # (J, 1)
    w2b_b = tile_n(w2b.T.astype(cdt))                                     # (N, K, H)
    b2b_t = b2b.T.astype(f32)                                             # (K, 1)

    # Heads: fold the constant prior into the first-layer bias, fuse mu|log_sigma.
    prior_vec = jnp.concatenate([prior_mu, prior_sigma]).reshape(1, 2 * D).astype(f32)
    b_h1 = jnp.concatenate([bm1 + prior_vec @ wm1[J:],
                            bs1 + prior_vec @ ws1[J:]], axis=1).T.astype(f32)      # (2H, 1)
    w_h1_b = tile_k(jnp.concatenate([wm1[:J], ws1[:J]], axis=1).T.astype(cdt))     # (K, 2H, J)
    w_h2 = jnp.concatenate(
        [jnp.concatenate([wm2, jnp.zeros((H, D), f32)], axis=1),
         jnp.concatenate([jnp.zeros((H, D), f32), ws2], axis=1)], axis=0)          # (2H, 2D)
    w_h2_b = tile_k(w_h2.T.astype(cdt))                                            # (K, 2D, 2H)
    b_h2 = jnp.concatenate([bm2, bs2], axis=1).T.astype(f32)                       # (2D, 1)

    weights = [w12ob_b, w12z_b, b12, w1b_b, b1b_t, w2b_b, b2b_t,
               w_h1_b, b_h1, w_h2_b, b_h2]

    def const_spec(a):
        zeros = (0,) * a.ndim
        return pl.BlockSpec(a.shape, lambda i, _z=zeros: _z)

    in_specs = ([pl.BlockSpec((N, D, SB_TILE), lambda i: (0, 0, i)),
                 pl.BlockSpec((N, K, SB_TILE), lambda i: (0, 0, i))]
                + [const_spec(a) for a in weights])

    # Lane-dense output: one (K, 2D, SB_TILE) block per grid step.
    out_specs = pl.BlockSpec((K, 2 * D, SB_TILE), lambda i: (0, 0, i))
    out_shape = jax.ShapeDtypeStruct((K, 2 * D, SB_pad), f32)

    out = pl.pallas_call(
        enc_apg_mu_kernel,
        out_shape=out_shape,
        grid_spec=pltpu.PrefetchScalarGridSpec(
            num_scalar_prefetch=0,
            grid=(num_tiles,),
            in_specs=in_specs,
            out_specs=out_specs,
        ),
        compiler_params=pltpu.CompilerParams(
            dimension_semantics=("parallel",),          # shards across v7x's 2 TCs
            vmem_limit_bytes=32 * 1024 * 1024),         # safe on v5e/v6e/v7x
    )(ob_t, z_t, *weights)

    # (K, 2D, SB_pad) -> (S, B, K, 2D), then split mu / log_sigma.
    out = jnp.transpose(out[:, :, :SB], (2, 0, 1)).reshape(S, B, K, 2 * D)
    return out[..., :D], out[..., D:]


def enc_apg_mu_forward(ob, z, prior_mu, prior_sigma, params, key, sampled=True,
                       mu_old=None, sb_tile=1024):
    """Full forward: kernel + Normal sampling + log-prob (the `q.normal` trace)."""
    q_mu_mu, q_mu_log_sigma = enc_apg_mu_pallas(ob, z, prior_mu, prior_sigma, params,
                                                sb_tile=sb_tile)
    q_mu_sigma = jnp.exp(q_mu_log_sigma)
    if sampled:
        eps = jax.random.normal(key, q_mu_mu.shape, dtype=jnp.float32)
        mu = q_mu_mu + q_mu_sigma * eps
    else:
        mu = mu_old
    # Normal log-prob (what probtorch stores in the trace for 'means')
    log_prob = (-0.5 * ((mu - q_mu_mu) / q_mu_sigma) ** 2
                - jnp.log(q_mu_sigma) - 0.5 * math.log(2.0 * math.pi))
    return {'means': mu, 'loc': q_mu_mu, 'scale': q_mu_sigma, 'log_prob': log_prob}


# ----------------------------------------------------------------------------
# Pure-JAX reference (mirrors the PyTorch forward) for validation.
# ----------------------------------------------------------------------------
def enc_apg_mu_reference(ob, z, prior_mu, prior_sigma, params):
    S, B, N, D = ob.shape
    K = z.shape[-1]
    x = jnp.concatenate([ob, z], axis=-1)                          # (S,B,N,D+K)
    nss1_raw = jnp.tanh(x @ params['w1a'] + params['b1a']) @ params['w1b'] + params['b1b']
    logits = jnp.tanh(x @ params['w2a'] + params['b2a']) @ params['w2b'] + params['b2b']
    nss2_raw = jax.nn.softmax(logits, axis=-1)                     # (S,B,N,K)
    nss1 = jnp.broadcast_to(nss1_raw[..., None, :],
                            nss1_raw.shape[:-1] + (K, nss1_raw.shape[-1]))
    nss2 = jnp.broadcast_to(nss2_raw[..., None], nss2_raw.shape + (nss1_raw.shape[-1],))
    nss = (nss1 * nss2).sum(2) / (nss2.sum(2) + EPS)               # (S,B,K,J)
    pm = jnp.broadcast_to(prior_mu, (S, B, K, D))
    ps = jnp.broadcast_to(prior_sigma, (S, B, K, D))
    nss_prior = jnp.concatenate([nss, pm, ps], axis=-1)
    q_mu_mu = jnp.tanh(nss_prior @ params['wm1'] + params['bm1']) @ params['wm2'] + params['bm2']
    q_mu_log_sigma = jnp.tanh(nss_prior @ params['ws1'] + params['bs1']) @ params['ws2'] + params['bs2']
    return q_mu_mu, q_mu_log_sigma


# ----------------------------------------------------------------------------
# Deterministic parameter init (matches nn.Linear default: U(-1/sqrt(fan_in), ...))
# ----------------------------------------------------------------------------
def init_linear(key, fan_in, fan_out):
    kw, kb = jax.random.split(key)
    bound = 1.0 / math.sqrt(fan_in)
    w = jax.random.uniform(kw, (fan_in, fan_out), jnp.float32, -bound, bound)
    b = jax.random.uniform(kb, (1, fan_out), jnp.float32, -bound, bound)
    return w, b


def init_params(key, K, D, H, J):
    keys = jax.random.split(key, 8)
    p = {}
    p['w1a'], p['b1a'] = init_linear(keys[0], D + K, H)
    p['w1b'], p['b1b'] = init_linear(keys[1], H, J)
    p['w2a'], p['b2a'] = init_linear(keys[2], D + K, H)
    p['w2b'], p['b2b'] = init_linear(keys[3], H, K)
    p['wm1'], p['bm1'] = init_linear(keys[4], J + 2 * D, H)
    p['wm2'], p['bm2'] = init_linear(keys[5], H, D)
    p['ws1'], p['bs1'] = init_linear(keys[6], J + 2 * D, H)
    p['ws2'], p['bs2'] = init_linear(keys[7], H, D)
    return p


def _run_case(S, B, N, D, K, H, J, seed, sb_tile):
    root = jax.random.PRNGKey(seed)
    k_ob, k_z, k_par, k_samp = jax.random.split(root, 4)

    ob = jax.random.normal(k_ob, (S, B, N, D), dtype=jnp.float32)
    z_idx = jax.random.randint(k_z, (S, B, N), 0, K)
    z = jax.nn.one_hot(z_idx, K, dtype=jnp.float32)

    prior_mu = jnp.zeros((D,), jnp.float32)
    prior_sigma = jnp.ones((D,), jnp.float32) * 2.0

    params = init_params(k_par, K, D, H, J)

    out = enc_apg_mu_forward(ob, z, prior_mu, prior_sigma, params, k_samp,
                             sampled=True, sb_tile=sb_tile)
    jax.block_until_ready(out)

    ref_mu, ref_logsig = enc_apg_mu_reference(ob, z, prior_mu, prior_sigma, params)
    np.testing.assert_allclose(np.asarray(out['loc']), np.asarray(ref_mu),
                               rtol=1e-4, atol=2e-5)
    np.testing.assert_allclose(np.asarray(out['scale']), np.asarray(jnp.exp(ref_logsig)),
                               rtol=1e-4, atol=2e-5)


if __name__ == "__main__":
    # ob is (S, B, N, D), z is (S, B, N, K) -- small shapes consistent with the module.
    # Case 1: SB=6 -> single 128-lane tile, grid=1.
    _run_case(S=2, B=3, N=8, D=4, K=3, H=32, J=8, seed=0, sb_tile=1024)
    # Case 2: SB=264, sb_tile=128 -> 3 grid steps, last tile padded.
    _run_case(S=8, B=33, N=8, D=4, K=3, H=32, J=8, seed=1, sb_tile=128)
    # Case 3: SB=264, default tile -> auto-split into 2 parallel steps (v7x two-TC path).
    _run_case(S=8, B=33, N=8, D=4, K=3, H=32, J=8, seed=2, sb_tile=1024)

    print("KERNEL_OK")
</pallas_src>

<mosaic_0001>
module attributes {stable_mosaic.version = 11 : i64} {
  func.func @enc_apg_mu_kernel(%arg0: i32, %arg1: memref<8x4x128xf32, #tpu.memory_space<vmem>>, %arg2: memref<8x3x128xf32, #tpu.memory_space<vmem>>, %arg3: memref<8x64x4xf32, #tpu.memory_space<vmem>>, %arg4: memref<8x64x3xf32, #tpu.memory_space<vmem>>, %arg5: memref<64x1xf32, #tpu.memory_space<vmem>>, %arg6: memref<8x8x32xf32, #tpu.memory_space<vmem>>, %arg7: memref<8x1xf32, #tpu.memory_space<vmem>>, %arg8: memref<8x3x32xf32, #tpu.memory_space<vmem>>, %arg9: memref<3x1xf32, #tpu.memory_space<vmem>>, %arg10: memref<3x64x8xf32, #tpu.memory_space<vmem>>, %arg11: memref<64x1xf32, #tpu.memory_space<vmem>>, %arg12: memref<3x8x64xf32, #tpu.memory_space<vmem>>, %arg13: memref<8x1xf32, #tpu.memory_space<vmem>>, %arg14: memref<3x8x128xf32, #tpu.memory_space<vmem>>) attributes {dimension_semantics = [#tpu.dimension_semantics<parallel>], iteration_bounds = array<i64: 1>, scalar_prefetch = 0 : i64, scratch_operands = 0 : i64, tpu.core_type = #tpu.core_type<tc>, window_params = [{transform_indices = @transform_0, window_bounds = array<i64: 8, 4, 128>}, {transform_indices = @transform_1, window_bounds = array<i64: 8, 3, 128>}, {pipeline_mode = #tpu.pipeline_mode<synchronous>, transform_indices = @transform_2, window_bounds = array<i64: 8, 64, 4>}, {pipeline_mode = #tpu.pipeline_mode<synchronous>, transform_indices = @transform_3, window_bounds = array<i64: 8, 64, 3>}, {pipeline_mode = #tpu.pipeline_mode<synchronous>, transform_indices = @transform_4, window_bounds = array<i64: 64, 1>}, {pipeline_mode = #tpu.pipeline_mode<synchronous>, transform_indices = @transform_5, window_bounds = array<i64: 8, 8, 32>}, {pipeline_mode = #tpu.pipeline_mode<synchronous>, transform_indices = @transform_6, window_bounds = array<i64: 8, 1>}, {pipeline_mode = #tpu.pipeline_mode<synchronous>, transform_indices = @transform_7, window_bounds = array<i64: 8, 3, 32>}, {pipeline_mode = #tpu.pipeline_mode<synchronous>, transform_indices = @transform_8, window_bounds = array<i64: 3, 1>}, {pipeline_mode = #tpu.pipeline_mode<synchronous>, transform_indices = @transform_9, window_bounds = array<i64: 3, 64, 8>}, {pipeline_mode = #tpu.pipeline_mode<synchronous>, transform_indices = @transform_10, window_bounds = array<i64: 64, 1>}, {pipeline_mode = #tpu.pipeline_mode<synchronous>, transform_indices = @transform_11, window_bounds = array<i64: 3, 8, 64>}, {pipeline_mode = #tpu.pipeline_mode<synchronous>, transform_indices = @transform_12, window_bounds = array<i64: 8, 1>}, {transform_indices = @transform_13, window_bounds = array<i64: 3, 8, 128>}]} {
    %c0 = arith.constant 0 : index
    %c0_0 = arith.constant 0 : index
    %c0_1 = arith.constant 0 : index
    %0 = vector.load %arg1[%c0, %c0_0, %c0_1] : memref<8x4x128xf32, #tpu.memory_space<vmem>>, vector<8x4x128xf32>
    %c0_2 = arith.constant 0 : index
    %c0_3 = arith.constant 0 : index
    %c0_4 = arith.constant 0 : index
    %1 = vector.load %arg2[%c0_2, %c0_3, %c0_4] : memref<8x3x128xf32, #tpu.memory_space<vmem>>, vector<8x3x128xf32>
    %c0_5 = arith.constant 0 : index
    %c0_6 = arith.constant 0 : index
    %c0_7 = arith.constant 0 : index
    %2 = vector.load %arg3[%c0_5, %c0_6, %c0_7] : memref<8x64x4xf32, #tpu.memory_space<vmem>>, vector<8x64x4xf32>
    "tpu.trace_start"() <{level = 10 : i32, message = "ncd,ndt->nct"}> : () -> ()
    %cst = arith.constant dense<0.000000e+00> : vector<8x64x128xf32>
    %3 = tpu.matmul %2, %0, %cst {dimension_numbers = #tpu.dot_dimension_numbers<[2], [1], [1], [2], [0, 0, 0, 1, 1, 2], [0], [0]>} : vector<8x64x4xf32>, vector<8x4x128xf32>, vector<8x64x128xf32> -> vector<8x64x128xf32>
    "tpu.trace_stop"() : () -> ()
    %c0_8 = arith.constant 0 : index
    %c0_9 = arith.constant 0 : index
    %c0_10 = arith.constant 0 : index
    %4 = vector.load %arg4[%c0_8, %c0_9, %c0_10] : memref<8x64x3xf32, #tpu.memory_space<vmem>>, vector<8x64x3xf32>
    "tpu.trace_start"() <{level = 10 : i32, message = "nck,nkt->nct"}> : () -> ()
    %cst_11 = arith.constant dense<0.000000e+00> : vector<8x64x128xf32>
    %5 = tpu.matmul %4, %1, %cst_11 {dimension_numbers = #tpu.dot_dimension_numbers<[2], [1], [1], [2], [0, 0, 0, 1, 1, 2], [0], [0]>} : vector<8x64x3xf32>, vector<8x3x128xf32>, vector<8x64x128xf32> -> vector<8x64x128xf32>
    "tpu.trace_stop"() : () -> ()
    %6 = arith.addf %3, %5 : vector<8x64x128xf32>
    %c0_12 = arith.constant 0 : index
    %c0_13 = arith.constant 0 : index
    %7 = vector.load %arg5[%c0_12, %c0_13] : memref<64x1xf32, #tpu.memory_space<vmem>>, vector<64x1xf32>
    %8 = vector.shape_cast %7 : vector<64x1xf32> to vector<1x64x1xf32>
    %9 = vector.broadcast %8 : vector<1x64x1xf32> to vector<8x64x128xf32>
    %10 = arith.addf %6, %9 : vector<8x64x128xf32>
    %11 = math.tanh %10 : vector<8x64x128xf32>
    %c0_14 = arith.constant 0 : index
    %c0_15 = arith.constant 0 : index
    %c0_16 = arith.constant 0 : index
    %12 = vector.load %arg6[%c0_14, %c0_15, %c0_16] : memref<8x8x32xf32, #tpu.memory_space<vmem>>, vector<8x8x32xf32>
    %13 = vector.extract_strided_slice %11 {offsets = [0, 0, 0], sizes = [8, 32, 128], strides = [1, 1, 1]} : vector<8x64x128xf32> to vector<8x32x128xf32>
    "tpu.trace_start"() <{level = 10 : i32, message = "njc,nct->njt"}> : () -> ()
    %cst_17 = arith.constant dense<0.000000e+00> : vector<8x8x128xf32>
    %14 = tpu.matmul %12, %13, %cst_17 {dimension_numbers = #tpu.dot_dimension_numbers<[2], [1], [1], [2], [0, 0, 0, 1, 1, 2], [0], [0]>} : vector<8x8x32xf32>, vector<8x32x128xf32>, vector<8x8x128xf32> -> vector<8x8x128xf32>
    "tpu.trace_stop"() : () -> ()
    %c0_18 = arith.constant 0 : index
    %c0_19 = arith.constant 0 : index
    %15 = vector.load %arg7[%c0_18, %c0_19] : memref<8x1xf32, #tpu.memory_space<vmem>>, vector<8x1xf32>
    %16 = vector.shape_cast %15 : vector<8x1xf32> to vector<1x8x1xf32>
    %17 = vector.broadcast %16 : vector<1x8x1xf32> to vector<8x8x128xf32>
    %18 = arith.addf %14, %17 : vector<8x8x128xf32>
    %c0_20 = arith.constant 0 : index
    %c0_21 = arith.constant 0 : index
    %c0_22 = arith.constant 0 : index
    %19 = vector.load %arg8[%c0_20, %c0_21, %c0_22] : memref<8x3x32xf32, #tpu.memory_space<vmem>>, vector<8x3x32xf32>
    %20 = vector.extract_strided_slice %11 {offsets = [0, 32, 0], sizes = [8, 32, 128], strides = [1, 1, 1]} : vector<8x64x128xf32> to vector<8x32x128xf32>
    "tpu.trace_start"() <{level = 10 : i32, message = "nkc,nct->nkt"}> : () -> ()
    %cst_23 = arith.constant dense<0.000000e+00> : vector<8x3x128xf32>
    %21 = tpu.matmul %19, %20, %cst_23 {dimension_numbers = #tpu.dot_dimension_numbers<[2], [1], [1], [2], [0, 0, 0, 1, 1, 2], [0], [0]>} : vector<8x3x32xf32>, vector<8x32x128xf32>, vector<8x3x128xf32> -> vector<8x3x128xf32>
    "tpu.trace_stop"() : () -> ()
    %c0_24 = arith.constant 0 : index
    %c0_25 = arith.constant 0 : index
    %22 = vector.load %arg9[%c0_24, %c0_25] : memref<3x1xf32, #tpu.memory_space<vmem>>, vector<3x1xf32>
    %23 = vector.shape_cast %22 : vector<3x1xf32> to vector<1x3x1xf32>
    %24 = vector.broadcast %23 : vector<1x3x1xf32> to vector<8x3x128xf32>
    %25 = arith.addf %21, %24 : vector<8x3x128xf32>
    %cst_26 = arith.constant dense<0xFF800000> : vector<8x128xf32>
    %26 = vector.multi_reduction <maximumf>, %25, %cst_26 [1] : vector<8x3x128xf32> to vector<8x128xf32>
    %27 = vector.shape_cast %26 : vector<8x128xf32> to vector<8x1x128xf32>
    %28 = vector.broadcast %27 : vector<8x1x128xf32> to vector<8x3x128xf32>
    %29 = arith.subf %25, %28 : vector<8x3x128xf32>
    %30 = math.exp %29 : vector<8x3x128xf32>
    %cst_27 = arith.constant dense<0.000000e+00> : vector<8x128xf32>
    %31 = vector.multi_reduction <add>, %30, %cst_27 [1] : vector<8x3x128xf32> to vector<8x128xf32>
    %32 = vector.shape_cast %31 : vector<8x128xf32> to vector<8x1x128xf32>
    %33 = tpu.reciprocal %32 : vector<8x1x128xf32> -> vector<8x1x128xf32>
    %34 = vector.broadcast %33 : vector<8x1x128xf32> to vector<8x3x128xf32>
    %35 = arith.mulf %30, %34 : vector<8x3x128xf32>
    %36 = vector.extract_strided_slice %35 {offsets = [0, 0, 0], sizes = [1, 3, 128], strides = [1, 1, 1]} : vector<8x3x128xf32> to vector<1x3x128xf32>
    %37 = vector.shape_cast %36 : vector<1x3x128xf32> to vector<3x128xf32>
    %38 = vector.shape_cast %37 : vector<3x128xf32> to vector<3x1x128xf32>
    %39 = vector.extract_strided_slice %18 {offsets = [0, 0, 0], sizes = [1, 8, 128], strides = [1, 1, 1]} : vector<8x8x128xf32> to vector<1x8x128xf32>
    %40 = vector.shape_cast %39 : vector<1x8x128xf32> to vector<8x128xf32>
    %41 = vector.shape_cast %40 : vector<8x128xf32> to vector<1x8x128xf32>
    %42 = vector.broadcast %38 : vector<3x1x128xf32> to vector<3x8x128xf32>
    %43 = vector.broadcast %41 : vector<1x8x128xf32> to vector<3x8x128xf32>
    %44 = arith.mulf %42, %43 : vector<3x8x128xf32>
    %45 = vector.extract_strided_slice %35 {offsets = [0, 0, 0], sizes = [1, 3, 128], strides = [1, 1, 1]} : vector<8x3x128xf32> to vector<1x3x128xf32>
    %46 = vector.shape_cast %45 : vector<1x3x128xf32> to vector<3x128xf32>
    %47 = vector.extract_strided_slice %35 {offsets = [1, 0, 0], sizes = [1, 3, 128], strides = [1, 1, 1]} : vector<8x3x128xf32> to vector<1x3x128xf32>
    %48 = vector.shape_cast %47 : vector<1x3x128xf32> to vector<3x128xf32>
    %49 = vector.shape_cast %48 : vector<3x128xf32> to vector<3x1x128xf32>
    %50 = vector.extract_strided_slice %18 {offsets = [1, 0, 0], sizes = [1, 8, 128], strides = [1, 1, 1]} : vector<8x8x128xf32> to vector<1x8x128xf32>
    %51 = vector.shape_cast %50 : vector<1x8x128xf32> to vector<8x128xf32>
    %52 = vector.shape_cast %51 : vector<8x128xf32> to vector<1x8x128xf32>
    %53 = vector.broadcast %49 : vector<3x1x128xf32> to vector<3x8x128xf32>
    %54 = vector.broadcast %52 : vector<1x8x128xf32> to vector<3x8x128xf32>
    %55 = arith.mulf %53, %54 : vector<3x8x128xf32>
    %56 = arith.addf %44, %55 : vector<3x8x128xf32>
    %57 = vector.extract_strided_slice %35 {offsets = [1, 0, 0], sizes = [1, 3, 128], strides = [1, 1, 1]} : vector<8x3x128xf32> to vector<1x3x128xf32>
    %58 = vector.shape_cast %57 : vector<1x3x128xf32> to vector<3x128xf32>
    %59 = arith.addf %46, %58 : vector<3x128xf32>
    %60 = vector.extract_strided_slice %35 {offsets = [2, 0, 0], sizes = [1, 3, 128], strides = [1, 1, 1]} : vector<8x3x128xf32> to vector<1x3x128xf32>
    %61 = vector.shape_cast %60 : vector<1x3x128xf32> to vector<3x128xf32>
    %62 = vector.shape_cast %61 : vector<3x128xf32> to vector<3x1x128xf32>
    %63 = vector.extract_strided_slice %18 {offsets = [2, 0, 0], sizes = [1, 8, 128], strides = [1, 1, 1]} : vector<8x8x128xf32> to vector<1x8x128xf32>
    %64 = vector.shape_cast %63 : vector<1x8x128xf32> to vector<8x128xf32>
    %65 = vector.shape_cast %64 : vector<8x128xf32> to vector<1x8x128xf32>
    %66 = vector.broadcast %62 : vector<3x1x128xf32> to vector<3x8x128xf32>
    %67 = vector.broadcast %65 : vector<1x8x128xf32> to vector<3x8x128xf32>
    %68 = arith.mulf %66, %67 : vector<3x8x128xf32>
    %69 = arith.addf %56, %68 : vector<3x8x128xf32>
    %70 = vector.extract_strided_slice %35 {offsets = [2, 0, 0], sizes = [1, 3, 128], strides = [1, 1, 1]} : vector<8x3x128xf32> to vector<1x3x128xf32>
    %71 = vector.shape_cast %70 : vector<1x3x128xf32> to vector<3x128xf32>
    %72 = arith.addf %59, %71 : vector<3x128xf32>
    %73 = vector.extract_strided_slice %35 {offsets = [3, 0, 0], sizes = [1, 3, 128], strides = [1, 1, 1]} : vector<8x3x128xf32> to vector<1x3x128xf32>
    %74 = vector.shape_cast %73 : vector<1x3x128xf32> to vector<3x128xf32>
    %75 = vector.shape_cast %74 : vector<3x128xf32> to vector<3x1x128xf32>
    %76 = vector.extract_strided_slice %18 {offsets = [3, 0, 0], sizes = [1, 8, 128], strides = [1, 1, 1]} : vector<8x8x128xf32> to vector<1x8x128xf32>
    %77 = vector.shape_cast %76 : vector<1x8x128xf32> to vector<8x128xf32>
    %78 = vector.shape_cast %77 : vector<8x128xf32> to vector<1x8x128xf32>
    %79 = vector.broadcast %75 : vector<3x1x128xf32> to vector<3x8x128xf32>
    %80 = vector.broadcast %78 : vector<1x8x128xf32> to vector<3x8x128xf32>
    %81 = arith.mulf %79, %80 : vector<3x8x128xf32>
    %82 = arith.addf %69, %81 : vector<3x8x128xf32>
    %83 = vector.extract_strided_slice %35 {offsets = [3, 0, 0], sizes = [1, 3, 128], strides = [1, 1, 1]} : vector<8x3x128xf32> to vector<1x3x128xf32>
    %84 = vector.shape_cast %83 : vector<1x3x128xf32> to vector<3x128xf32>
    %85 = arith.addf %72, %84 : vector<3x128xf32>
    %86 = vector.extract_strided_slice %35 {offsets = [4, 0, 0], sizes = [1, 3, 128], strides = [1, 1, 1]} : vector<8x3x128xf32> to vector<1x3x128xf32>
    %87 = vector.shape_cast %86 : vector<1x3x128xf32> to vector<3x128xf32>
    %88 = vector.shape_cast %87 : vector<3x128xf32> to vector<3x1x128xf32>
    %89 = vector.extract_strided_slice %18 {offsets = [4, 0, 0], sizes = [1, 8, 128], strides = [1, 1, 1]} : vector<8x8x128xf32> to vector<1x8x128xf32>
    %90 = vector.shape_cast %89 : vector<1x8x128xf32> to vector<8x128xf32>
    %91 = vector.shape_cast %90 : vector<8x128xf32> to vector<1x8x128xf32>
    %92 = vector.broadcast %88 : vector<3x1x128xf32> to vector<3x8x128xf32>
    %93 = vector.broadcast %91 : vector<1x8x128xf32> to vector<3x8x128xf32>
    %94 = arith.mulf %92, %93 : vector<3x8x128xf32>
    %95 = arith.addf %82, %94 : vector<3x8x128xf32>
    %96 = vector.extract_strided_slice %35 {offsets = [4, 0, 0], sizes = [1, 3, 128], strides = [1, 1, 1]} : vector<8x3x128xf32> to vector<1x3x128xf32>
    %97 = vector.shape_cast %96 : vector<1x3x128xf32> to vector<3x128xf32>
    %98 = arith.addf %85, %97 : vector<3x128xf32>
    %99 = vector.extract_strided_slice %35 {offsets = [5, 0, 0], sizes = [1, 3, 128], strides = [1, 1, 1]} : vector<8x3x128xf32> to vector<1x3x128xf32>
    %100 = vector.shape_cast %99 : vector<1x3x128xf32> to vector<3x128xf32>
    %101 = vector.shape_cast %100 : vector<3x128xf32> to vector<3x1x128xf32>
    %102 = vector.extract_strided_slice %18 {offsets = [5, 0, 0], sizes = [1, 8, 128], strides = [1, 1, 1]} : vector<8x8x128xf32> to vector<1x8x128xf32>
    %103 = vector.shape_cast %102 : vector<1x8x128xf32> to vector<8x128xf32>
    %104 = vector.shape_cast %103 : vector<8x128xf32> to vector<1x8x128xf32>
    %105 = vector.broadcast %101 : vector<3x1x128xf32> to vector<3x8x128xf32>
    %106 = vector.broadcast %104 : vector<1x8x128xf32> to vector<3x8x128xf32>
    %107 = arith.mulf %105, %106 : vector<3x8x128xf32>
    %108 = arith.addf %95, %107 : vector<3x8x128xf32>
    %109 = vector.extract_strided_slice %35 {offsets = [5, 0, 0], sizes = [1, 3, 128], strides = [1, 1, 1]} : vector<8x3x128xf32> to vector<1x3x128xf32>
    %110 = vector.shape_cast %109 : vector<1x3x128xf32> to vector<3x128xf32>
    %111 = arith.addf %98, %110 : vector<3x128xf32>
    %112 = vector.extract_strided_slice %35 {offsets = [6, 0, 0], sizes = [1, 3, 128], strides = [1, 1, 1]} : vector<8x3x128xf32> to vector<1x3x128xf32>
    %113 = vector.shape_cast %112 : vector<1x3x128xf32> to vector<3x128xf32>
    %114 = vector.shape_cast %113 : vector<3x128xf32> to vector<3x1x128xf32>
    %115 = vector.extract_strided_slice %18 {offsets = [6, 0, 0], sizes = [1, 8, 128], strides = [1, 1, 1]} : vector<8x8x128xf32> to vector<1x8x128xf32>
    %116 = vector.shape_cast %115 : vector<1x8x128xf32> to vector<8x128xf32>
    %117 = vector.shape_cast %116 : vector<8x128xf32> to vector<1x8x128xf32>
    %118 = vector.broadcast %114 : vector<3x1x128xf32> to vector<3x8x128xf32>
    %119 = vector.broadcast %117 : vector<1x8x128xf32> to vector<3x8x128xf32>
    %120 = arith.mulf %118, %119 : vector<3x8x128xf32>
    %121 = arith.addf %108, %120 : vector<3x8x128xf32>
    %122 = vector.extract_strided_slice %35 {offsets = [6, 0, 0], sizes = [1, 3, 128], strides = [1, 1, 1]} : vector<8x3x128xf32> to vector<1x3x128xf32>
    %123 = vector.shape_cast %122 : vector<1x3x128xf32> to vector<3x128xf32>
    %124 = arith.addf %111, %123 : vector<3x128xf32>
    %125 = vector.extract_strided_slice %35 {offsets = [7, 0, 0], sizes = [1, 3, 128], strides = [1, 1, 1]} : vector<8x3x128xf32> to vector<1x3x128xf32>
    %126 = vector.shape_cast %125 : vector<1x3x128xf32> to vector<3x128xf32>
    %127 = vector.shape_cast %126 : vector<3x128xf32> to vector<3x1x128xf32>
    %128 = vector.extract_strided_slice %18 {offsets = [7, 0, 0], sizes = [1, 8, 128], strides = [1, 1, 1]} : vector<8x8x128xf32> to vector<1x8x128xf32>
    %129 = vector.shape_cast %128 : vector<1x8x128xf32> to vector<8x128xf32>
    %130 = vector.shape_cast %129 : vector<8x128xf32> to vector<1x8x128xf32>
    %131 = vector.broadcast %127 : vector<3x1x128xf32> to vector<3x8x128xf32>
    %132 = vector.broadcast %130 : vector<1x8x128xf32> to vector<3x8x128xf32>
    %133 = arith.mulf %131, %132 : vector<3x8x128xf32>
    %134 = arith.addf %121, %133 : vector<3x8x128xf32>
    %135 = vector.extract_strided_slice %35 {offsets = [7, 0, 0], sizes = [1, 3, 128], strides = [1, 1, 1]} : vector<8x3x128xf32> to vector<1x3x128xf32>
    %136 = vector.shape_cast %135 : vector<1x3x128xf32> to vector<3x128xf32>
    %137 = arith.addf %124, %136 : vector<3x128xf32>
    %cst_28 = arith.constant 9.99999993E-9 : f32
    %138 = vector.broadcast %cst_28 : f32 to vector<3x128xf32>
    %139 = arith.addf %137, %138 : vector<3x128xf32>
    %140 = tpu.reciprocal %139 : vector<3x128xf32> -> vector<3x128xf32>
    %141 = vector.shape_cast %140 : vector<3x128xf32> to vector<3x1x128xf32>
    %142 = vector.broadcast %141 : vector<3x1x128xf32> to vector<3x8x128xf32>
    %143 = arith.mulf %134, %142 : vector<3x8x128xf32>
    %c0_29 = arith.constant 0 : index
    %c0_30 = arith.constant 0 : index
    %c0_31 = arith.constant 0 : index
    %144 = vector.load %arg10[%c0_29, %c0_30, %c0_31] : memref<3x64x8xf32, #tpu.memory_space<vmem>>, vector<3x64x8xf32>
    "tpu.trace_start"() <{level = 10 : i32, message = "kcj,kjt->kct"}> : () -> ()
    %cst_32 = arith.constant dense<0.000000e+00> : vector<3x64x128xf32>
    %145 = tpu.matmul %144, %143, %cst_32 {dimension_numbers = #tpu.dot_dimension_numbers<[2], [1], [1], [2], [0, 0, 0, 1, 1, 2], [0], [0]>} : vector<3x64x8xf32>, vector<3x8x128xf32>, vector<3x64x128xf32> -> vector<3x64x128xf32>
    "tpu.trace_stop"() : () -> ()
    %c0_33 = arith.constant 0 : index
    %c0_34 = arith.constant 0 : index
    %146 = vector.load %arg11[%c0_33, %c0_34] : memref<64x1xf32, #tpu.memory_space<vmem>>, vector<64x1xf32>
    %147 = vector.shape_cast %146 : vector<64x1xf32> to vector<1x64x1xf32>
    %148 = vector.broadcast %147 : vector<1x64x1xf32> to vector<3x64x128xf32>
    %149 = arith.addf %145, %148 : vector<3x64x128xf32>
    %150 = math.tanh %149 : vector<3x64x128xf32>
    %c0_35 = arith.constant 0 : index
    %c0_36 = arith.constant 0 : index
    %c0_37 = arith.constant 0 : index
    %151 = vector.load %arg12[%c0_35, %c0_36, %c0_37] : memref<3x8x64xf32, #tpu.memory_space<vmem>>, vector<3x8x64xf32>
    "tpu.trace_start"() <{level = 10 : i32, message = "kdc,kct->kdt"}> : () -> ()
    %cst_38 = arith.constant dense<0.000000e+00> : vector<3x8x128xf32>
    %152 = tpu.matmul %151, %150, %cst_38 {dimension_numbers = #tpu.dot_dimension_numbers<[2], [1], [1], [2], [0, 0, 0, 1, 1, 2], [0], [0]>} : vector<3x8x64xf32>, vector<3x64x128xf32>, vector<3x8x128xf32> -> vector<3x8x128xf32>
    "tpu.trace_stop"() : () -> ()
    %c0_39 = arith.constant 0 : index
    %c0_40 = arith.constant 0 : index
    %153 = vector.load %arg13[%c0_39, %c0_40] : memref<8x1xf32, #tpu.memory_space<vmem>>, vector<8x1xf32>
    %154 = vector.shape_cast %153 : vector<8x1xf32> to vector<1x8x1xf32>
    %155 = vector.broadcast %154 : vector<1x8x1xf32> to vector<3x8x128xf32>
    %156 = arith.addf %152, %155 : vector<3x8x128xf32>
    %c0_41 = arith.constant 0 : index
    %c0_42 = arith.constant 0 : index
    %c0_43 = arith.constant 0 : index
    %157 = vector.load %arg14[%c0_41, %c0_42, %c0_43] : memref<3x8x128xf32, #tpu.memory_space<vmem>>, vector<3x8x128xf32>
    tpu.vector_store %arg14[%c0_41, %c0_42, %c0_43], %156 {strides = array<i32>} : memref<3x8x128xf32, #tpu.memory_space<vmem>>, vector<3x8x128xf32>,
    return
  }
  func.func @transform_0(%arg0: i32) -> (i32, i32, i32) {
    %c0_i32 = arith.constant 0 : i32
    %c0_i32_0 = arith.constant 0 : i32
    %c0_i32_1 = arith.constant 0 : i32
    return %c0_i32, %c0_i32_0, %arg0 : i32, i32, i32
  }
  func.func @transform_1(%arg0: i32) -> (i32, i32, i32) {
    %c0_i32 = arith.constant 0 : i32
    %c0_i32_0 = arith.constant 0 : i32
    %c0_i32_1 = arith.constant 0 : i32
    return %c0_i32, %c0_i32_0, %arg0 : i32, i32, i32
  }
  func.func @transform_2(%arg0: i32) -> (i32, i32, i32) {
    %c0_i32 = arith.constant 0 : i32
    %c0_i32_0 = arith.constant 0 : i32
    %c0_i32_1 = arith.constant 0 : i32
    %c0_i32_2 = arith.constant 0 : i32
    return %c0_i32, %c0_i32_0, %c0_i32_1 : i32, i32, i32
  }
  func.func @transform_3(%arg0: i32) -> (i32, i32, i32) {
    %c0_i32 = arith.constant 0 : i32
    %c0_i32_0 = arith.constant 0 : i32
    %c0_i32_1 = arith.constant 0 : i32
    %c0_i32_2 = arith.constant 0 : i32
    return %c0_i32, %c0_i32_0, %c0_i32_1 : i32, i32, i32
  }
  func.func @transform_4(%arg0: i32) -> (i32, i32) {
    %c0_i32 = arith.constant 0 : i32
    %c0_i32_0 = arith.constant 0 : i32
    %c0_i32_1 = arith.constant 0 : i32
    return %c0_i32, %c0_i32_0 : i32, i32
  }
  func.func @transform_5(%arg0: i32) -> (i32, i32, i32) {
    %c0_i32 = arith.constant 0 : i32
    %c0_i32_0 = arith.constant 0 : i32
    %c0_i32_1 = arith.constant 0 : i32
    %c0_i32_2 = arith.constant 0 : i32
    return %c0_i32, %c0_i32_0, %c0_i32_1 : i32, i32, i32
  }
  func.func @transform_6(%arg0: i32) -> (i32, i32) {
    %c0_i32 = arith.constant 0 : i32
    %c0_i32_0 = arith.constant 0 : i32
    %c0_i32_1 = arith.constant 0 : i32
    return %c0_i32, %c0_i32_0 : i32, i32
  }
  func.func @transform_7(%arg0: i32) -> (i32, i32, i32) {
    %c0_i32 = arith.constant 0 : i32
    %c0_i32_0 = arith.constant 0 : i32
    %c0_i32_1 = arith.constant 0 : i32
    %c0_i32_2 = arith.constant 0 : i32
    return %c0_i32, %c0_i32_0, %c0_i32_1 : i32, i32, i32
  }
  func.func @transform_8(%arg0: i32) -> (i32, i32) {
    %c0_i32 = arith.constant 0 : i32
    %c0_i32_0 = arith.constant 0 : i32
    %c0_i32_1 = arith.constant 0 : i32
    return %c0_i32, %c0_i32_0 : i32, i32
  }
  func.func @transform_9(%arg0: i32) -> (i32, i32, i32) {
    %c0_i32 = arith.constant 0 : i32
    %c0_i32_0 = arith.constant 0 : i32
    %c0_i32_1 = arith.constant 0 : i32
    %c0_i32_2 = arith.constant 0 : i32
    return %c0_i32, %c0_i32_0, %c0_i32_1 : i32, i32, i32
  }
  func.func @transform_10(%arg0: i32) -> (i32, i32) {
    %c0_i32 = arith.constant 0 : i32
    %c0_i32_0 = arith.constant 0 : i32
    %c0_i32_1 = arith.constant 0 : i32
    return %c0_i32, %c0_i32_0 : i32, i32
  }
  func.func @transform_11(%arg0: i32) -> (i32, i32, i32) {
    %c0_i32 = arith.constant 0 : i32
    %c0_i32_0 = arith.constant 0 : i32
    %c0_i32_1 = arith.constant 0 : i32
    %c0_i32_2 = arith.constant 0 : i32
    return %c0_i32, %c0_i32_0, %c0_i32_1 : i32, i32, i32
  }
  func.func @transform_12(%arg0: i32) -> (i32, i32) {
    %c0_i32 = arith.constant 0 : i32
    %c0_i32_0 = arith.constant 0 : i32
    %c0_i32_1 = arith.constant 0 : i32
    return %c0_i32, %c0_i32_0 : i32, i32
  }
  func.func @transform_13(%arg0: i32) -> (i32, i32, i32) {
    %c0_i32 = arith.constant 0 : i32
    %c0_i32_0 = arith.constant 0 : i32
    %c0_i32_1 = arith.constant 0 : i32
    return %c0_i32, %c0_i32_0, %arg0 : i32, i32, i32
  }
}

</mosaic_0001>

<llo_original>
// kernel: tpu_custom_call.1
$region0: #{tpu_custom_call.1}
  #allocation0 [shape = 'u32[]', space=smem, size = 0x4, offset = 0x4, fixed_abs, tag = 'smem constant byte address 0x4 - core index']
  #allocation1 [shape = 'u32[144,128]{1,0:T(1,128)}', space=vmem, size = 0x12000, scoped, tag = 'internal scratch']
  %s0 = inlined_call_operand.vmem [shape: f32[8,4,128], index: 0, kind: input, shape index: {}]
  %s1 = inlined_call_operand.vmem [shape: f32[8,3,128], index: 1, kind: input, shape index: {}]
  %s2 = inlined_call_operand.vmem [shape: f32[8,64,4], index: 2, kind: input, shape index: {}]
  %s3 = inlined_call_operand.vmem [shape: f32[8,64,3], index: 3, kind: input, shape index: {}]
  %s4 = inlined_call_operand.vmem [shape: f32[64,1], index: 4, kind: input, shape index: {}]
  %s5 = inlined_call_operand.vmem [shape: f32[8,8,32], index: 5, kind: input, shape index: {}]
  %s6 = inlined_call_operand.vmem [shape: f32[8,1], index: 6, kind: input, shape index: {}]
  %s7 = inlined_call_operand.vmem [shape: f32[8,3,32], index: 7, kind: input, shape index: {}]
  %s8 = inlined_call_operand.vmem [shape: f32[3,1], index: 8, kind: input, shape index: {}]
  %s9 = inlined_call_operand.vmem [shape: f32[3,64,8], index: 9, kind: input, shape index: {}]
  %s10 = inlined_call_operand.vmem [shape: f32[64,1], index: 10, kind: input, shape index: {}]
  %s11 = inlined_call_operand.vmem [shape: f32[3,8,64], index: 11, kind: input, shape index: {}]
  %s12 = inlined_call_operand.vmem [shape: f32[8,1], index: 12, kind: input, shape index: {}]
  %s13 = inlined_call_operand.hbm [shape: f32[3,8,128], index: 13, kind: output, shape index: {}]
  %s14 = sld [smem:[#allocation0]]
  $region62: #{tpu_custom_call.1} parent=0
    _
  %s16 = ssub.s32 1, %s14
  %s17 = scalar_select 0, %s16, %s14
  $region1: #{tpu_custom_call.1} parent=0
    #allocation2 [shape = 'u8[12288]{0}', space=vmem, size = 0x3000, scoped, tag = 'output window, operand 0, single buffered']
    #allocation3 [shape = 's32[1]{0}', space=sflag, size = 0x4, scoped, tag = 'scoped memory for tpu_custom_call.1']
    %18 = vsyncpa [#allocation3], 0
    // Predicated region
    $region2: #{tpu_custom_call.1} parent=1 // pred_check
      _
    $region3: #{tpu_custom_call.1} parent=1 // pred_check_branch
      %20 = sbr.rel (0) target = $region5
    $region4: #{tpu_custom_call.1} parent=1 // pred_region
      _
    $region5: #{tpu_custom_call.1} parent=1 // pred_fallthru
      _
    // Predicated region
    $region6: #{tpu_custom_call.1} parent=1 // pred_check
      _
    $region7: #{tpu_custom_call.1} parent=1 // pred_check_branch
      %22 = sbr.rel (0) target = $region9
    $region8: #{tpu_custom_call.1} parent=1 // pred_region
      _
    $region9: #{tpu_custom_call.1} parent=1 // pred_fallthru
      _
    // Predicated region
    $region10: #{tpu_custom_call.1} parent=1 // pred_check
      _
    $region11: #{tpu_custom_call.1} parent=1 // pred_check_branch
      %24 = sbr.rel (0) target = $region13
    $region12: #{tpu_custom_call.1} parent=1 // pred_region
      _
    $region13: #{tpu_custom_call.1} parent=1 // pred_fallthru
      _
    // Predicated region
    $region14: #{tpu_custom_call.1} parent=1 // pred_check
      _
    $region15: #{tpu_custom_call.1} parent=1 // pred_check_branch
      %26 = sbr.rel (0) target = $region17
    $region16: #{tpu_custom_call.1} parent=1 // pred_region
      _
    $region17: #{tpu_custom_call.1} parent=1 // pred_fallthru
      _
    // Predicated region
    $region18: #{tpu_custom_call.1} parent=1 // pred_check
      _
    $region19: #{tpu_custom_call.1} parent=1 // pred_check_branch
      %28 = sbr.rel (0) target = $region21
    $region20: #{tpu_custom_call.1} parent=1 // pred_region
      _
    $region21: #{tpu_custom_call.1} parent=1 // pred_fallthru
      _
    // Predicated region
    $region22: #{tpu_custom_call.1} parent=1 // pred_check
      _
    $region23: #{tpu_custom_call.1} parent=1 // pred_check_branch
      %30 = sbr.rel (0) target = $region25
    $region24: #{tpu_custom_call.1} parent=1 // pred_region
      _
    $region25: #{tpu_custom_call.1} parent=1 // pred_fallthru
      _
    // Predicated region
    $region26: #{tpu_custom_call.1} parent=1 // pred_check
      _
    $region27: #{tpu_custom_call.1} parent=1 // pred_check_branch
      %32 = sbr.rel (0) target = $region29
    $region28: #{tpu_custom_call.1} parent=1 // pred_region
      _
    $region29: #{tpu_custom_call.1} parent=1 // pred_fallthru
      _
    // Predicated region
    $region30: #{tpu_custom_call.1} parent=1 // pred_check
      _
    $region31: #{tpu_custom_call.1} parent=1 // pred_check_branch
      %34 = sbr.rel (0) target = $region33
    $region32: #{tpu_custom_call.1} parent=1 // pred_region
      _
    $region33: #{tpu_custom_call.1} parent=1 // pred_fallthru
      _
    // Predicated region
    $region34: #{tpu_custom_call.1} parent=1 // pred_check
      _
    $region35: #{tpu_custom_call.1} parent=1 // pred_check_branch
      %36 = sbr.rel (0) target = $region37
    $region36: #{tpu_custom_call.1} parent=1 // pred_region
      _
    $region37: #{tpu_custom_call.1} parent=1 // pred_fallthru
      _
    // Predicated region
    $region38: #{tpu_custom_call.1} parent=1 // pred_check
      _
    $region39: #{tpu_custom_call.1} parent=1 // pred_check_branch
      %38 = sbr.rel (0) target = $region41
    $region40: #{tpu_custom_call.1} parent=1 // pred_region
      _
    $region41: #{tpu_custom_call.1} parent=1 // pred_fallthru
      _
    // Predicated region
    $region42: #{tpu_custom_call.1} parent=1 // pred_check
      _
    $region43: #{tpu_custom_call.1} parent=1 // pred_check_branch
      %40 = sbr.rel (0) target = $region45
    $region44: #{tpu_custom_call.1} parent=1 // pred_region
      _
    $region45: #{tpu_custom_call.1} parent=1 // pred_fallthru
      _
    // Predicated region
    $region46: #{tpu_custom_call.1} parent=1 // pred_check
      _
    $region47: #{tpu_custom_call.1} parent=1 // pred_check_branch
      %42 = sbr.rel (0) target = $region49
    $region48: #{tpu_custom_call.1} parent=1 // pred_region
      _
    $region49: #{tpu_custom_call.1} parent=1 // pred_fallthru
      _
    // Predicated region
    $region50: #{tpu_custom_call.1} parent=1 // pred_check
      _
    $region51: #{tpu_custom_call.1} parent=1 // pred_check_branch
      %44 = sbr.rel (0) target = $region53
    $region52: #{tpu_custom_call.1} parent=1 // pred_region
      _
    $region53: #{tpu_custom_call.1} parent=1 // pred_fallthru
      _
    %v45 = vld [vmem:[%s0] sm:$0xf]
    %v46 = vld [vmem:[%s0 + $0x4] sm:$0xf]
    %v47 = vld [vmem:[%s0 + $0x8] sm:$0xf]
    %v48 = vld [vmem:[%s0 + $0xc] sm:$0xf]
    %v49 = vld [vmem:[%s0 + $0x10] sm:$0xf]
    %v50 = vld [vmem:[%s0 + $0x14] sm:$0xf]
    %v51 = vld [vmem:[%s0 + $0x18] sm:$0xf]
    %v52 = vld [vmem:[%s0 + $0x1c] sm:$0xf]
    %v53 = vld [vmem:[%s1] sm:$0x7]
    %v54 = vld [vmem:[%s1 + $0x4] sm:$0x7]
    %v55 = vld [vmem:[%s1 + $0x8] sm:$0x7]
    %v56 = vld [vmem:[%s1 + $0xc] sm:$0x7]
    %v57 = vld [vmem:[%s1 + $0x10] sm:$0x7]
    %v58 = vld [vmem:[%s1 + $0x14] sm:$0x7]
    %v59 = vld [vmem:[%s1 + $0x18] sm:$0x7]
    %v60 = vld [vmem:[%s1 + $0x1c] sm:$0x7]
    %v61 = vld [vmem:[%s2] sm:$0xff]
    %v62 = vld [vmem:[%s2 + $0x8] sm:$0xff]
    %v63 = vld [vmem:[%s2 + $0x10] sm:$0xff]
    %v64 = vld [vmem:[%s2 + $0x18] sm:$0xff]
    %v65 = vld [vmem:[%s2 + $0x20] sm:$0xff]
    %v66 = vld [vmem:[%s2 + $0x28] sm:$0xff]
    %v67 = vld [vmem:[%s2 + $0x30] sm:$0xff]
    %v68 = vld [vmem:[%s2 + $0x38] sm:$0xff]
    %v69 = vld [vmem:[%s2 + $0x40] sm:$0xff]
    %v70 = vld [vmem:[%s2 + $0x48] sm:$0xff]
    %v71 = vld [vmem:[%s2 + $0x50] sm:$0xff]
    %v72 = vld [vmem:[%s2 + $0x58] sm:$0xff]
    %v73 = vld [vmem:[%s2 + $0x60] sm:$0xff]
    %v74 = vld [vmem:[%s2 + $0x68] sm:$0xff]
    %v75 = vld [vmem:[%s2 + $0x70] sm:$0xff]
    %v76 = vld [vmem:[%s2 + $0x78] sm:$0xff]
    %v77 = vld [vmem:[%s2 + $0x80] sm:$0xff]
    %v78 = vld [vmem:[%s2 + $0x88] sm:$0xff]
    %v79 = vld [vmem:[%s2 + $0x90] sm:$0xff]
    %v80 = vld [vmem:[%s2 + $0x98] sm:$0xff]
    %v81 = vld [vmem:[%s2 + $0xa0] sm:$0xff]
    %v82 = vld [vmem:[%s2 + $0xa8] sm:$0xff]
    %v83 = vld [vmem:[%s2 + $0xb0] sm:$0xff]
    %v84 = vld [vmem:[%s2 + $0xb8] sm:$0xff]
    %v85 = vld [vmem:[%s2 + $0xc0] sm:$0xff]
    %v86 = vld [vmem:[%s2 + $0xc8] sm:$0xff]
    %v87 = vld [vmem:[%s2 + $0xd0] sm:$0xff]
    %v88 = vld [vmem:[%s2 + $0xd8] sm:$0xff]
    %v89 = vld [vmem:[%s2 + $0xe0] sm:$0xff]
    %v90 = vld [vmem:[%s2 + $0xe8] sm:$0xff]
    %v91 = vld [vmem:[%s2 + $0xf0] sm:$0xff]
    %v92 = vld [vmem:[%s2 + $0xf8] sm:$0xff]
    %v93 = vld [vmem:[%s2 + $0x100] sm:$0xff]
    %v94 = vld [vmem:[%s2 + $0x108] sm:$0xff]
    %v95 = vld [vmem:[%s2 + $0x110] sm:$0xff]
    %v96 = vld [vmem:[%s2 + $0x118] sm:$0xff]
    %v97 = vld [vmem:[%s2 + $0x120] sm:$0xff]
    %v98 = vld [vmem:[%s2 + $0x128] sm:$0xff]
    %v99 = vld [vmem:[%s2 + $0x130] sm:$0xff]
    %v100 = vld [vmem:[%s2 + $0x138] sm:$0xff]
    %v101 = vld [vmem:[%s2 + $0x140] sm:$0xff]
    %v102 = vld [vmem:[%s2 + $0x148] sm:$0xff]
    %v103 = vld [vmem:[%s2 + $0x150] sm:$0xff]
    %v104 = vld [vmem:[%s2 + $0x158] sm:$0xff]
    %v105 = vld [vmem:[%s2 + $0x160] sm:$0xff]
    %v106 = vld [vmem:[%s2 + $0x168] sm:$0xff]
    %v107 = vld [vmem:[%s2 + $0x170] sm:$0xff]
    %v108 = vld [vmem:[%s2 + $0x178] sm:$0xff]
    %v109 = vld [vmem:[%s2 + $0x180] sm:$0xff]
    %v110 = vld [vmem:[%s2 + $0x188] sm:$0xff]
    %v111 = vld [vmem:[%s2 + $0x190] sm:$0xff]
    %v112 = vld [vmem:[%s2 + $0x198] sm:$0xff]
    %v113 = vld [vmem:[%s2 + $0x1a0] sm:$0xff]
    %v114 = vld [vmem:[%s2 + $0x1a8] sm:$0xff]
    %v115 = vld [vmem:[%s2 + $0x1b0] sm:$0xff]
    %v116 = vld [vmem:[%s2 + $0x1b8] sm:$0xff]
    %v117 = vld [vmem:[%s2 + $0x1c0] sm:$0xff]
    %v118 = vld [vmem:[%s2 + $0x1c8] sm:$0xff]
    %v119 = vld [vmem:[%s2 + $0x1d0] sm:$0xff]
    %v120 = vld [vmem:[%s2 + $0x1d8] sm:$0xff]
    %v121 = vld [vmem:[%s2 + $0x1e0] sm:$0xff]
    %v122 = vld [vmem:[%s2 + $0x1e8] sm:$0xff]
    %v123 = vld [vmem:[%s2 + $0x1f0] sm:$0xff]
    %v124 = vld [vmem:[%s2 + $0x1f8] sm:$0xff]
    %v125 = vld [vmem:[%s3] sm:$0xff]
    %v126 = vld [vmem:[%s3 + $0x8] sm:$0xff]
    %v127 = vld [vmem:[%s3 + $0x10] sm:$0xff]
    %v128 = vld [vmem:[%s3 + $0x18] sm:$0xff]
    %v129 = vld [vmem:[%s3 + $0x20] sm:$0xff]
    %v130 = vld [vmem:[%s3 + $0x28] sm:$0xff]
    %v131 = vld [vmem:[%s3 + $0x30] sm:$0xff]
    %v132 = vld [vmem:[%s3 + $0x38] sm:$0xff]
    %v133 = vld [vmem:[%s3 + $0x40] sm:$0xff]
    %v134 = vld [vmem:[%s3 + $0x48] sm:$0xff]
    %v135 = vld [vmem:[%s3 + $0x50] sm:$0xff]
    %v136 = vld [vmem:[%s3 + $0x58] sm:$0xff]
    %v137 = vld [vmem:[%s3 + $0x60] sm:$0xff]
    %v138 = vld [vmem:[%s3 + $0x68] sm:$0xff]
    %v139 = vld [vmem:[%s3 + $0x70] sm:$0xff]
    %v140 = vld [vmem:[%s3 + $0x78] sm:$0xff]
    %v141 = vld [vmem:[%s3 + $0x80] sm:$0xff]
    %v142 = vld [vmem:[%s3 + $0x88] sm:$0xff]
    %v143 = vld [vmem:[%s3 + $0x90] sm:$0xff]
    %v144 = vld [vmem:[%s3 + $0x98] sm:$0xff]
    %v145 = vld [vmem:[%s3 + $0xa0] sm:$0xff]
    %v146 = vld [vmem:[%s3 + $0xa8] sm:$0xff]
    %v147 = vld [vmem:[%s3 + $0xb0] sm:$0xff]
    %v148 = vld [vmem:[%s3 + $0xb8] sm:$0xff]
    %v149 = vld [vmem:[%s3 + $0xc0] sm:$0xff]
    %v150 = vld [vmem:[%s3 + $0xc8] sm:$0xff]
    %v151 = vld [vmem:[%s3 + $0xd0] sm:$0xff]
    %v152 = vld [vmem:[%s3 + $0xd8] sm:$0xff]
    %v153 = vld [vmem:[%s3 + $0xe0] sm:$0xff]
    %v154 = vld [vmem:[%s3 + $0xe8] sm:$0xff]
    %v155 = vld [vmem:[%s3 + $0xf0] sm:$0xff]
    %v156 = vld [vmem:[%s3 + $0xf8] sm:$0xff]
    %v157 = vld [vmem:[%s3 + $0x100] sm:$0xff]
    %v158 = vld [vmem:[%s3 + $0x108] sm:$0xff]
    %v159 = vld [vmem:[%s3 + $0x110] sm:$0xff]
    %v160 = vld [vmem:[%s3 + $0x118] sm:$0xff]
    %v161 = vld [vmem:[%s3 + $0x120] sm:$0xff]
    %v162 = vld [vmem:[%s3 + $0x128] sm:$0xff]
    %v163 = vld [vmem:[%s3 + $0x130] sm:$0xff]
    %v164 = vld [vmem:[%s3 + $0x138] sm:$0xff]
    %v165 = vld [vmem:[%s3 + $0x140] sm:$0xff]
    %v166 = vld [vmem:[%s3 + $0x148] sm:$0xff]
    %v167 = vld [vmem:[%s3 + $0x150] sm:$0xff]
    %v168 = vld [vmem:[%s3 + $0x158] sm:$0xff]
    %v169 = vld [vmem:[%s3 + $0x160] sm:$0xff]
    %v170 = vld [vmem:[%s3 + $0x168] sm:$0xff]
    %v171 = vld [vmem:[%s3 + $0x170] sm:$0xff]
    %v172 = vld [vmem:[%s3 + $0x178] sm:$0xff]
    %v173 = vld [vmem:[%s3 + $0x180] sm:$0xff]
    %v174 = vld [vmem:[%s3 + $0x188] sm:$0xff]
    %v175 = vld [vmem:[%s3 + $0x190] sm:$0xff]
    %v176 = vld [vmem:[%s3 + $0x198] sm:$0xff]
    %v177 = vld [vmem:[%s3 + $0x1a0] sm:$0xff]
    %v178 = vld [vmem:[%s3 + $0x1a8] sm:$0xff]
    %v179 = vld [vmem:[%s3 + $0x1b0] sm:$0xff]
    %v180 = vld [vmem:[%s3 + $0x1b8] sm:$0xff]
    %v181 = vld [vmem:[%s3 + $0x1c0] sm:$0xff]
    %v182 = vld [vmem:[%s3 + $0x1c8] sm:$0xff]
    %v183 = vld [vmem:[%s3 + $0x1d0] sm:$0xff]
    %v184 = vld [vmem:[%s3 + $0x1d8] sm:$0xff]
    %v185 = vld [vmem:[%s3 + $0x1e0] sm:$0xff]
    %v186 = vld [vmem:[%s3 + $0x1e8] sm:$0xff]
    %v187 = vld [vmem:[%s3 + $0x1f0] sm:$0xff]
    %v188 = vld [vmem:[%s3 + $0x1f8] sm:$0xff]
    %vm189 = vcmask 23552
    %v191 = vsel %vm189, %v125, 0
    %v194 = vsel %vm189, %v126, 0
    %v197 = vsel %vm189, %v127, 0
    %v200 = vsel %vm189, %v128, 0
    %v203 = vsel %vm189, %v129, 0
    %v206 = vsel %vm189, %v130, 0
    %v209 = vsel %vm189, %v131, 0
    %v212 = vsel %vm189, %v132, 0
    %vm214 = vcmask 1042432
    %v216 = vsel %vm214, %v53, 0
    %218 = vmatprep.subr.mxu0 0.0
    %219 = vmatpush1.msra.mxu0 0.0
    %220 = vmatprep.subr.mxu0 0.0
    %221 = vmatpush1.msra.mxu0 0.0
    %222 = vmatprep.subr.mxu0 0.0
    %223 = vmatpush1.msra.mxu0 0.0
    %224 = vmatprep.subr.mxu0 0.0
    %225 = vmatpush1.msra.mxu0 0.0
    %226 = vmatprep.subr.mxu0 0.0
    %227 = vmatpush1.msra.mxu0 0.0
    %228 = vmatprep.subr.mxu0 0.0
    %229 = vmatpush1.msra.mxu0 0.0
    %230 = vmatprep.subr.mxu0 0.0
    %231 = vmatpush1.msra.mxu0 0.0
    %232 = vmatprep.subr.mxu0 0.0
    %233 = vmatpush1.msra.mxu0 0.0
    %234 = vmatprep.subr.mxu0 0.0
    %235 = vmatpush1.msra.mxu0 0.0
    %236 = vmatprep.subr.mxu0 0.0
    %237 = vmatpush1.msra.mxu0 0.0
    %238 = vmatprep.subr.mxu0 0.0
    %239 = vmatpush1.msra.mxu0 0.0
    %240 = vmatprep.subr.mxu0 0.0
    %241 = vmatpush1.msra.mxu0 0.0
    %242 = vmatprep.subr.mxu0 0.0
    %243 = vmatpush1.msra.mxu0 0.0
    %244 = vmatprep.subr.mxu0 0.0
    %245 = vmatpush1.msra.mxu0 0.0
    %246 = vmatprep.subr.mxu0 0.0
    %247 = vmatpush1.msra.mxu0 0.0
    %248 = vmatprep.subr.mxu0 0.0
    %249 = vmatpush1.msra.mxu0 %v216
    %250 = vmatprep.subr.mxu0 0.0
    %251 = vmatpush2.msra.mxu0 0.0
    %252 = vmatprep.subr.mxu0 0.0
    %253 = vmatpush2.msra.mxu0 0.0
    %254 = vmatprep.subr.mxu0 0.0
    %255 = vmatpush2.msra.mxu0 0.0
    %256 = vmatprep.subr.mxu0 0.0
    %257 = vmatpush2.msra.mxu0 0.0
    %258 = vmatprep.subr.mxu0 0.0
    %259 = vmatpush2.msra.mxu0 0.0
    %260 = vmatprep.subr.mxu0 0.0
    %261 = vmatpush2.msra.mxu0 0.0
    %262 = vmatprep.subr.mxu0 0.0
    %263 = vmatpush2.msra.mxu0 0.0
    %264 = vmatprep.subr.mxu0 0.0
    %265 = vmatpush2.msra.mxu0 0.0
    %266 = vmatprep.subr.mxu0 0.0
    %267 = vmatpush2.msra.mxu0 0.0
    %268 = vmatprep.subr.mxu0 0.0
    %269 = vmatpush2.msra.mxu0 0.0
    %270 = vmatprep.subr.mxu0 0.0
    %271 = vmatpush2.msra.mxu0 0.0
    %272 = vmatprep.subr.mxu0 0.0
    %273 = vmatpush2.msra.mxu0 0.0
    %274 = vmatprep.subr.mxu0 0.0
    %275 = vmatpush2.msra.mxu0 0.0
    %276 = vmatprep.subr.mxu0 0.0
    %277 = vmatpush2.msra.mxu0 0.0
    %278 = vmatprep.subr.mxu0 0.0
    %279 = vmatpush2.msra.mxu0 0.0
    %280 = vmatprep.subr.mxu0 0.0
    %281 = vmatpush2.msra.mxu0 0.0
    %282 = vmatprep.mubr.f32.mxu0 0.0
    %283 = vmatmul.mubr.f32.gmra.mxu0 %v191
    %v284 = vpop.f32.mrf.mxu0
    %v285 = vadd.f32 0.0, %v284
    %v286 = vpop.f32.mrf.mxu0
    %287 = vmatprep.mubr.f32.mxu0 0.0
    %288 = vmatmul.mubr.f32.gmra.mxu0 %v194
    %v289 = vpop.f32.mrf.mxu0
    %v290 = vadd.f32 0.0, %v289
    %v291 = vpop.f32.mrf.mxu0
    %292 = vmatprep.mubr.f32.mxu0 0.0
    %293 = vmatmul.mubr.f32.gmra.mxu0 %v197
    %v294 = vpop.f32.mrf.mxu0
    %v295 = vadd.f32 0.0, %v294
    %v296 = vpop.f32.mrf.mxu0
    %297 = vmatprep.mubr.f32.mxu0 0.0
    %298 = vmatmul.mubr.f32.gmra.mxu0 %v200
    %v299 = vpop.f32.mrf.mxu0
    %v300 = vadd.f32 0.0, %v299
    %v301 = vpop.f32.mrf.mxu0
    %302 = vmatprep.mubr.f32.mxu0 0.0
    %303 = vmatmul.mubr.f32.gmra.mxu0 %v203
    %v304 = vpop.f32.mrf.mxu0
    %v305 = vadd.f32 0.0, %v304
    %v306 = vpop.f32.mrf.mxu0
    %307 = vmatprep.mubr.f32.mxu0 0.0
    %308 = vmatmul.mubr.f32.gmra.mxu0 %v206
    %v309 = vpop.f32.mrf.mxu0
    %v310 = vadd.f32 0.0, %v309
    %v311 = vpop.f32.mrf.mxu0
    %312 = vmatprep.mubr.f32.mxu0 0.0
    %313 = vmatmul.mubr.f32.gmra.mxu0 %v209
    %v314 = vpop.f32.mrf.mxu0
    %v315 = vadd.f32 0.0, %v314
    %v316 = vpop.f32.mrf.mxu0
    %317 = vmatprep.mubr.f32.mxu0 0.0
    %318 = vmatmul.mubr.f32.gmra.mxu0 %v212
    %v319 = vpop.f32.mrf.mxu0
    %v320 = vadd.f32 0.0, %v319
    %v321 = vpop.f32.mrf.mxu0
    %322 = vdwg.mxu0
    %v324 = vsel %vm189, %v133, 0
    %v327 = vsel %vm189, %v134, 0
    %v330 = vsel %vm189, %v135, 0
    %v333 = vsel %vm189, %v136, 0
    %v336 = vsel %vm189, %v137, 0
    %v339 = vsel %vm189, %v138, 0
    %v342 = vsel %vm189, %v139, 0
    %v345 = vsel %vm189, %v140, 0
    %v348 = vsel %vm214, %v54, 0
    %350 = vmatprep.subr.mxu0 0.0
    %351 = vmatpush1.msra.mxu0 0.0
    %352 = vmatprep.subr.mxu0 0.0
    %353 = vmatpush1.msra.mxu0 0.0
    %354 = vmatprep.subr.mxu0 0.0
    %355 = vmatpush1.msra.mxu0 0.0
    %356 = vmatprep.subr.mxu0 0.0
    %357 = vmatpush1.msra.mxu0 0.0
    %358 = vmatprep.subr.mxu0 0.0
    %359 = vmatpush1.msra.mxu0 0.0
    %360 = vmatprep.subr.mxu0 0.0
    %361 = vmatpush1.msra.mxu0 0.0
    %362 = vmatprep.subr.mxu0 0.0
    %363 = vmatpush1.msra.mxu0 0.0
    %364 = vmatprep.subr.mxu0 0.0
    %365 = vmatpush1.msra.mxu0 0.0
    %366 = vmatprep.subr.mxu0 0.0
    %367 = vmatpush1.msra.mxu0 0.0
    %368 = vmatprep.subr.mxu0 0.0
    %369 = vmatpush1.msra.mxu0 0.0
    %370 = vmatprep.subr.mxu0 0.0
    %371 = vmatpush1.msra.mxu0 0.0
    %372 = vmatprep.subr.mxu0 0.0
    %373 = vmatpush1.msra.mxu0 0.0
    %374 = vmatprep.subr.mxu0 0.0
    %375 = vmatpush1.msra.mxu0 0.0
    %376 = vmatprep.subr.mxu0 0.0
    %377 = vmatpush1.msra.mxu0 0.0
    %378 = vmatprep.subr.mxu0 0.0
    %379 = vmatpush1.msra.mxu0 0.0
    %380 = vmatprep.subr.mxu0 0.0
    %381 = vmatpush1.msra.mxu0 %v348
    %382 = vmatprep.subr.mxu0 0.0
    %383 = vmatpush2.msra.mxu0 0.0
    %384 = vmatprep.subr.mxu0 0.0
    %385 = vmatpush2.msra.mxu0 0.0
    %386 = vmatprep.subr.mxu0 0.0
    %387 = vmatpush2.msra.mxu0 0.0
    %388 = vmatprep.subr.mxu0 0.0
    %389 = vmatpush2.msra.mxu0 0.0
    %390 = vmatprep.subr.mxu0 0.0
    %391 = vmatpush2.msra.mxu0 0.0
    %392 = vmatprep.subr.mxu0 0.0
    %393 = vmatpush2.msra.mxu0 0.0
    %394 = vmatprep.subr.mxu0 0.0
    %395 = vmatpush2.msra.mxu0 0.0
    %396 = vmatprep.subr.mxu0 0.0
    %397 = vmatpush2.msra.mxu0 0.0
    %398 = vmatprep.subr.mxu0 0.0
    %399 = vmatpush2.msra.mxu0 0.0
    %400 = vmatprep.subr.mxu0 0.0
    %401 = vmatpush2.msra.mxu0 0.0
    %402 = vmatprep.subr.mxu0 0.0
    %403 = vmatpush2.msra.mxu0 0.0
    %404 = vmatprep.subr.mxu0 0.0
    %405 = vmatpush2.msra.mxu0 0.0
    %406 = vmatprep.subr.mxu0 0.0
    %407 = vmatpush2.msra.mxu0 0.0
    %408 = vmatprep.subr.mxu0 0.0
    %409 = vmatpush2.msra.mxu0 0.0
    %410 = vmatprep.subr.mxu0 0.0
    %411 = vmatpush2.msra.mxu0 0.0
    %412 = vmatprep.subr.mxu0 0.0
    %413 = vmatpush2.msra.mxu0 0.0
    %414 = vmatprep.mubr.f32.mxu0 0.0
    %415 = vmatmul.mubr.f32.gmra.mxu0 %v324
    %v416 = vpop.f32.mrf.mxu0
    %v417 = vadd.f32 0.0, %v416
    %v418 = vpop.f32.mrf.mxu0
    %419 = vmatprep.mubr.f32.mxu0 0.0
    %420 = vmatmul.mubr.f32.gmra.mxu0 %v327
    %v421 = vpop.f32.mrf.mxu0
    %v422 = vadd.f32 0.0, %v421
    %v423 = vpop.f32.mrf.mxu0
    %424 = vmatprep.mubr.f32.mxu0 0.0
    %425 = vmatmul.mubr.f32.gmra.mxu0 %v330
    %v426 = vpop.f32.mrf.mxu0
    %v427 = vadd.f32 0.0, %v426
    %v428 = vpop.f32.mrf.mxu0
    %429 = vmatprep.mubr.f32.mxu0 0.0
    %430 = vmatmul.mubr.f32.gmra.mxu0 %v333
    %v431 = vpop.f32.mrf.mxu0
    %v432 = vadd.f32 0.0, %v431
    %v433 = vpop.f32.mrf.mxu0
    %434 = vmatprep.mubr.f32.mxu0 0.0
    %435 = vmatmul.mubr.f32.gmra.mxu0 %v336
    %v436 = vpop.f32.mrf.mxu0
    %v437 = vadd.f32 0.0, %v436
    %v438 = vpop.f32.mrf.mxu0
    %439 = vmatprep.mubr.f32.mxu0 0.0
    %440 = vmatmul.mubr.f32.gmra.mxu0 %v339
    %v441 = vpop.f32.mrf.mxu0
    %v442 = vadd.f32 0.0, %v441
    %v443 = vpop.f32.mrf.mxu0
    %444 = vmatprep.mubr.f32.mxu0 0.0
    %445 = vmatmul.mubr.f32.gmra.mxu0 %v342
    %v446 = vpop.f32.mrf.mxu0
    %v447 = vadd.f32 0.0, %v446
    %v448 = vpop.f32.mrf.mxu0
    %449 = vmatprep.mubr.f32.mxu0 0.0
    %450 = vmatmul.mubr.f32.gmra.mxu0 %v345
    %v451 = vpop.f32.mrf.mxu0
    %v452 = vadd.f32 0.0, %v451
    %v453 = vpop.f32.mrf.mxu0
    %454 = vdwg.mxu0
    %v456 = vsel %vm189, %v141, 0
    %v459 = vsel %vm189, %v142, 0
    %v462 = vsel %vm189, %v143, 0
    %v465 = vsel %vm189, %v144, 0
    %v468 = vsel %vm189, %v145, 0
    %v471 = vsel %vm189, %v146, 0
    %v474 = vsel %vm189, %v147, 0
    %v477 = vsel %vm189, %v148, 0
    %v480 = vsel %vm214, %v55, 0
    %482 = vmatprep.subr.mxu0 0.0
    %483 = vmatpush1.msra.mxu0 0.0
    %484 = vmatprep.subr.mxu0 0.0
    %485 = vmatpush1.msra.mxu0 0.0
    %486 = vmatprep.subr.mxu0 0.0
    %487 = vmatpush1.msra.mxu0 0.0
    %488 = vmatprep.subr.mxu0 0.0
    %489 = vmatpush1.msra.mxu0 0.0
    %490 = vmatprep.subr.mxu0 0.0
    %491 = vmatpush1.msra.mxu0 0.0
    %492 = vmatprep.subr.mxu0 0.0
    %493 = vmatpush1.msra.mxu0 0.0
    %494 = vmatprep.subr.mxu0 0.0
    %495 = vmatpush1.msra.mxu0 0.0
    %496 = vmatprep.subr.mxu0 0.0
    %497 = vmatpush1.msra.mxu0 0.0
    %498 = vmatprep.subr.mxu0 0.0
    %499 = vmatpush1.msra.mxu0 0.0
    %500 = vmatprep.subr.mxu0 0.0
    %501 = vmatpush1.msra.mxu0 0.0
    %502 = vmatprep.subr.mxu0 0.0
    %503 = vmatpush1.msra.mxu0 0.0
    %504 = vmatprep.subr.mxu0 0.0
    %505 = vmatpush1.msra.mxu0 0.0
    %506 = vmatprep.subr.mxu0 0.0
    %507 = vmatpush1.msra.mxu0 0.0
    %508 = vmatprep.subr.mxu0 0.0
    %509 = vmatpush1.msra.mxu0 0.0
    %510 = vmatprep.subr.mxu0 0.0
    %511 = vmatpush1.msra.mxu0 0.0
    %512 = vmatprep.subr.mxu0 0.0
    %513 = vmatpush1.msra.mxu0 %v480
    %514 = vmatprep.subr.mxu0 0.0
    %515 = vmatpush2.msra.mxu0 0.0
    %516 = vmatprep.subr.mxu0 0.0
    %517 = vmatpush2.msra.mxu0 0.0
    %518 = vmatprep.subr.mxu0 0.0
    %519 = vmatpush2.msra.mxu0 0.0
    %520 = vmatprep.subr.mxu0 0.0
    %521 = vmatpush2.msra.mxu0 0.0
    %522 = vmatprep.subr.mxu0 0.0
    %523 = vmatpush2.msra.mxu0 0.0
    %524 = vmatprep.subr.mxu0 0.0
    %525 = vmatpush2.msra.mxu0 0.0
    %526 = vmatprep.subr.mxu0 0.0
    %527 = vmatpush2.msra.mxu0 0.0
    %528 = vmatprep.subr.mxu0 0.0
    %529 = vmatpush2.msra.mxu0 0.0
    %530 = vmatprep.subr.mxu0 0.0
    %531 = vmatpush2.msra.mxu0 0.0
    %532 = vmatprep.subr.mxu0 0.0
    %533 = vmatpush2.msra.mxu0 0.0
    %534 = vmatprep.subr.mxu0 0.0
    %535 = vmatpush2.msra.mxu0 0.0
    %536 = vmatprep.subr.mxu0 0.0
    %537 = vmatpush2.msra.mxu0 0.0
    %538 = vmatprep.subr.mxu0 0.0
    %539 = vmatpush2.msra.mxu0 0.0
    %540 = vmatprep.subr.mxu0 0.0
    %541 = vmatpush2.msra.mxu0 0.0
    %542 = vmatprep.subr.mxu0 0.0
    %543 = vmatpush2.msra.mxu0 0.0
    %544 = vmatprep.subr.mxu0 0.0
    %545 = vmatpush2.msra.mxu0 0.0
    %546 = vmatprep.mubr.f32.mxu0 0.0
    %547 = vmatmul.mubr.f32.gmra.mxu0 %v456
    %v548 = vpop.f32.mrf.mxu0
    %v549 = vadd.f32 0.0, %v548
    %v550 = vpop.f32.mrf.mxu0
    %551 = vmatprep.mubr.f32.mxu0 0.0
    %552 = vmatmul.mubr.f32.gmra.mxu0 %v459
    %v553 = vpop.f32.mrf.mxu0
    %v554 = vadd.f32 0.0, %v553
    %v555 = vpop.f32.mrf.mxu0
    %556 = vmatprep.mubr.f32.mxu0 0.0
    %557 = vmatmul.mubr.f32.gmra.mxu0 %v462
    %v558 = vpop.f32.mrf.mxu0
    %v559 = vadd.f32 0.0, %v558
    %v560 = vpop.f32.mrf.mxu0
    %561 = vmatprep.mubr.f32.mxu0 0.0
    %562 = vmatmul.mubr.f32.gmra.mxu0 %v465
    %v563 = vpop.f32.mrf.mxu0
    %v564 = vadd.f32 0.0, %v563
    %v565 = vpop.f32.mrf.mxu0
    %566 = vmatprep.mubr.f32.mxu0 0.0
    %567 = vmatmul.mubr.f32.gmra.mxu0 %v468
    %v568 = vpop.f32.mrf.mxu0
    %v569 = vadd.f32 0.0, %v568
    %v570 = vpop.f32.mrf.mxu0
    %571 = vmatprep.mubr.f32.mxu0 0.0
    %572 = vmatmul.mubr.f32.gmra.mxu0 %v471
    %v573 = vpop.f32.mrf.mxu0
    %v574 = vadd.f32 0.0, %v573
    %v575 = vpop.f32.mrf.mxu0
    %576 = vmatprep.mubr.f32.mxu0 0.0
    %577 = vmatmul.mubr.f32.gmra.mxu0 %v474
    %v578 = vpop.f32.mrf.mxu0
    %v579 = vadd.f32 0.0, %v578
    %v580 = vpop.f32.mrf.mxu0
    %581 = vmatprep.mubr.f32.mxu0 0.0
    %582 = vmatmul.mubr.f32.gmra.mxu0 %v477
    %v583 = vpop.f32.mrf.mxu0
    %v584 = vadd.f32 0.0, %v583
    %v585 = vpop.f32.mrf.mxu0
    %586 = vdwg.mxu0
    %v588 = vsel %vm189, %v149, 0
    %v591 = vsel %vm189, %v150, 0
    %v594 = vsel %vm189, %v151, 0
    %v597 = vsel %vm189, %v152, 0
    %v600 = vsel %vm189, %v153, 0
    %v603 = vsel %vm189, %v154, 0
    %v606 = vsel %vm189, %v155, 0
    %v609 = vsel %vm189, %v156, 0
    %v612 = vsel %vm214, %v56, 0
    %614 = vmatprep.subr.mxu0 0.0
    %615 = vmatpush1.msra.mxu0 0.0
    %616 = vmatprep.subr.mxu0 0.0
    %617 = vmatpush1.msra.mxu0 0.0
    %618 = vmatprep.subr.mxu0 0.0
    %619 = vmatpush1.msra.mxu0 0.0
    %620 = vmatprep.subr.mxu0 0.0
    %621 = vmatpush1.msra.mxu0 0.0
    %622 = vmatprep.subr.mxu0 0.0
    %623 = vmatpush1.msra.mxu0 0.0
    %624 = vmatprep.subr.mxu0 0.0
    %625 = vmatpush1.msra.mxu0 0.0
    %626 = vmatprep.subr.mxu0 0.0
    %627 = vmatpush1.msra.mxu0 0.0
    %628 = vmatprep.subr.mxu0 0.0
    %629 = vmatpush1.msra.mxu0 0.0
    %630 = vmatprep.subr.mxu0 0.0
    %631 = vmatpush1.msra.mxu0 0.0
    %632 = vmatprep.subr.mxu0 0.0
    %633 = vmatpush1.msra.mxu0 0.0
    %634 = vmatprep.subr.mxu0 0.0
    %635 = vmatpush1.msra.mxu0 0.0
    %636 = vmatprep.subr.mxu0 0.0
    %637 = vmatpush1.msra.mxu0 0.0
    %638 = vmatprep.subr.mxu0 0.0
    %639 = vmatpush1.msra.mxu0 0.0
    %640 = vmatprep.subr.mxu0 0.0
    %641 = vmatpush1.msra.mxu0 0.0
    %642 = vmatprep.subr.mxu0 0.0
    %643 = vmatpush1.msra.mxu0 0.0
    %644 = vmatprep.subr.mxu0 0.0
    %645 = vmatpush1.msra.mxu0 %v612
    %646 = vmatprep.subr.mxu0 0.0
    %647 = vmatpush2.msra.mxu0 0.0
    %648 = vmatprep.subr.mxu0 0.0
    %649 = vmatpush2.msra.mxu0 0.0
    %650 = vmatprep.subr.mxu0 0.0
    %651 = vmatpush2.msra.mxu0 0.0
    %652 = vmatprep.subr.mxu0 0.0
    %653 = vmatpush2.msra.mxu0 0.0
    %654 = vmatprep.subr.mxu0 0.0
    %655 = vmatpush2.msra.mxu0 0.0
    %656 = vmatprep.subr.mxu0 0.0
    %657 = vmatpush2.msra.mxu0 0.0
    %658 = vmatprep.subr.mxu0 0.0
    %659 = vmatpush2.msra.mxu0 0.0
    %660 = vmatprep.subr.mxu0 0.0
    %661 = vmatpush2.msra.mxu0 0.0
    %662 = vmatprep.subr.mxu0 0.0
    %663 = vmatpush2.msra.mxu0 0.0
    %664 = vmatprep.subr.mxu0 0.0
    %665 = vmatpush2.msra.mxu0 0.0
    %666 = vmatprep.subr.mxu0 0.0
    %667 = vmatpush2.msra.mxu0 0.0
    %668 = vmatprep.subr.mxu0 0.0
    %669 = vmatpush2.msra.mxu0 0.0
    %670 = vmatprep.subr.mxu0 0.0
    %671 = vmatpush2.msra.mxu0 0.0
    %672 = vmatprep.subr.mxu0 0.0
    %673 = vmatpush2.msra.mxu0 0.0
    %674 = vmatprep.subr.mxu0 0.0
    %675 = vmatpush2.msra.mxu0 0.0
    %676 = vmatprep.subr.mxu0 0.0
    %677 = vmatpush2.msra.mxu0 0.0
    %678 = vmatprep.mubr.f32.mxu0 0.0
    %679 = vmatmul.mubr.f32.gmra.mxu0 %v588
    %v680 = vpop.f32.mrf.mxu0
    %v681 = vadd.f32 0.0, %v680
    %v682 = vpop.f32.mrf.mxu0
    %683 = vmatprep.mubr.f32.mxu0 0.0
    %684 = vmatmul.mubr.f32.gmra.mxu0 %v591
    %v685 = vpop.f32.mrf.mxu0
    %v686 = vadd.f32 0.0, %v685
    %v687 = vpop.f32.mrf.mxu0
    %688 = vmatprep.mubr.f32.mxu0 0.0
    %689 = vmatmul.mubr.f32.gmra.mxu0 %v594
    %v690 = vpop.f32.mrf.mxu0
    %v691 = vadd.f32 0.0, %v690
    %v692 = vpop.f32.mrf.mxu0
    %693 = vmatprep.mubr.f32.mxu0 0.0
    %694 = vmatmul.mubr.f32.gmra.mxu0 %v597
    %v695 = vpop.f32.mrf.mxu0
    %v696 = vadd.f32 0.0, %v695
    %v697 = vpop.f32.mrf.mxu0
    %698 = vmatprep.mubr.f32.mxu0 0.0
    %699 = vmatmul.mubr.f32.gmra.mxu0 %v600
    %v700 = vpop.f32.mrf.mxu0
    %v701 = vadd.f32 0.0, %v700
    %v702 = vpop.f32.mrf.mxu0
    %703 = vmatprep.mubr.f32.mxu0 0.0
    %704 = vmatmul.mubr.f32.gmra.mxu0 %v603
    %v705 = vpop.f32.mrf.mxu0
    %v706 = vadd.f32 0.0, %v705
    %v707 = vpop.f32.mrf.mxu0
    %708 = vmatprep.mubr.f32.mxu0 0.0
    %709 = vmatmul.mubr.f32.gmra.mxu0 %v606
    %v710 = vpop.f32.mrf.mxu0
    %v711 = vadd.f32 0.0, %v710
    %v712 = vpop.f32.mrf.mxu0
    %713 = vmatprep.mubr.f32.mxu0 0.0
    %714 = vmatmul.mubr.f32.gmra.mxu0 %v609
    %v715 = vpop.f32.mrf.mxu0
    %v716 = vadd.f32 0.0, %v715
    %v717 = vpop.f32.mrf.mxu0
    %718 = vdwg.mxu0
    %v720 = vsel %vm189, %v157, 0
    %v723 = vsel %vm189, %v158, 0
    %v726 = vsel %vm189, %v159, 0
    %v729 = vsel %vm189, %v160, 0
    %v732 = vsel %vm189, %v161, 0
    %v735 = vsel %vm189, %v162, 0
    %v738 = vsel %vm189, %v163, 0
    %v741 = vsel %vm189, %v164, 0
    %v744 = vsel %vm214, %v57, 0
    %746 = vmatprep.subr.mxu0 0.0
    %747 = vmatpush1.msra.mxu0 0.0
    %748 = vmatprep.subr.mxu0 0.0
    %749 = vmatpush1.msra.mxu0 0.0
    %750 = vmatprep.subr.mxu0 0.0
    %751 = vmatpush1.msra.mxu0 0.0
    %752 = vmatprep.subr.mxu0 0.0
    %753 = vmatpush1.msra.mxu0 0.0
    %754 = vmatprep.subr.mxu0 0.0
    %755 = vmatpush1.msra.mxu0 0.0
    %756 = vmatprep.subr.mxu0 0.0
    %757 = vmatpush1.msra.mxu0 0.0
    %758 = vmatprep.subr.mxu0 0.0
    %759 = vmatpush1.msra.mxu0 0.0
    %760 = vmatprep.subr.mxu0 0.0
    %761 = vmatpush1.msra.mxu0 0.0
    %762 = vmatprep.subr.mxu0 0.0
    %763 = vmatpush1.msra.mxu0 0.0
    %764 = vmatprep.subr.mxu0 0.0
    %765 = vmatpush1.msra.mxu0 0.0
    %766 = vmatprep.subr.mxu0 0.0
    %767 = vmatpush1.msra.mxu0 0.0
    %768 = vmatprep.subr.mxu0 0.0
    %769 = vmatpush1.msra.mxu0 0.0
    %770 = vmatprep.subr.mxu0 0.0
    %771 = vmatpush1.msra.mxu0 0.0
    %772 = vmatprep.subr.mxu0 0.0
    %773 = vmatpush1.msra.mxu0 0.0
    %774 = vmatprep.subr.mxu0 0.0
    %775 = vmatpush1.msra.mxu0 0.0
    %776 = vmatprep.subr.mxu0 0.0
    %777 = vmatpush1.msra.mxu0 %v744
    %778 = vmatprep.subr.mxu0 0.0
    %779 = vmatpush2.msra.mxu0 0.0
    %780 = vmatprep.subr.mxu0 0.0
    %781 = vmatpush2.msra.mxu0 0.0
    %782 = vmatprep.subr.mxu0 0.0
    %783 = vmatpush2.msra.mxu0 0.0
    %784 = vmatprep.subr.mxu0 0.0
    %785 = vmatpush2.msra.mxu0 0.0
    %786 = vmatprep.subr.mxu0 0.0
    %787 = vmatpush2.msra.mxu0 0.0
    %788 = vmatprep.subr.mxu0 0.0
    %789 = vmatpush2.msra.mxu0 0.0
    %790 = vmatprep.subr.mxu0 0.0
    %791 = vmatpush2.msra.mxu0 0.0
    %792 = vmatprep.subr.mxu0 0.0
    %793 = vmatpush2.msra.mxu0 0.0
    %794 = vmatprep.subr.mxu0 0.0
    %795 = vmatpush2.msra.mxu0 0.0
    %796 = vmatprep.subr.mxu0 0.0
    %797 = vmatpush2.msra.mxu0 0.0
    %798 = vmatprep.subr.mxu0 0.0
    %799 = vmatpush2.msra.mxu0 0.0
    %800 = vmatprep.subr.mxu0 0.0
    %801 = vmatpush2.msra.mxu0 0.0
    %802 = vmatprep.subr.mxu0 0.0
    %803 = vmatpush2.msra.mxu0 0.0
    %804 = vmatprep.subr.mxu0 0.0
    %805 = vmatpush2.msra.mxu0 0.0
    %806 = vmatprep.subr.mxu0 0.0
    %807 = vmatpush2.msra.mxu0 0.0
    %808 = vmatprep.subr.mxu0 0.0
    %809 = vmatpush2.msra.mxu0 0.0
    %810 = vmatprep.mubr.f32.mxu0 0.0
    %811 = vmatmul.mubr.f32.gmra.mxu0 %v720
    %v812 = vpop.f32.mrf.mxu0
    %v813 = vadd.f32 0.0, %v812
    %v814 = vpop.f32.mrf.mxu0
    %815 = vmatprep.mubr.f32.mxu0 0.0
    %816 = vmatmul.mubr.f32.gmra.mxu0 %v723
    %v817 = vpop.f32.mrf.mxu0
    %v818 = vadd.f32 0.0, %v817
    %v819 = vpop.f32.mrf.mxu0
    %820 = vmatprep.mubr.f32.mxu0 0.0
    %821 = vmatmul.mubr.f32.gmra.mxu0 %v726
    %v822 = vpop.f32.mrf.mxu0
    %v823 = vadd.f32 0.0, %v822
    %v824 = vpop.f32.mrf.mxu0
    %825 = vmatprep.mubr.f32.mxu0 0.0
    %826 = vmatmul.mubr.f32.gmra.mxu0 %v729
    %v827 = vpop.f32.mrf.mxu0
    %v828 = vadd.f32 0.0, %v827
    %v829 = vpop.f32.mrf.mxu0
    %830 = vmatprep.mubr.f32.mxu0 0.0
    %831 = vmatmul.mubr.f32.gmra.mxu0 %v732
    %v832 = vpop.f32.mrf.mxu0
    %v833 = vadd.f32 0.0, %v832
    %v834 = vpop.f32.mrf.mxu0
    %835 = vmatprep.mubr.f32.mxu0 0.0
    %836 = vmatmul.mubr.f32.gmra.mxu0 %v735
    %v837 = vpop.f32.mrf.mxu0
    %v838 = vadd.f32 0.0, %v837
    %v839 = vpop.f32.mrf.mxu0
    %840 = vmatprep.mubr.f32.mxu0 0.0
    %841 = vmatmul.mubr.f32.gmra.mxu0 %v738
    %v842 = vpop.f32.mrf.mxu0
    %v843 = vadd.f32 0.0, %v842
    %v844 = vpop.f32.mrf.mxu0
    %845 = vmatprep.mubr.f32.mxu0 0.0
    %846 = vmatmul.mubr.f32.gmra.mxu0 %v741
    %v847 = vpop.f32.mrf.mxu0
    %v848 = vadd.f32 0.0, %v847
    %v849 = vpop.f32.mrf.mxu0
    %850 = vdwg.mxu0
    %v852 = vsel %vm189, %v165, 0
    %v855 = vsel %vm189, %v166, 0
    %v858 = vsel %vm189, %v167, 0
    %v861 = vsel %vm189, %v168, 0
    %v864 = vsel %vm189, %v169, 0
    %v867 = vsel %vm189, %v170, 0
    %v870 = vsel %vm189, %v171, 0
    %v873 = vsel %vm189, %v172, 0
    %v876 = vsel %vm214, %v58, 0
    %878 = vmatprep.subr.mxu0 0.0
    %879 = vmatpush1.msra.mxu0 0.0
    %880 = vmatprep.subr.mxu0 0.0
    %881 = vmatpush1.msra.mxu0 0.0
    %882 = vmatprep.subr.mxu0 0.0
    %883 = vmatpush1.msra.mxu0 0.0
    %884 = vmatprep.subr.mxu0 0.0
    %885 = vmatpush1.msra.mxu0 0.0
    %886 = vmatprep.subr.mxu0 0.0
    %887 = vmatpush1.msra.mxu0 0.0
    %888 = vmatprep.subr.mxu0 0.0
    %889 = vmatpush1.msra.mxu0 0.0
    %890 = vmatprep.subr.mxu0 0.0
    %891 = vmatpush1.msra.mxu0 0.0
    %892 = vmatprep.subr.mxu0 0.0
    %893 = vmatpush1.msra.mxu0 0.0
    %894 = vmatprep.subr.mxu0 0.0
    %895 = vmatpush1.msra.mxu0 0.0
    %896 = vmatprep.subr.mxu0 0.0
    %897 = vmatpush1.msra.mxu0 0.0
    %898 = vmatprep.subr.mxu0 0.0
    %899 = vmatpush1.msra.mxu0 0.0
    %900 = vmatprep.subr.mxu0 0.0
    %901 = vmatpush1.msra.mxu0 0.0
    %902 = vmatprep.subr.mxu0 0.0
    %903 = vmatpush1.msra.mxu0 0.0
    %904 = vmatprep.subr.mxu0 0.0
    %905 = vmatpush1.msra.mxu0 0.0
    %906 = vmatprep.subr.mxu0 0.0
    %907 = vmatpush1.msra.mxu0 0.0
    %908 = vmatprep.subr.mxu0 0.0
    %909 = vmatpush1.msra.mxu0 %v876
    %910 = vmatprep.subr.mxu0 0.0
    %911 = vmatpush2.msra.mxu0 0.0
    %912 = vmatprep.subr.mxu0 0.0
    %913 = vmatpush2.msra.mxu0 0.0
    %914 = vmatprep.subr.mxu0 0.0
    %915 = vmatpush2.msra.mxu0 0.0
    %916 = vmatprep.subr.mxu0 0.0
    %917 = vmatpush2.msra.mxu0 0.0
    %918 = vmatprep.subr.mxu0 0.0
    %919 = vmatpush2.msra.mxu0 0.0
    %920 = vmatprep.subr.mxu0 0.0
    %921 = vmatpush2.msra.mxu0 0.0
    %922 = vmatprep.subr.mxu0 0.0
    %923 = vmatpush2.msra.mxu0 0.0
    %924 = vmatprep.subr.mxu0 0.0
    %925 = vmatpush2.msra.mxu0 0.0
    %926 = vmatprep.subr.mxu0 0.0
    %927 = vmatpush2.msra.mxu0 0.0
    %928 = vmatprep.subr.mxu0 0.0
    %929 = vmatpush2.msra.mxu0 0.0
    %930 = vmatprep.subr.mxu0 0.0
    %931 = vmatpush2.msra.mxu0 0.0
    %932 = vmatprep.subr.mxu0 0.0
    %933 = vmatpush2.msra.mxu0 0.0
    %934 = vmatprep.subr.mxu0 0.0
    %935 = vmatpush2.msra.mxu0 0.0
    %936 = vmatprep.subr.mxu0 0.0
    %937 = vmatpush2.msra.mxu0 0.0
    %938 = vmatprep.subr.mxu0 0.0
    %939 = vmatpush2.msra.mxu0 0.0
    %940 = vmatprep.subr.mxu0 0.0
    %941 = vmatpush2.msra.mxu0 0.0
    %942 = vmatprep.mubr.f32.mxu0 0.0
    %943 = vmatmul.mubr.f32.gmra.mxu0 %v852
    %v944 = vpop.f32.mrf.mxu0
    %v945 = vadd.f32 0.0, %v944
    %v946 = vpop.f32.mrf.mxu0
    %947 = vmatprep.mubr.f32.mxu0 0.0
    %948 = vmatmul.mubr.f32.gmra.mxu0 %v855
    %v949 = vpop.f32.mrf.mxu0
    %v950 = vadd.f32 0.0, %v949
    %v951 = vpop.f32.mrf.mxu0
    %952 = vmatprep.mubr.f32.mxu0 0.0
    %953 = vmatmul.mubr.f32.gmra.mxu0 %v858
    %v954 = vpop.f32.mrf.mxu0
    %v955 = vadd.f32 0.0, %v954
    %v956 = vpop.f32.mrf.mxu0
    %957 = vmatprep.mubr.f32.mxu0 0.0
    %958 = vmatmul.mubr.f32.gmra.mxu0 %v861
    %v959 = vpop.f32.mrf.mxu0
    %v960 = vadd.f32 0.0, %v959
    %v961 = vpop.f32.mrf.mxu0
    %962 = vmatprep.mubr.f32.mxu0 0.0
    %963 = vmatmul.mubr.f32.gmra.mxu0 %v864
    %v964 = vpop.f32.mrf.mxu0
    %v965 = vadd.f32 0.0, %v964
    %v966 = vpop.f32.mrf.mxu0
    %967 = vmatprep.mubr.f32.mxu0 0.0
    %968 = vmatmul.mubr.f32.gmra.mxu0 %v867
    %v969 = vpop.f32.mrf.mxu0
    %v970 = vadd.f32 0.0, %v969
    %v971 = vpop.f32.mrf.mxu0
    %972 = vmatprep.mubr.f32.mxu0 0.0
    %973 = vmatmul.mubr.f32.gmra.mxu0 %v870
    %v974 = vpop.f32.mrf.mxu0
    %v975 = vadd.f32 0.0, %v974
    %v976 = vpop.f32.mrf.mxu0
    %977 = vmatprep.mubr.f32.mxu0 0.0
    %978 = vmatmul.mubr.f32.gmra.mxu0 %v873
    %v979 = vpop.f32.mrf.mxu0
    %v980 = vadd.f32 0.0, %v979
    %v981 = vpop.f32.mrf.mxu0
    %982 = vdwg.mxu0
    %v984 = vsel %vm189, %v173, 0
    %v987 = vsel %vm189, %v174, 0
    %v990 = vsel %vm189, %v175, 0
    %v993 = vsel %vm189, %v176, 0
    %v996 = vsel %vm189, %v177, 0
    %v999 = vsel %vm189, %v178, 0
    %v1002 = vsel %vm189, %v179, 0
    %v1005 = vsel %vm189, %v180, 0
    %v1008 = vsel %vm214, %v59, 0
    %1010 = vmatprep.subr.mxu0 0.0
    %1011 = vmatpush1.msra.mxu0 0.0
    %1012 = vmatprep.subr.mxu0 0.0
    %1013 = vmatpush1.msra.mxu0 0.0
    %1014 = vmatprep.subr.mxu0 0.0
    %1015 = vmatpush1.msra.mxu0 0.0
    %1016 = vmatprep.subr.mxu0 0.0
    %1017 = vmatpush1.msra.mxu0 0.0
    %1018 = vmatprep.subr.mxu0 0.0
    %1019 = vmatpush1.msra.mxu0 0.0
    %1020 = vmatprep.subr.mxu0 0.0
    %1021 = vmatpush1.msra.mxu0 0.0
    %1022 = vmatprep.subr.mxu0 0.0
    %1023 = vmatpush1.msra.mxu0 0.0
    %1024 = vmatprep.subr.mxu0 0.0
    %1025 = vmatpush1.msra.mxu0 0.0
    %1026 = vmatprep.subr.mxu0 0.0
    %1027 = vmatpush1.msra.mxu0 0.0
    %1028 = vmatprep.subr.mxu0 0.0
    %1029 = vmatpush1.msra.mxu0 0.0
    %1030 = vmatprep.subr.mxu0 0.0
    %1031 = vmatpush1.msra.mxu0 0.0
    %1032 = vmatprep.subr.mxu0 0.0
    %1033 = vmatpush1.msra.mxu0 0.0
    %1034 = vmatprep.subr.mxu0 0.0
    %1035 = vmatpush1.msra.mxu0 0.0
    %1036 = vmatprep.subr.mxu0 0.0
    %1037 = vmatpush1.msra.mxu0 0.0
    %1038 = vmatprep.subr.mxu0 0.0
    %1039 = vmatpush1.msra.mxu0 0.0
    %1040 = vmatprep.subr.mxu0 0.0
    %1041 = vmatpush1.msra.mxu0 %v1008
    %1042 = vmatprep.subr.mxu0 0.0
    %1043 = vmatpush2.msra.mxu0 0.0
    %1044 = vmatprep.subr.mxu0 0.0
    %1045 = vmatpush2.msra.mxu0 0.0
    %1046 = vmatprep.subr.mxu0 0.0
    %1047 = vmatpush2.msra.mxu0 0.0
    %1048 = vmatprep.subr.mxu0 0.0
    %1049 = vmatpush2.msra.mxu0 0.0
    %1050 = vmatprep.subr.mxu0 0.0
    %1051 = vmatpush2.msra.mxu0 0.0
    %1052 = vmatprep.subr.mxu0 0.0
    %1053 = vmatpush2.msra.mxu0 0.0
    %1054 = vmatprep.subr.mxu0 0.0
    %1055 = vmatpush2.msra.mxu0 0.0
    %1056 = vmatprep.subr.mxu0 0.0
    %1057 = vmatpush2.msra.mxu0 0.0
    %1058 = vmatprep.subr.mxu0 0.0
    %1059 = vmatpush2.msra.mxu0 0.0
    %1060 = vmatprep.subr.mxu0 0.0
    %1061 = vmatpush2.msra.mxu0 0.0
    %1062 = vmatprep.subr.mxu0 0.0
    %1063 = vmatpush2.msra.mxu0 0.0
    %1064 = vmatprep.subr.mxu0 0.0
    %1065 = vmatpush2.msra.mxu0 0.0
    %1066 = vmatprep.subr.mxu0 0.0
    %1067 = vmatpush2.msra.mxu0 0.0
    %1068 = vmatprep.subr.mxu0 0.0
    %1069 = vmatpush2.msra.mxu0 0.0
    %1070 = vmatprep.subr.mxu0 0.0
    %1071 = vmatpush2.msra.mxu0 0.0
    %1072 = vmatprep.subr.mxu0 0.0
    %1073 = vmatpush2.msra.mxu0 0.0
    %1074 = vmatprep.mubr.f32.mxu0 0.0
    %1075 = vmatmul.mubr.f32.gmra.mxu0 %v984
    %v1076 = vpop.f32.mrf.mxu0
    %v1077 = vadd.f32 0.0, %v1076
    %v1078 = vpop.f32.mrf.mxu0
    %1079 = vmatprep.mubr.f32.mxu0 0.0
    %1080 = vmatmul.mubr.f32.gmra.mxu0 %v987
    %v1081 = vpop.f32.mrf.mxu0
    %v1082 = vadd.f32 0.0, %v1081
    %v1083 = vpop.f32.mrf.mxu0
    %1084 = vmatprep.mubr.f32.mxu0 0.0
    %1085 = vmatmul.mubr.f32.gmra.mxu0 %v990
    %v1086 = vpop.f32.mrf.mxu0
    %v1087 = vadd.f32 0.0, %v1086
    %v1088 = vpop.f32.mrf.mxu0
    %1089 = vmatprep.mubr.f32.mxu0 0.0
    %1090 = vmatmul.mubr.f32.gmra.mxu0 %v993
    %v1091 = vpop.f32.mrf.mxu0
    %v1092 = vadd.f32 0.0, %v1091
    %v1093 = vpop.f32.mrf.mxu0
    %1094 = vmatprep.mubr.f32.mxu0 0.0
    %1095 = vmatmul.mubr.f32.gmra.mxu0 %v996
    %v1096 = vpop.f32.mrf.mxu0
    %v1097 = vadd.f32 0.0, %v1096
    %v1098 = vpop.f32.mrf.mxu0
    %1099 = vmatprep.mubr.f32.mxu0 0.0
    %1100 = vmatmul.mubr.f32.gmra.mxu0 %v999
    %v1101 = vpop.f32.mrf.mxu0
    %v1102 = vadd.f32 0.0, %v1101
    %v1103 = vpop.f32.mrf.mxu0
    %1104 = vmatprep.mubr.f32.mxu0 0.0
    %1105 = vmatmul.mubr.f32.gmra.mxu0 %v1002
    %v1106 = vpop.f32.mrf.mxu0
    %v1107 = vadd.f32 0.0, %v1106
    %v1108 = vpop.f32.mrf.mxu0
    %1109 = vmatprep.mubr.f32.mxu0 0.0
    %1110 = vmatmul.mubr.f32.gmra.mxu0 %v1005
    %v1111 = vpop.f32.mrf.mxu0
    %v1112 = vadd.f32 0.0, %v1111
    %v1113 = vpop.f32.mrf.mxu0
    %1114 = vdwg.mxu0
    %v1116 = vsel %vm189, %v181, 0
    %v1119 = vsel %vm189, %v182, 0
    %v1122 = vsel %vm189, %v183, 0
    %v1125 = vsel %vm189, %v184, 0
    %v1128 = vsel %vm189, %v185, 0
    %v1131 = vsel %vm189, %v186, 0
    %v1134 = vsel %vm189, %v187, 0
    %v1137 = vsel %vm189, %v188, 0
    %v1140 = vsel %vm214, %v60, 0
    %1142 = vmatprep.subr.mxu0 0.0
    %1143 = vmatpush1.msra.mxu0 0.0
    %1144 = vmatprep.subr.mxu0 0.0
    %1145 = vmatpush1.msra.mxu0 0.0
    %1146 = vmatprep.subr.mxu0 0.0
    %1147 = vmatpush1.msra.mxu0 0.0
    %1148 = vmatprep.subr.mxu0 0.0
    %1149 = vmatpush1.msra.mxu0 0.0
    %1150 = vmatprep.subr.mxu0 0.0
    %1151 = vmatpush1.msra.mxu0 0.0
    %1152 = vmatprep.subr.mxu0 0.0
    %1153 = vmatpush1.msra.mxu0 0.0
    %1154 = vmatprep.subr.mxu0 0.0
    %1155 = vmatpush1.msra.mxu0 0.0
    %1156 = vmatprep.subr.mxu0 0.0
    %1157 = vmatpush1.msra.mxu0 0.0
    %1158 = vmatprep.subr.mxu0 0.0
    %1159 = vmatpush1.msra.mxu0 0.0
    %1160 = vmatprep.subr.mxu0 0.0
    %1161 = vmatpush1.msra.mxu0 0.0
    %1162 = vmatprep.subr.mxu0 0.0
    %1163 = vmatpush1.msra.mxu0 0.0
    %1164 = vmatprep.subr.mxu0 0.0
    %1165 = vmatpush1.msra.mxu0 0.0
    %1166 = vmatprep.subr.mxu0 0.0
    %1167 = vmatpush1.msra.mxu0 0.0
    %1168 = vmatprep.subr.mxu0 0.0
    %1169 = vmatpush1.msra.mxu0 0.0
    %1170 = vmatprep.subr.mxu0 0.0
    %1171 = vmatpush1.msra.mxu0 0.0
    %1172 = vmatprep.subr.mxu0 0.0
    %1173 = vmatpush1.msra.mxu0 %v1140
    %1174 = vmatprep.subr.mxu0 0.0
    %1175 = vmatpush2.msra.mxu0 0.0
    %1176 = vmatprep.subr.mxu0 0.0
    %1177 = vmatpush2.msra.mxu0 0.0
    %1178 = vmatprep.subr.mxu0 0.0
    %1179 = vmatpush2.msra.mxu0 0.0
    %1180 = vmatprep.subr.mxu0 0.0
    %1181 = vmatpush2.msra.mxu0 0.0
    %1182 = vmatprep.subr.mxu0 0.0
    %1183 = vmatpush2.msra.mxu0 0.0
    %1184 = vmatprep.subr.mxu0 0.0
    %1185 = vmatpush2.msra.mxu0 0.0
    %1186 = vmatprep.subr.mxu0 0.0
    %1187 = vmatpush2.msra.mxu0 0.0
    %1188 = vmatprep.subr.mxu0 0.0
    %1189 = vmatpush2.msra.mxu0 0.0
    %1190 = vmatprep.subr.mxu0 0.0
    %1191 = vmatpush2.msra.mxu0 0.0
    %1192 = vmatprep.subr.mxu0 0.0
    %1193 = vmatpush2.msra.mxu0 0.0
    %1194 = vmatprep.subr.mxu0 0.0
    %1195 = vmatpush2.msra.mxu0 0.0
    %1196 = vmatprep.subr.mxu0 0.0
    %1197 = vmatpush2.msra.mxu0 0.0
    %1198 = vmatprep.subr.mxu0 0.0
    %1199 = vmatpush2.msra.mxu0 0.0
    %1200 = vmatprep.subr.mxu0 0.0
    %1201 = vmatpush2.msra.mxu0 0.0
    %1202 = vmatprep.subr.mxu0 0.0
    %1203 = vmatpush2.msra.mxu0 0.0
    %1204 = vmatprep.subr.mxu0 0.0
    %1205 = vmatpush2.msra.mxu0 0.0
    %1206 = vmatprep.mubr.f32.mxu0 0.0
    %1207 = vmatmul.mubr.f32.gmra.mxu0 %v1116
    %v1208 = vpop.f32.mrf.mxu0
    %v1209 = vadd.f32 0.0, %v1208
    %v1210 = vpop.f32.mrf.mxu0
    %1211 = vmatprep.mubr.f32.mxu0 0.0
    %1212 = vmatmul.mubr.f32.gmra.mxu0 %v1119
    %v1213 = vpop.f32.mrf.mxu0
    %v1214 = vadd.f32 0.0, %v1213
    %v1215 = vpop.f32.mrf.mxu0
    %1216 = vmatprep.mubr.f32.mxu0 0.0
    %1217 = vmatmul.mubr.f32.gmra.mxu0 %v1122
    %v1218 = vpop.f32.mrf.mxu0
    %v1219 = vadd.f32 0.0, %v1218
    %v1220 = vpop.f32.mrf.mxu0
    %1221 = vmatprep.mubr.f32.mxu0 0.0
    %1222 = vmatmul.mubr.f32.gmra.mxu0 %v1125
    %v1223 = vpop.f32.mrf.mxu0
    %v1224 = vadd.f32 0.0, %v1223
    %v1225 = vpop.f32.mrf.mxu0
    %1226 = vmatprep.mubr.f32.mxu0 0.0
    %1227 = vmatmul.mubr.f32.gmra.mxu0 %v1128
    %v1228 = vpop.f32.mrf.mxu0
    %v1229 = vadd.f32 0.0, %v1228
    %v1230 = vpop.f32.mrf.mxu0
    %1231 = vmatprep.mubr.f32.mxu0 0.0
    %1232 = vmatmul.mubr.f32.gmra.mxu0 %v1131
    %v1233 = vpop.f32.mrf.mxu0
    %v1234 = vadd.f32 0.0, %v1233
    %v1235 = vpop.f32.mrf.mxu0
    %1236 = vmatprep.mubr.f32.mxu0 0.0
    %1237 = vmatmul.mubr.f32.gmra.mxu0 %v1134
    %v1238 = vpop.f32.mrf.mxu0
    %v1239 = vadd.f32 0.0, %v1238
    %v1240 = vpop.f32.mrf.mxu0
    %1241 = vmatprep.mubr.f32.mxu0 0.0
    %1242 = vmatmul.mubr.f32.gmra.mxu0 %v1137
    %v1243 = vpop.f32.mrf.mxu0
    %v1244 = vadd.f32 0.0, %v1243
    %v1245 = vpop.f32.mrf.mxu0
    %1246 = vdwg.mxu0
    %vm1247 = vcmask 31744
    %v1249 = vsel %vm1247, %v61, 0
    %v1252 = vsel %vm1247, %v62, 0
    %v1255 = vsel %vm1247, %v63, 0
    %v1258 = vsel %vm1247, %v64, 0
    %v1261 = vsel %vm1247, %v65, 0
    %v1264 = vsel %vm1247, %v66, 0
    %v1267 = vsel %vm1247, %v67, 0
    %v1270 = vsel %vm1247, %v68, 0
    %vm1272 = vcmask 1043456
    %v1274 = vsel %vm1272, %v45, 0
    %1276 = vmatprep.subr.mxu0 0.0
    %1277 = vmatpush1.msra.mxu0 0.0
    %1278 = vmatprep.subr.mxu0 0.0
    %1279 = vmatpush1.msra.mxu0 0.0
    %1280 = vmatprep.subr.mxu0 0.0
    %1281 = vmatpush1.msra.mxu0 0.0
    %1282 = vmatprep.subr.mxu0 0.0
    %1283 = vmatpush1.msra.mxu0 0.0
    %1284 = vmatprep.subr.mxu0 0.0
    %1285 = vmatpush1.msra.mxu0 0.0
    %1286 = vmatprep.subr.mxu0 0.0
    %1287 = vmatpush1.msra.mxu0 0.0
    %1288 = vmatprep.subr.mxu0 0.0
    %1289 = vmatpush1.msra.mxu0 0.0
    %1290 = vmatprep.subr.mxu0 0.0
    %1291 = vmatpush1.msra.mxu0 0.0
    %1292 = vmatprep.subr.mxu0 0.0
    %1293 = vmatpush1.msra.mxu0 0.0
    %1294 = vmatprep.subr.mxu0 0.0
    %1295 = vmatpush1.msra.mxu0 0.0
    %1296 = vmatprep.subr.mxu0 0.0
    %1297 = vmatpush1.msra.mxu0 0.0
    %1298 = vmatprep.subr.mxu0 0.0
    %1299 = vmatpush1.msra.mxu0 0.0
    %1300 = vmatprep.subr.mxu0 0.0
    %1301 = vmatpush1.msra.mxu0 0.0
    %1302 = vmatprep.subr.mxu0 0.0
    %1303 = vmatpush1.msra.mxu0 0.0
    %1304 = vmatprep.subr.mxu0 0.0
    %1305 = vmatpush1.msra.mxu0 0.0
    %1306 = vmatprep.subr.mxu0 0.0
    %1307 = vmatpush1.msra.mxu0 %v1274
    %1308 = vmatprep.subr.mxu0 0.0
    %1309 = vmatpush2.msra.mxu0 0.0
    %1310 = vmatprep.subr.mxu0 0.0
    %1311 = vmatpush2.msra.mxu0 0.0
    %1312 = vmatprep.subr.mxu0 0.0
    %1313 = vmatpush2.msra.mxu0 0.0
    %1314 = vmatprep.subr.mxu0 0.0
    %1315 = vmatpush2.msra.mxu0 0.0
    %1316 = vmatprep.subr.mxu0 0.0
    %1317 = vmatpush2.msra.mxu0 0.0
    %1318 = vmatprep.subr.mxu0 0.0
    %1319 = vmatpush2.msra.mxu0 0.0
    %1320 = vmatprep.subr.mxu0 0.0
    %1321 = vmatpush2.msra.mxu0 0.0
    %1322 = vmatprep.subr.mxu0 0.0
    %1323 = vmatpush2.msra.mxu0 0.0
    %1324 = vmatprep.subr.mxu0 0.0
    %1325 = vmatpush2.msra.mxu0 0.0
    %1326 = vmatprep.subr.mxu0 0.0
    %1327 = vmatpush2.msra.mxu0 0.0
    %1328 = vmatprep.subr.mxu0 0.0
    %1329 = vmatpush2.msra.mxu0 0.0
    %1330 = vmatprep.subr.mxu0 0.0
    %1331 = vmatpush2.msra.mxu0 0.0
    %1332 = vmatprep.subr.mxu0 0.0
    %1333 = vmatpush2.msra.mxu0 0.0
    %1334 = vmatprep.subr.mxu0 0.0
    %1335 = vmatpush2.msra.mxu0 0.0
    %1336 = vmatprep.subr.mxu0 0.0
    %1337 = vmatpush2.msra.mxu0 0.0
    %1338 = vmatprep.subr.mxu0 0.0
    %1339 = vmatpush2.msra.mxu0 0.0
    %1340 = vmatprep.mubr.f32.mxu0 0.0
    %1341 = vmatmul.mubr.f32.gmra.mxu0 %v1249
    %v1342 = vpop.f32.mrf.mxu0
    %v1343 = vadd.f32 %v285, %v1342
    %v1344 = vpop.f32.mrf.mxu0
    %1345 = vmatprep.mubr.f32.mxu0 0.0
    %1346 = vmatmul.mubr.f32.gmra.mxu0 %v1252
    %v1347 = vpop.f32.mrf.mxu0
    %v1348 = vadd.f32 %v290, %v1347
    %v1349 = vpop.f32.mrf.mxu0
    %1350 = vmatprep.mubr.f32.mxu0 0.0
    %1351 = vmatmul.mubr.f32.gmra.mxu0 %v1255
    %v1352 = vpop.f32.mrf.mxu0
    %v1353 = vadd.f32 %v295, %v1352
    %v1354 = vpop.f32.mrf.mxu0
    %1355 = vmatprep.mubr.f32.mxu0 0.0
    %1356 = vmatmul.mubr.f32.gmra.mxu0 %v1258
    %v1357 = vpop.f32.mrf.mxu0
    %v1358 = vadd.f32 %v300, %v1357
    %v1359 = vpop.f32.mrf.mxu0
    %1360 = vmatprep.mubr.f32.mxu0 0.0
    %1361 = vmatmul.mubr.f32.gmra.mxu0 %v1261
    %v1362 = vpop.f32.mrf.mxu0
    %v1363 = vadd.f32 %v305, %v1362
    %v1364 = vpop.f32.mrf.mxu0
    %1365 = vmatprep.mubr.f32.mxu0 0.0
    %1366 = vmatmul.mubr.f32.gmra.mxu0 %v1264
    %v1367 = vpop.f32.mrf.mxu0
    %v1368 = vadd.f32 %v310, %v1367
    %v1369 = vpop.f32.mrf.mxu0
    %1370 = vmatprep.mubr.f32.mxu0 0.0
    %1371 = vmatmul.mubr.f32.gmra.mxu0 %v1267
    %v1372 = vpop.f32.mrf.mxu0
    %v1373 = vadd.f32 %v315, %v1372
    %v1374 = vpop.f32.mrf.mxu0
    %1375 = vmatprep.mubr.f32.mxu0 0.0
    %1376 = vmatmul.mubr.f32.gmra.mxu0 %v1270
    %v1377 = vpop.f32.mrf.mxu0
    %v1378 = vadd.f32 %v320, %v1377
    %v1379 = vpop.f32.mrf.mxu0
    %1380 = vdwg.mxu0
    %v1382 = vsel %vm1247, %v69, 0
    %v1385 = vsel %vm1247, %v70, 0
    %v1388 = vsel %vm1247, %v71, 0
    %v1391 = vsel %vm1247, %v72, 0
    %v1394 = vsel %vm1247, %v73, 0
    %v1397 = vsel %vm1247, %v74, 0
    %v1400 = vsel %vm1247, %v75, 0
    %v1403 = vsel %vm1247, %v76, 0
    %v1406 = vsel %vm1272, %v46, 0
    %1408 = vmatprep.subr.mxu0 0.0
    %1409 = vmatpush1.msra.mxu0 0.0
    %1410 = vmatprep.subr.mxu0 0.0
    %1411 = vmatpush1.msra.mxu0 0.0
    %1412 = vmatprep.subr.mxu0 0.0
    %1413 = vmatpush1.msra.mxu0 0.0
    %1414 = vmatprep.subr.mxu0 0.0
    %1415 = vmatpush1.msra.mxu0 0.0
    %1416 = vmatprep.subr.mxu0 0.0
    %1417 = vmatpush1.msra.mxu0 0.0
    %1418 = vmatprep.subr.mxu0 0.0
    %1419 = vmatpush1.msra.mxu0 0.0
    %1420 = vmatprep.subr.mxu0 0.0
    %1421 = vmatpush1.msra.mxu0 0.0
    %1422 = vmatprep.subr.mxu0 0.0
    %1423 = vmatpush1.msra.mxu0 0.0
    %1424 = vmatprep.subr.mxu0 0.0
    %1425 = vmatpush1.msra.mxu0 0.0
    %1426 = vmatprep.subr.mxu0 0.0
    %1427 = vmatpush1.msra.mxu0 0.0
    %1428 = vmatprep.subr.mxu0 0.0
    %1429 = vmatpush1.msra.mxu0 0.0
    %1430 = vmatprep.subr.mxu0 0.0
    %1431 = vmatpush1.msra.mxu0 0.0
    %1432 = vmatprep.subr.mxu0 0.0
    %1433 = vmatpush1.msra.mxu0 0.0
    %1434 = vmatprep.subr.mxu0 0.0
    %1435 = vmatpush1.msra.mxu0 0.0
    %1436 = vmatprep.subr.mxu0 0.0
    %1437 = vmatpush1.msra.mxu0 0.0
    %1438 = vmatprep.subr.mxu0 0.0
    %1439 = vmatpush1.msra.mxu0 %v1406
    %1440 = vmatprep.subr.mxu0 0.0
    %1441 = vmatpush2.msra.mxu0 0.0
    %1442 = vmatprep.subr.mxu0 0.0
    %1443 = vmatpush2.msra.mxu0 0.0
    %1444 = vmatprep.subr.mxu0 0.0
    %1445 = vmatpush2.msra.mxu0 0.0
    %1446 = vmatprep.subr.mxu0 0.0
    %1447 = vmatpush2.msra.mxu0 0.0
    %1448 = vmatprep.subr.mxu0 0.0
    %1449 = vmatpush2.msra.mxu0 0.0
    %1450 = vmatprep.subr.mxu0 0.0
    %1451 = vmatpush2.msra.mxu0 0.0
    %1452 = vmatprep.subr.mxu0 0.0
    %1453 = vmatpush2.msra.mxu0 0.0
    %1454 = vmatprep.subr.mxu0 0.0
    %1455 = vmatpush2.msra.mxu0 0.0
    %1456 = vmatprep.subr.mxu0 0.0
    %1457 = vmatpush2.msra.mxu0 0.0
    %1458 = vmatprep.subr.mxu0 0.0
    %1459 = vmatpush2.msra.mxu0 0.0
    %1460 = vmatprep.subr.mxu0 0.0
    %1461 = vmatpush2.msra.mxu0 0.0
    %1462 = vmatprep.subr.mxu0 0.0
    %1463 = vmatpush2.msra.mxu0 0.0
    %1464 = vmatprep.subr.mxu0 0.0
    %1465 = vmatpush2.msra.mxu0 0.0
    %1466 = vmatprep.subr.mxu0 0.0
    %1467 = vmatpush2.msra.mxu0 0.0
    %1468 = vmatprep.subr.mxu0 0.0
    %1469 = vmatpush2.msra.mxu0 0.0
    %1470 = vmatprep.subr.mxu0 0.0
    %1471 = vmatpush2.msra.mxu0 0.0
    %1472 = vmatprep.mubr.f32.mxu0 0.0
    %1473 = vmatmul.mubr.f32.gmra.mxu0 %v1382
    %v1474 = vpop.f32.mrf.mxu0
    %v1475 = vadd.f32 %v417, %v1474
    %v1476 = vpop.f32.mrf.mxu0
    %1477 = vmatprep.mubr.f32.mxu0 0.0
    %1478 = vmatmul.mubr.f32.gmra.mxu0 %v1385
    %v1479 = vpop.f32.mrf.mxu0
    %v1480 = vadd.f32 %v422, %v1479
    %v1481 = vpop.f32.mrf.mxu0
    %1482 = vmatprep.mubr.f32.mxu0 0.0
    %1483 = vmatmul.mubr.f32.gmra.mxu0 %v1388
    %v1484 = vpop.f32.mrf.mxu0
    %v1485 = vadd.f32 %v427, %v1484
    %v1486 = vpop.f32.mrf.mxu0
    %1487 = vmatprep.mubr.f32.mxu0 0.0
    %1488 = vmatmul.mubr.f32.gmra.mxu0 %v1391
    %v1489 = vpop.f32.mrf.mxu0
    %v1490 = vadd.f32 %v432, %v1489
    %v1491 = vpop.f32.mrf.mxu0
    %1492 = vmatprep.mubr.f32.mxu0 0.0
    %1493 = vmatmul.mubr.f32.gmra.mxu0 %v1394
    %v1494 = vpop.f32.mrf.mxu0
    %v1495 = vadd.f32 %v437, %v1494
    %v1496 = vpop.f32.mrf.mxu0
    %1497 = vmatprep.mubr.f32.mxu0 0.0
    %1498 = vmatmul.mubr.f32.gmra.mxu0 %v1397
    %v1499 = vpop.f32.mrf.mxu0
    %v1500 = vadd.f32 %v442, %v1499
    %v1501 = vpop.f32.mrf.mxu0
    %1502 = vmatprep.mubr.f32.mxu0 0.0
    %1503 = vmatmul.mubr.f32.gmra.mxu0 %v1400
    %v1504 = vpop.f32.mrf.mxu0
    %v1505 = vadd.f32 %v447, %v1504
    %v1506 = vpop.f32.mrf.mxu0
    %1507 = vmatprep.mubr.f32.mxu0 0.0
    %1508 = vmatmul.mubr.f32.gmra.mxu0 %v1403
    %v1509 = vpop.f32.mrf.mxu0
    %v1510 = vadd.f32 %v452, %v1509
    %v1511 = vpop.f32.mrf.mxu0
    %1512 = vdwg.mxu0
    %v1514 = vsel %vm1247, %v77, 0
    %v1517 = vsel %vm1247, %v78, 0
    %v1520 = vsel %vm1247, %v79, 0
    %v1523 = vsel %vm1247, %v80, 0
    %v1526 = vsel %vm1247, %v81, 0
    %v1529 = vsel %vm1247, %v82, 0
    %v1532 = vsel %vm1247, %v83, 0
    %v1535 = vsel %vm1247, %v84, 0
    %v1538 = vsel %vm1272, %v47, 0
    %1540 = vmatprep.subr.mxu0 0.0
    %1541 = vmatpush1.msra.mxu0 0.0
    %1542 = vmatprep.subr.mxu0 0.0
    %1543 = vmatpush1.msra.mxu0 0.0
    %1544 = vmatprep.subr.mxu0 0.0
    %1545 = vmatpush1.msra.mxu0 0.0
    %1546 = vmatprep.subr.mxu0 0.0
    %1547 = vmatpush1.msra.mxu0 0.0
    %1548 = vmatprep.subr.mxu0 0.0
    %1549 = vmatpush1.msra.mxu0 0.0
    %1550 = vmatprep.subr.mxu0 0.0
    %1551 = vmatpush1.msra.mxu0 0.0
    %1552 = vmatprep.subr.mxu0 0.0
    %1553 = vmatpush1.msra.mxu0 0.0
    %1554 = vmatprep.subr.mxu0 0.0
    %1555 = vmatpush1.msra.mxu0 0.0
    %1556 = vmatprep.subr.mxu0 0.0
    %1557 = vmatpush1.msra.mxu0 0.0
    %1558 = vmatprep.subr.mxu0 0.0
    %1559 = vmatpush1.msra.mxu0 0.0
    %1560 = vmatprep.subr.mxu0 0.0
    %1561 = vmatpush1.msra.mxu0 0.0
    %1562 = vmatprep.subr.mxu0 0.0
    %1563 = vmatpush1.msra.mxu0 0.0
    %1564 = vmatprep.subr.mxu0 0.0
    %1565 = vmatpush1.msra.mxu0 0.0
    %1566 = vmatprep.subr.mxu0 0.0
    %1567 = vmatpush1.msra.mxu0 0.0
    %1568 = vmatprep.subr.mxu0 0.0
    %1569 = vmatpush1.msra.mxu0 0.0
    %1570 = vmatprep.subr.mxu0 0.0
    %1571 = vmatpush1.msra.mxu0 %v1538
    %1572 = vmatprep.subr.mxu0 0.0
    %1573 = vmatpush2.msra.mxu0 0.0
    %1574 = vmatprep.subr.mxu0 0.0
    %1575 = vmatpush2.msra.mxu0 0.0
    %1576 = vmatprep.subr.mxu0 0.0
    %1577 = vmatpush2.msra.mxu0 0.0
    %1578 = vmatprep.subr.mxu0 0.0
    %1579 = vmatpush2.msra.mxu0 0.0
    %1580 = vmatprep.subr.mxu0 0.0
    %1581 = vmatpush2.msra.mxu0 0.0
    %1582 = vmatprep.subr.mxu0 0.0
    %1583 = vmatpush2.msra.mxu0 0.0
    %1584 = vmatprep.subr.mxu0 0.0
    %1585 = vmatpush2.msra.mxu0 0.0
    %1586 = vmatprep.subr.mxu0 0.0
    %1587 = vmatpush2.msra.mxu0 0.0
    %1588 = vmatprep.subr.mxu0 0.0
    %1589 = vmatpush2.msra.mxu0 0.0
    %1590 = vmatprep.subr.mxu0 0.0
    %1591 = vmatpush2.msra.mxu0 0.0
    %1592 = vmatprep.subr.mxu0 0.0
    %1593 = vmatpush2.msra.mxu0 0.0
    %1594 = vmatprep.subr.mxu0 0.0
    %1595 = vmatpush2.msra.mxu0 0.0
    %1596 = vmatprep.subr.mxu0 0.0
    %1597 = vmatpush2.msra.mxu0 0.0
    %1598 = vmatprep.subr.mxu0 0.0
    %1599 = vmatpush2.msra.mxu0 0.0
    %1600 = vmatprep.subr.mxu0 0.0
    %1601 = vmatpush2.msra.mxu0 0.0
    %1602 = vmatprep.subr.mxu0 0.0
    %1603 = vmatpush2.msra.mxu0 0.0
    %1604 = vmatprep.mubr.f32.mxu0 0.0
    %1605 = vmatmul.mubr.f32.gmra.mxu0 %v1514
    %v1606 = vpop.f32.mrf.mxu0
    %v1607 = vadd.f32 %v549, %v1606
    %v1608 = vpop.f32.mrf.mxu0
    %1609 = vmatprep.mubr.f32.mxu0 0.0
    %1610 = vmatmul.mubr.f32.gmra.mxu0 %v1517
    %v1611 = vpop.f32.mrf.mxu0
    %v1612 = vadd.f32 %v554, %v1611
    %v1613 = vpop.f32.mrf.mxu0
    %1614 = vmatprep.mubr.f32.mxu0 0.0
    %1615 = vmatmul.mubr.f32.gmra.mxu0 %v1520
    %v1616 = vpop.f32.mrf.mxu0
    %v1617 = vadd.f32 %v559, %v1616
    %v1618 = vpop.f32.mrf.mxu0
    %1619 = vmatprep.mubr.f32.mxu0 0.0
    %1620 = vmatmul.mubr.f32.gmra.mxu0 %v1523
    %v1621 = vpop.f32.mrf.mxu0
    %v1622 = vadd.f32 %v564, %v1621
    %v1623 = vpop.f32.mrf.mxu0
    %1624 = vmatprep.mubr.f32.mxu0 0.0
    %1625 = vmatmul.mubr.f32.gmra.mxu0 %v1526
    %v1626 = vpop.f32.mrf.mxu0
    %v1627 = vadd.f32 %v569, %v1626
    %v1628 = vpop.f32.mrf.mxu0
    %1629 = vmatprep.mubr.f32.mxu0 0.0
    %1630 = vmatmul.mubr.f32.gmra.mxu0 %v1529
    %v1631 = vpop.f32.mrf.mxu0
    %v1632 = vadd.f32 %v574, %v1631
    %v1633 = vpop.f32.mrf.mxu0
    %1634 = vmatprep.mubr.f32.mxu0 0.0
    %1635 = vmatmul.mubr.f32.gmra.mxu0 %v1532
    %v1636 = vpop.f32.mrf.mxu0
    %v1637 = vadd.f32 %v579, %v1636
    %v1638 = vpop.f32.mrf.mxu0
    %1639 = vmatprep.mubr.f32.mxu0 0.0
    %1640 = vmatmul.mubr.f32.gmra.mxu0 %v1535
    %v1641 = vpop.f32.mrf.mxu0
    %v1642 = vadd.f32 %v584, %v1641
    %v1643 = vpop.f32.mrf.mxu0
    %1644 = vdwg.mxu0
    %v1646 = vsel %vm1247, %v85, 0
    %v1649 = vsel %vm1247, %v86, 0
    %v1652 = vsel %vm1247, %v87, 0
    %v1655 = vsel %vm1247, %v88, 0
    %v1658 = vsel %vm1247, %v89, 0
    %v1661 = vsel %vm1247, %v90, 0
    %v1664 = vsel %vm1247, %v91, 0
    %v1667 = vsel %vm1247, %v92, 0
    %v1670 = vsel %vm1272, %v48, 0
    %1672 = vmatprep.subr.mxu0 0.0
    %1673 = vmatpush1.msra.mxu0 0.0
    %1674 = vmatprep.subr.mxu0 0.0
    %1675 = vmatpush1.msra.mxu0 0.0
    %1676 = vmatprep.subr.mxu0 0.0
    %1677 = vmatpush1.msra.mxu0 0.0
    %1678 = vmatprep.subr.mxu0 0.0
    %1679 = vmatpush1.msra.mxu0 0.0
    %1680 = vmatprep.subr.mxu0 0.0
    %1681 = vmatpush1.msra.mxu0 0.0
    %1682 = vmatprep.subr.mxu0 0.0
    %1683 = vmatpush1.msra.mxu0 0.0
    %1684 = vmatprep.subr.mxu0 0.0
    %1685 = vmatpush1.msra.mxu0 0.0
    %1686 = vmatprep.subr.mxu0 0.0
    %1687 = vmatpush1.msra.mxu0 0.0
    %1688 = vmatprep.subr.mxu0 0.0
    %1689 = vmatpush1.msra.mxu0 0.0
    %1690 = vmatprep.subr.mxu0 0.0
    %1691 = vmatpush1.msra.mxu0 0.0
    %1692 = vmatprep.subr.mxu0 0.0
    %1693 = vmatpush1.msra.mxu0 0.0
    %1694 = vmatprep.subr.mxu0 0.0
    %1695 = vmatpush1.msra.mxu0 0.0
    %1696 = vmatprep.subr.mxu0 0.0
    %1697 = vmatpush1.msra.mxu0 0.0
    %1698 = vmatprep.subr.mxu0 0.0
    %1699 = vmatpush1.msra.mxu0 0.0
    %1700 = vmatprep.subr.mxu0 0.0
    %1701 = vmatpush1.msra.mxu0 0.0
    %1702 = vmatprep.subr.mxu0 0.0
    %1703 = vmatpush1.msra.mxu0 %v1670
    %1704 = vmatprep.subr.mxu0 0.0
    %1705 = vmatpush2.msra.mxu0 0.0
    %1706 = vmatprep.subr.mxu0 0.0
    %1707 = vmatpush2.msra.mxu0 0.0
    %1708 = vmatprep.subr.mxu0 0.0
    %1709 = vmatpush2.msra.mxu0 0.0
    %1710 = vmatprep.subr.mxu0 0.0
    %1711 = vmatpush2.msra.mxu0 0.0
    %1712 = vmatprep.subr.mxu0 0.0
    %1713 = vmatpush2.msra.mxu0 0.0
    %1714 = vmatprep.subr.mxu0 0.0
    %1715 = vmatpush2.msra.mxu0 0.0
    %1716 = vmatprep.subr.mxu0 0.0
    %1717 = vmatpush2.msra.mxu0 0.0
    %1718 = vmatprep.subr.mxu0 0.0
    %1719 = vmatpush2.msra.mxu0 0.0
    %1720 = vmatprep.subr.mxu0 0.0
    %1721 = vmatpush2.msra.mxu0 0.0
    %1722 = vmatprep.subr.mxu0 0.0
    %1723 = vmatpush2.msra.mxu0 0.0
    %1724 = vmatprep.subr.mxu0 0.0
    %1725 = vmatpush2.msra.mxu0 0.0
    %1726 = vmatprep.subr.mxu0 0.0
    %1727 = vmatpush2.msra.mxu0 0.0
    %1728 = vmatprep.subr.mxu0 0.0
    %1729 = vmatpush2.msra.mxu0 0.0
    %1730 = vmatprep.subr.mxu0 0.0
    %1731 = vmatpush2.msra.mxu0 0.0
    %1732 = vmatprep.subr.mxu0 0.0
    %1733 = vmatpush2.msra.mxu0 0.0
    %1734 = vmatprep.subr.mxu0 0.0
    %1735 = vmatpush2.msra.mxu0 0.0
    %1736 = vmatprep.mubr.f32.mxu0 0.0
    %1737 = vmatmul.mubr.f32.gmra.mxu0 %v1646
    %v1738 = vpop.f32.mrf.mxu0
    %v1739 = vadd.f32 %v681, %v1738
    %v1740 = vpop.f32.mrf.mxu0
    %1741 = vmatprep.mubr.f32.mxu0 0.0
    %1742 = vmatmul.mubr.f32.gmra.mxu0 %v1649
    %v1743 = vpop.f32.mrf.mxu0
    %v1744 = vadd.f32 %v686, %v1743
    %v1745 = vpop.f32.mrf.mxu0
    %1746 = vmatprep.mubr.f32.mxu0 0.0
    %1747 = vmatmul.mubr.f32.gmra.mxu0 %v1652
    %v1748 = vpop.f32.mrf.mxu0
    %v1749 = vadd.f32 %v691, %v1748
    %v1750 = vpop.f32.mrf.mxu0
    %1751 = vmatprep.mubr.f32.mxu0 0.0
    %1752 = vmatmul.mubr.f32.gmra.mxu0 %v1655
    %v1753 = vpop.f32.mrf.mxu0
    %v1754 = vadd.f32 %v696, %v1753
    %v1755 = vpop.f32.mrf.mxu0
    %1756 = vmatprep.mubr.f32.mxu0 0.0
    %1757 = vmatmul.mubr.f32.gmra.mxu0 %v1658
    %v1758 = vpop.f32.mrf.mxu0
    %v1759 = vadd.f32 %v701, %v1758
    %v1760 = vpop.f32.mrf.mxu0
    %1761 = vmatprep.mubr.f32.mxu0 0.0
    %1762 = vmatmul.mubr.f32.gmra.mxu0 %v1661
    %v1763 = vpop.f32.mrf.mxu0
    %v1764 = vadd.f32 %v706, %v1763
    %v1765 = vpop.f32.mrf.mxu0
    %1766 = vmatprep.mubr.f32.mxu0 0.0
    %1767 = vmatmul.mubr.f32.gmra.mxu0 %v1664
    %v1768 = vpop.f32.mrf.mxu0
    %v1769 = vadd.f32 %v711, %v1768
    %v1770 = vpop.f32.mrf.mxu0
    %1771 = vmatprep.mubr.f32.mxu0 0.0
    %1772 = vmatmul.mubr.f32.gmra.mxu0 %v1667
    %v1773 = vpop.f32.mrf.mxu0
    %v1774 = vadd.f32 %v716, %v1773
    %v1775 = vpop.f32.mrf.mxu0
    %1776 = vdwg.mxu0
    %v1778 = vsel %vm1247, %v93, 0
    %v1781 = vsel %vm1247, %v94, 0
    %v1784 = vsel %vm1247, %v95, 0
    %v1787 = vsel %vm1247, %v96, 0
    %v1790 = vsel %vm1247, %v97, 0
    %v1793 = vsel %vm1247, %v98, 0
    %v1796 = vsel %vm1247, %v99, 0
    %v1799 = vsel %vm1247, %v100, 0
    %v1802 = vsel %vm1272, %v49, 0
    %1804 = vmatprep.subr.mxu0 0.0
    %1805 = vmatpush1.msra.mxu0 0.0
    %1806 = vmatprep.subr.mxu0 0.0
    %1807 = vmatpush1.msra.mxu0 0.0
    %1808 = vmatprep.subr.mxu0 0.0
    %1809 = vmatpush1.msra.mxu0 0.0
    %1810 = vmatprep.subr.mxu0 0.0
    %1811 = vmatpush1.msra.mxu0 0.0
    %1812 = vmatprep.subr.mxu0 0.0
    %1813 = vmatpush1.msra.mxu0 0.0
    %1814 = vmatprep.subr.mxu0 0.0
    %1815 = vmatpush1.msra.mxu0 0.0
    %1816 = vmatprep.subr.mxu0 0.0
    %1817 = vmatpush1.msra.mxu0 0.0
    %1818 = vmatprep.subr.mxu0 0.0
    %1819 = vmatpush1.msra.mxu0 0.0
    %1820 = vmatprep.subr.mxu0 0.0
    %1821 = vmatpush1.msra.mxu0 0.0
    %1822 = vmatprep.subr.mxu0 0.0
    %1823 = vmatpush1.msra.mxu0 0.0
    %1824 = vmatprep.subr.mxu0 0.0
    %1825 = vmatpush1.msra.mxu0 0.0
    %1826 = vmatprep.subr.mxu0 0.0
    %1827 = vmatpush1.msra.mxu0 0.0
    %1828 = vmatprep.subr.mxu0 0.0
    %1829 = vmatpush1.msra.mxu0 0.0
    %1830 = vmatprep.subr.mxu0 0.0
    %1831 = vmatpush1.msra.mxu0 0.0
    %1832 = vmatprep.subr.mxu0 0.0
    %1833 = vmatpush1.msra.mxu0 0.0
    %1834 = vmatprep.subr.mxu0 0.0
    %1835 = vmatpush1.msra.mxu0 %v1802
    %1836 = vmatprep.subr.mxu0 0.0
    %1837 = vmatpush2.msra.mxu0 0.0
    %1838 = vmatprep.subr.mxu0 0.0
    %1839 = vmatpush2.msra.mxu0 0.0
    %1840 = vmatprep.subr.mxu0 0.0
    %1841 = vmatpush2.msra.mxu0 0.0
    %1842 = vmatprep.subr.mxu0 0.0
    %1843 = vmatpush2.msra.mxu0 0.0
    %1844 = vmatprep.subr.mxu0 0.0
    %1845 = vmatpush2.msra.mxu0 0.0
    %1846 = vmatprep.subr.mxu0 0.0
    %1847 = vmatpush2.msra.mxu0 0.0
    %1848 = vmatprep.subr.mxu0 0.0
    %1849 = vmatpush2.msra.mxu0 0.0
    %1850 = vmatprep.subr.mxu0 0.0
    %1851 = vmatpush2.msra.mxu0 0.0
    %1852 = vmatprep.subr.mxu0 0.0
    %1853 = vmatpush2.msra.mxu0 0.0
    %1854 = vmatprep.subr.mxu0 0.0
    %1855 = vmatpush2.msra.mxu0 0.0
    %1856 = vmatprep.subr.mxu0 0.0
    %1857 = vmatpush2.msra.mxu0 0.0
    %1858 = vmatprep.subr.mxu0 0.0
    %1859 = vmatpush2.msra.mxu0 0.0
    %1860 = vmatprep.subr.mxu0 0.0
    %1861 = vmatpush2.msra.mxu0 0.0
    %1862 = vmatprep.subr.mxu0 0.0
    %1863 = vmatpush2.msra.mxu0 0.0
    %1864 = vmatprep.subr.mxu0 0.0
    %1865 = vmatpush2.msra.mxu0 0.0
    %1866 = vmatprep.subr.mxu0 0.0
    %1867 = vmatpush2.msra.mxu0 0.0
    %1868 = vmatprep.mubr.f32.mxu0 0.0
    %1869 = vmatmul.mubr.f32.gmra.mxu0 %v1778
    %v1870 = vpop.f32.mrf.mxu0
    %v1871 = vadd.f32 %v813, %v1870
    %v1872 = vpop.f32.mrf.mxu0
    %1873 = vmatprep.mubr.f32.mxu0 0.0
    %1874 = vmatmul.mubr.f32.gmra.mxu0 %v1781
    %v1875 = vpop.f32.mrf.mxu0
    %v1876 = vadd.f32 %v818, %v1875
    %v1877 = vpop.f32.mrf.mxu0
    %1878 = vmatprep.mubr.f32.mxu0 0.0
    %1879 = vmatmul.mubr.f32.gmra.mxu0 %v1784
    %v1880 = vpop.f32.mrf.mxu0
    %v1881 = vadd.f32 %v823, %v1880
    %v1882 = vpop.f32.mrf.mxu0
    %1883 = vmatprep.mubr.f32.mxu0 0.0
    %1884 = vmatmul.mubr.f32.gmra.mxu0 %v1787
    %v1885 = vpop.f32.mrf.mxu0
    %v1886 = vadd.f32 %v828, %v1885
    %v1887 = vpop.f32.mrf.mxu0
    %1888 = vmatprep.mubr.f32.mxu0 0.0
    %1889 = vmatmul.mubr.f32.gmra.mxu0 %v1790
    %v1890 = vpop.f32.mrf.mxu0
    %v1891 = vadd.f32 %v833, %v1890
    %v1892 = vpop.f32.mrf.mxu0
    %1893 = vmatprep.mubr.f32.mxu0 0.0
    %1894 = vmatmul.mubr.f32.gmra.mxu0 %v1793
    %v1895 = vpop.f32.mrf.mxu0
    %v1896 = vadd.f32 %v838, %v1895
    %v1897 = vpop.f32.mrf.mxu0
    %1898 = vmatprep.mubr.f32.mxu0 0.0
    %1899 = vmatmul.mubr.f32.gmra.mxu0 %v1796
    %v1900 = vpop.f32.mrf.mxu0
    %v1901 = vadd.f32 %v843, %v1900
    %v1902 = vpop.f32.mrf.mxu0
    %1903 = vmatprep.mubr.f32.mxu0 0.0
    %1904 = vmatmul.mubr.f32.gmra.mxu0 %v1799
    %v1905 = vpop.f32.mrf.mxu0
    %v1906 = vadd.f32 %v848, %v1905
    %v1907 = vpop.f32.mrf.mxu0
    %1908 = vdwg.mxu0
    %v1910 = vsel %vm1247, %v101, 0
    %v1913 = vsel %vm1247, %v102, 0
    %v1916 = vsel %vm1247, %v103, 0
    %v1919 = vsel %vm1247, %v104, 0
    %v1922 = vsel %vm1247, %v105, 0
    %v1925 = vsel %vm1247, %v106, 0
    %v1928 = vsel %vm1247, %v107, 0
    %v1931 = vsel %vm1247, %v108, 0
    %v1934 = vsel %vm1272, %v50, 0
    %1936 = vmatprep.subr.mxu0 0.0
    %1937 = vmatpush1.msra.mxu0 0.0
    %1938 = vmatprep.subr.mxu0 0.0
    %1939 = vmatpush1.msra.mxu0 0.0
    %1940 = vmatprep.subr.mxu0 0.0
    %1941 = vmatpush1.msra.mxu0 0.0
    %1942 = vmatprep.subr.mxu0 0.0
    %1943 = vmatpush1.msra.mxu0 0.0
    %1944 = vmatprep.subr.mxu0 0.0
    %1945 = vmatpush1.msra.mxu0 0.0
    %1946 = vmatprep.subr.mxu0 0.0
    %1947 = vmatpush1.msra.mxu0 0.0
    %1948 = vmatprep.subr.mxu0 0.0
    %1949 = vmatpush1.msra.mxu0 0.0
    %1950 = vmatprep.subr.mxu0 0.0
    %1951 = vmatpush1.msra.mxu0 0.0
    %1952 = vmatprep.subr.mxu0 0.0
    %1953 = vmatpush1.msra.mxu0 0.0
    %1954 = vmatprep.subr.mxu0 0.0
    %1955 = vmatpush1.msra.mxu0 0.0
    %1956 = vmatprep.subr.mxu0 0.0
    %1957 = vmatpush1.msra.mxu0 0.0
    %1958 = vmatprep.subr.mxu0 0.0
    %1959 = vmatpush1.msra.mxu0 0.0
    %1960 = vmatprep.subr.mxu0 0.0
    %1961 = vmatpush1.msra.mxu0 0.0
    %1962 = vmatprep.subr.mxu0 0.0
    %1963 = vmatpush1.msra.mxu0 0.0
    %1964 = vmatprep.subr.mxu0 0.0
    %1965 = vmatpush1.msra.mxu0 0.0
    %1966 = vmatprep.subr.mxu0 0.0
    %1967 = vmatpush1.msra.mxu0 %v1934
    %1968 = vmatprep.subr.mxu0 0.0
    %1969 = vmatpush2.msra.mxu0 0.0
    %1970 = vmatprep.subr.mxu0 0.0
    %1971 = vmatpush2.msra.mxu0 0.0
    %1972 = vmatprep.subr.mxu0 0.0
    %1973 = vmatpush2.msra.mxu0 0.0
    %1974 = vmatprep.subr.mxu0 0.0
    %1975 = vmatpush2.msra.mxu0 0.0
    %1976 = vmatprep.subr.mxu0 0.0
    %1977 = vmatpush2.msra.mxu0 0.0
    %1978 = vmatprep.subr.mxu0 0.0
    %1979 = vmatpush2.msra.mxu0 0.0
    %1980 = vmatprep.subr.mxu0 0.0
    %1981 = vmatpush2.msra.mxu0 0.0
    %1982 = vmatprep.subr.mxu0 0.0
    %1983 = vmatpush2.msra.mxu0 0.0
    %1984 = vmatprep.subr.mxu0 0.0
    %1985 = vmatpush2.msra.mxu0 0.0
    %1986 = vmatprep.subr.mxu0 0.0
    %1987 = vmatpush2.msra.mxu0 0.0
    %1988 = vmatprep.subr.mxu0 0.0
    %1989 = vmatpush2.msra.mxu0 0.0
    %1990 = vmatprep.subr.mxu0 0.0
    %1991 = vmatpush2.msra.mxu0 0.0
    %1992 = vmatprep.subr.mxu0 0.0
    %1993 = vmatpush2.msra.mxu0 0.0
    %1994 = vmatprep.subr.mxu0 0.0
    %1995 = vmatpush2.msra.mxu0 0.0
    %1996 = vmatprep.subr.mxu0 0.0
    %1997 = vmatpush2.msra.mxu0 0.0
    %1998 = vmatprep.subr.mxu0 0.0
    %1999 = vmatpush2.msra.mxu0 0.0
    %2000 = vmatprep.mubr.f32.mxu0 0.0
    %2001 = vmatmul.mubr.f32.gmra.mxu0 %v1910
    %v2002 = vpop.f32.mrf.mxu0
    %v2003 = vadd.f32 %v945, %v2002
    %v2004 = vpop.f32.mrf.mxu0
    %2005 = vmatprep.mubr.f32.mxu0 0.0
    %2006 = vmatmul.mubr.f32.gmra.mxu0 %v1913
    %v2007 = vpop.f32.mrf.mxu0
    %v2008 = vadd.f32 %v950, %v2007
    %v2009 = vpop.f32.mrf.mxu0
    %2010 = vmatprep.mubr.f32.mxu0 0.0
    %2011 = vmatmul.mubr.f32.gmra.mxu0 %v1916
    %v2012 = vpop.f32.mrf.mxu0
    %v2013 = vadd.f32 %v955, %v2012
    %v2014 = vpop.f32.mrf.mxu0
    %2015 = vmatprep.mubr.f32.mxu0 0.0
    %2016 = vmatmul.mubr.f32.gmra.mxu0 %v1919
    %v2017 = vpop.f32.mrf.mxu0
    %v2018 = vadd.f32 %v960, %v2017
    %v2019 = vpop.f32.mrf.mxu0
    %2020 = vmatprep.mubr.f32.mxu0 0.0
    %2021 = vmatmul.mubr.f32.gmra.mxu0 %v1922
    %v2022 = vpop.f32.mrf.mxu0
    %v2023 = vadd.f32 %v965, %v2022
    %v2024 = vpop.f32.mrf.mxu0
    %2025 = vmatprep.mubr.f32.mxu0 0.0
    %2026 = vmatmul.mubr.f32.gmra.mxu0 %v1925
    %v2027 = vpop.f32.mrf.mxu0
    %v2028 = vadd.f32 %v970, %v2027
    %v2029 = vpop.f32.mrf.mxu0
    %2030 = vmatprep.mubr.f32.mxu0 0.0
    %2031 = vmatmul.mubr.f32.gmra.mxu0 %v1928
    %v2032 = vpop.f32.mrf.mxu0
    %v2033 = vadd.f32 %v975, %v2032
    %v2034 = vpop.f32.mrf.mxu0
    %2035 = vmatprep.mubr.f32.mxu0 0.0
    %2036 = vmatmul.mubr.f32.gmra.mxu0 %v1931
    %v2037 = vpop.f32.mrf.mxu0
    %v2038 = vadd.f32 %v980, %v2037
    %v2039 = vpop.f32.mrf.mxu0
    %2040 = vdwg.mxu0
    %v2042 = vsel %vm1247, %v109, 0
    %v2045 = vsel %vm1247, %v110, 0
    %v2048 = vsel %vm1247, %v111, 0
    %v2051 = vsel %vm1247, %v112, 0
    %v2054 = vsel %vm1247, %v113, 0
    %v2057 = vsel %vm1247, %v114, 0
    %v2060 = vsel %vm1247, %v115, 0
    %v2063 = vsel %vm1247, %v116, 0
    %v2066 = vsel %vm1272, %v51, 0
    %2068 = vmatprep.subr.mxu0 0.0
    %2069 = vmatpush1.msra.mxu0 0.0
    %2070 = vmatprep.subr.mxu0 0.0
    %2071 = vmatpush1.msra.mxu0 0.0
    %2072 = vmatprep.subr.mxu0 0.0
    %2073 = vmatpush1.msra.mxu0 0.0
    %2074 = vmatprep.subr.mxu0 0.0
    %2075 = vmatpush1.msra.mxu0 0.0
    %2076 = vmatprep.subr.mxu0 0.0
    %2077 = vmatpush1.msra.mxu0 0.0
    %2078 = vmatprep.subr.mxu0 0.0
    %2079 = vmatpush1.msra.mxu0 0.0
    %2080 = vmatprep.subr.mxu0 0.0
    %2081 = vmatpush1.msra.mxu0 0.0
    %2082 = vmatprep.subr.mxu0 0.0
    %2083 = vmatpush1.msra.mxu0 0.0
    %2084 = vmatprep.subr.mxu0 0.0
    %2085 = vmatpush1.msra.mxu0 0.0
    %2086 = vmatprep.subr.mxu0 0.0
    %2087 = vmatpush1.msra.mxu0 0.0
    %2088 = vmatprep.subr.mxu0 0.0
    %2089 = vmatpush1.msra.mxu0 0.0
    %2090 = vmatprep.subr.mxu0 0.0
    %2091 = vmatpush1.msra.mxu0 0.0
    %2092 = vmatprep.subr.mxu0 0.0
    %2093 = vmatpush1.msra.mxu0 0.0
    %2094 = vmatprep.subr.mxu0 0.0
    %2095 = vmatpush1.msra.mxu0 0.0
    %2096 = vmatprep.subr.mxu0 0.0
    %2097 = vmatpush1.msra.mxu0 0.0
    %2098 = vmatprep.subr.mxu0 0.0
    %2099 = vmatpush1.msra.mxu0 %v2066
    %2100 = vmatprep.subr.mxu0 0.0
    %2101 = vmatpush2.msra.mxu0 0.0
    %2102 = vmatprep.subr.mxu0 0.0
    %2103 = vmatpush2.msra.mxu0 0.0
    %2104 = vmatprep.subr.mxu0 0.0
    %2105 = vmatpush2.msra.mxu0 0.0
    %2106 = vmatprep.subr.mxu0 0.0
    %2107 = vmatpush2.msra.mxu0 0.0
    %2108 = vmatprep.subr.mxu0 0.0
    %2109 = vmatpush2.msra.mxu0 0.0
    %2110 = vmatprep.subr.mxu0 0.0
    %2111 = vmatpush2.msra.mxu0 0.0
    %2112 = vmatprep.subr.mxu0 0.0
    %2113 = vmatpush2.msra.mxu0 0.0
    %2114 = vmatprep.subr.mxu0 0.0
    %2115 = vmatpush2.msra.mxu0 0.0
    %2116 = vmatprep.subr.mxu0 0.0
    %2117 = vmatpush2.msra.mxu0 0.0
    %2118 = vmatprep.subr.mxu0 0.0
    %2119 = vmatpush2.msra.mxu0 0.0
    %2120 = vmatprep.subr.mxu0 0.0
    %2121 = vmatpush2.msra.mxu0 0.0
    %2122 = vmatprep.subr.mxu0 0.0
    %2123 = vmatpush2.msra.mxu0 0.0
    %2124 = vmatprep.subr.mxu0 0.0
    %2125 = vmatpush2.msra.mxu0 0.0
    %2126 = vmatprep.subr.mxu0 0.0
    %2127 = vmatpush2.msra.mxu0 0.0
    %2128 = vmatprep.subr.mxu0 0.0
    %2129 = vmatpush2.msra.mxu0 0.0
    %2130 = vmatprep.subr.mxu0 0.0
    %2131 = vmatpush2.msra.mxu0 0.0
    %2132 = vmatprep.mubr.f32.mxu0 0.0
    %2133 = vmatmul.mubr.f32.gmra.mxu0 %v2042
    %v2134 = vpop.f32.mrf.mxu0
    %v2135 = vadd.f32 %v1077, %v2134
    %v2136 = vpop.f32.mrf.mxu0
    %2137 = vmatprep.mubr.f32.mxu0 0.0
    %2138 = vmatmul.mubr.f32.gmra.mxu0 %v2045
    %v2139 = vpop.f32.mrf.mxu0
    %v2140 = vadd.f32 %v1082, %v2139
    %v2141 = vpop.f32.mrf.mxu0
    %2142 = vmatprep.mubr.f32.mxu0 0.0
    %2143 = vmatmul.mubr.f32.gmra.mxu0 %v2048
    %v2144 = vpop.f32.mrf.mxu0
    %v2145 = vadd.f32 %v1087, %v2144
    %v2146 = vpop.f32.mrf.mxu0
    %2147 = vmatprep.mubr.f32.mxu0 0.0
    %2148 = vmatmul.mubr.f32.gmra.mxu0 %v2051
    %v2149 = vpop.f32.mrf.mxu0
    %v2150 = vadd.f32 %v1092, %v2149
    %v2151 = vpop.f32.mrf.mxu0
    %2152 = vmatprep.mubr.f32.mxu0 0.0
    %2153 = vmatmul.mubr.f32.gmra.mxu0 %v2054
    %v2154 = vpop.f32.mrf.mxu0
    %v2155 = vadd.f32 %v1097, %v2154
    %v2156 = vpop.f32.mrf.mxu0
    %2157 = vmatprep.mubr.f32.mxu0 0.0
    %2158 = vmatmul.mubr.f32.gmra.mxu0 %v2057
    %v2159 = vpop.f32.mrf.mxu0
    %v2160 = vadd.f32 %v1102, %v2159
    %v2161 = vpop.f32.mrf.mxu0
    %2162 = vmatprep.mubr.f32.mxu0 0.0
    %2163 = vmatmul.mubr.f32.gmra.mxu0 %v2060
    %v2164 = vpop.f32.mrf.mxu0
    %v2165 = vadd.f32 %v1107, %v2164
    %v2166 = vpop.f32.mrf.mxu0
    %2167 = vmatprep.mubr.f32.mxu0 0.0
    %2168 = vmatmul.mubr.f32.gmra.mxu0 %v2063
    %v2169 = vpop.f32.mrf.mxu0
    %v2170 = vadd.f32 %v1112, %v2169
    %v2171 = vpop.f32.mrf.mxu0
    %2172 = vdwg.mxu0
    %v2174 = vsel %vm1247, %v117, 0
    %v2177 = vsel %vm1247, %v118, 0
    %v2180 = vsel %vm1247, %v119, 0
    %v2183 = vsel %vm1247, %v120, 0
    %v2186 = vsel %vm1247, %v121, 0
    %v2189 = vsel %vm1247, %v122, 0
    %v2192 = vsel %vm1247, %v123, 0
    %v2195 = vsel %vm1247, %v124, 0
    %v2198 = vsel %vm1272, %v52, 0
    %2200 = vmatprep.subr.mxu0 0.0
    %2201 = vmatpush1.msra.mxu0 0.0
    %2202 = vmatprep.subr.mxu0 0.0
    %2203 = vmatpush1.msra.mxu0 0.0
    %2204 = vmatprep.subr.mxu0 0.0
    %2205 = vmatpush1.msra.mxu0 0.0
    %2206 = vmatprep.subr.mxu0 0.0
    %2207 = vmatpush1.msra.mxu0 0.0
    %2208 = vmatprep.subr.mxu0 0.0
    %2209 = vmatpush1.msra.mxu0 0.0
    %2210 = vmatprep.subr.mxu0 0.0
    %2211 = vmatpush1.msra.mxu0 0.0
    %2212 = vmatprep.subr.mxu0 0.0
    %2213 = vmatpush1.msra.mxu0 0.0
    %2214 = vmatprep.subr.mxu0 0.0
    %2215 = vmatpush1.msra.mxu0 0.0
    %2216 = vmatprep.subr.mxu0 0.0
    %2217 = vmatpush1.msra.mxu0 0.0
    %2218 = vmatprep.subr.mxu0 0.0
    %2219 = vmatpush1.msra.mxu0 0.0
    %2220 = vmatprep.subr.mxu0 0.0
    %2221 = vmatpush1.msra.mxu0 0.0
    %2222 = vmatprep.subr.mxu0 0.0
    %2223 = vmatpush1.msra.mxu0 0.0
    %2224 = vmatprep.subr.mxu0 0.0
    %2225 = vmatpush1.msra.mxu0 0.0
    %2226 = vmatprep.subr.mxu0 0.0
    %2227 = vmatpush1.msra.mxu0 0.0
    %2228 = vmatprep.subr.mxu0 0.0
    %2229 = vmatpush1.msra.mxu0 0.0
    %2230 = vmatprep.subr.mxu0 0.0
    %2231 = vmatpush1.msra.mxu0 %v2198
    %2232 = vmatprep.subr.mxu0 0.0
    %2233 = vmatpush2.msra.mxu0 0.0
    %2234 = vmatprep.subr.mxu0 0.0
    %2235 = vmatpush2.msra.mxu0 0.0
    %2236 = vmatprep.subr.mxu0 0.0
    %2237 = vmatpush2.msra.mxu0 0.0
    %2238 = vmatprep.subr.mxu0 0.0
    %2239 = vmatpush2.msra.mxu0 0.0
    %2240 = vmatprep.subr.mxu0 0.0
    %2241 = vmatpush2.msra.mxu0 0.0
    %2242 = vmatprep.subr.mxu0 0.0
    %2243 = vmatpush2.msra.mxu0 0.0
    %2244 = vmatprep.subr.mxu0 0.0
    %2245 = vmatpush2.msra.mxu0 0.0
    %2246 = vmatprep.subr.mxu0 0.0
    %2247 = vmatpush2.msra.mxu0 0.0
    %2248 = vmatprep.subr.mxu0 0.0
    %2249 = vmatpush2.msra.mxu0 0.0
    %2250 = vmatprep.subr.mxu0 0.0
    %2251 = vmatpush2.msra.mxu0 0.0
    %2252 = vmatprep.subr.mxu0 0.0
    %2253 = vmatpush2.msra.mxu0 0.0
    %2254 = vmatprep.subr.mxu0 0.0
    %2255 = vmatpush2.msra.mxu0 0.0
    %2256 = vmatprep.subr.mxu0 0.0
    %2257 = vmatpush2.msra.mxu0 0.0
    %2258 = vmatprep.subr.mxu0 0.0
    %2259 = vmatpush2.msra.mxu0 0.0
    %2260 = vmatprep.subr.mxu0 0.0
    %2261 = vmatpush2.msra.mxu0 0.0
    %2262 = vmatprep.subr.mxu0 0.0
    %2263 = vmatpush2.msra.mxu0 0.0
    %2264 = vmatprep.mubr.f32.mxu0 0.0
    %2265 = vmatmul.mubr.f32.gmra.mxu0 %v2174
    %v2266 = vpop.f32.mrf.mxu0
    %v2267 = vadd.f32 %v1209, %v2266
    %v2268 = vpop.f32.mrf.mxu0
    %2269 = vmatprep.mubr.f32.mxu0 0.0
    %2270 = vmatmul.mubr.f32.gmra.mxu0 %v2177
    %v2271 = vpop.f32.mrf.mxu0
    %v2272 = vadd.f32 %v1214, %v2271
    %v2273 = vpop.f32.mrf.mxu0
    %2274 = vmatprep.mubr.f32.mxu0 0.0
    %2275 = vmatmul.mubr.f32.gmra.mxu0 %v2180
    %v2276 = vpop.f32.mrf.mxu0
    %v2277 = vadd.f32 %v1219, %v2276
    %v2278 = vpop.f32.mrf.mxu0
    %2279 = vmatprep.mubr.f32.mxu0 0.0
    %2280 = vmatmul.mubr.f32.gmra.mxu0 %v2183
    %v2281 = vpop.f32.mrf.mxu0
    %v2282 = vadd.f32 %v1224, %v2281
    %v2283 = vpop.f32.mrf.mxu0
    %2284 = vmatprep.mubr.f32.mxu0 0.0
    %2285 = vmatmul.mubr.f32.gmra.mxu0 %v2186
    %v2286 = vpop.f32.mrf.mxu0
    %v2287 = vadd.f32 %v1229, %v2286
    %v2288 = vpop.f32.mrf.mxu0
    %2289 = vmatprep.mubr.f32.mxu0 0.0
    %2290 = vmatmul.mubr.f32.gmra.mxu0 %v2189
    %v2291 = vpop.f32.mrf.mxu0
    %v2292 = vadd.f32 %v1234, %v2291
    %v2293 = vpop.f32.mrf.mxu0
    %2294 = vmatprep.mubr.f32.mxu0 0.0
    %2295 = vmatmul.mubr.f32.gmra.mxu0 %v2192
    %v2296 = vpop.f32.mrf.mxu0
    %v2297 = vadd.f32 %v1239, %v2296
    %v2298 = vpop.f32.mrf.mxu0
    %2299 = vmatprep.mubr.f32.mxu0 0.0
    %2300 = vmatmul.mubr.f32.gmra.mxu0 %v2195
    %v2301 = vpop.f32.mrf.mxu0
    %v2302 = vadd.f32 %v1244, %v2301
    %v2303 = vpop.f32.mrf.mxu0
    %2304 = vdwg.mxu0
    %v2305 = vld [vmem:[%s4] sm:$0xff]
    %v2306 = vld [vmem:[%s4 + $0x8] sm:$0xff]
    %v2307 = vld [vmem:[%s4 + $0x10] sm:$0xff]
    %v2308 = vld [vmem:[%s4 + $0x18] sm:$0xff]
    %v2309 = vld [vmem:[%s4 + $0x20] sm:$0xff]
    %v2310 = vld [vmem:[%s4 + $0x28] sm:$0xff]
    %v2311 = vld [vmem:[%s4 + $0x30] sm:$0xff]
    %v2312 = vld [vmem:[%s4 + $0x38] sm:$0xff]
    %2314 = vset.pattern.permute.xlu0 0
    %2315 = vperm.xlu0 %2314, %v2305
    %v2316 = vpop.permute.xlu0 %2315
    %2319 = vset.pattern.permute.xlu0 0
    %2320 = vperm.xlu0 %2319, %v2306
    %v2321 = vpop.permute.xlu0 %2320
    %2324 = vset.pattern.permute.xlu0 0
    %2325 = vperm.xlu0 %2324, %v2307
    %v2326 = vpop.permute.xlu0 %2325
    %2329 = vset.pattern.permute.xlu0 0
    %2330 = vperm.xlu0 %2329, %v2308
    %v2331 = vpop.permute.xlu0 %2330
    %2334 = vset.pattern.permute.xlu0 0
    %2335 = vperm.xlu0 %2334, %v2309
    %v2336 = vpop.permute.xlu0 %2335
    %2339 = vset.pattern.permute.xlu0 0
    %2340 = vperm.xlu0 %2339, %v2310
    %v2341 = vpop.permute.xlu0 %2340
    %2344 = vset.pattern.permute.xlu0 0
    %2345 = vperm.xlu0 %2344, %v2311
    %v2346 = vpop.permute.xlu0 %2345
    %2349 = vset.pattern.permute.xlu0 0
    %2350 = vperm.xlu0 %2349, %v2312
    %v2351 = vpop.permute.xlu0 %2350
    %v2353 = vadd.f32 %v1343, %v2316
    %v2354 = vadd.f32 %v1348, %v2321
    %v2355 = vadd.f32 %v1353, %v2326
    %v2356 = vadd.f32 %v1358, %v2331
    %v2357 = vadd.f32 %v1363, %v2336
    %v2358 = vadd.f32 %v1368, %v2341
    %v2359 = vadd.f32 %v1373, %v2346
    %v2360 = vadd.f32 %v1378, %v2351
    %v2361 = vadd.f32 %v1475, %v2316
    %v2362 = vadd.f32 %v1480, %v2321
    %v2363 = vadd.f32 %v1485, %v2326
    %v2364 = vadd.f32 %v1490, %v2331
    %v2365 = vadd.f32 %v1495, %v2336
    %v2366 = vadd.f32 %v1500, %v2341
    %v2367 = vadd.f32 %v1505, %v2346
    %v2368 = vadd.f32 %v1510, %v2351
    %v2369 = vadd.f32 %v1607, %v2316
    %v2370 = vadd.f32 %v1612, %v2321
    %v2371 = vadd.f32 %v1617, %v2326
    %v2372 = vadd.f32 %v1622, %v2331
    %v2373 = vadd.f32 %v1627, %v2336
    %v2374 = vadd.f32 %v1632, %v2341
    %v2375 = vadd.f32 %v1637, %v2346
    %v2376 = vadd.f32 %v1642, %v2351
    %v2377 = vadd.f32 %v1739, %v2316
    %v2378 = vadd.f32 %v1744, %v2321
    %v2379 = vadd.f32 %v1749, %v2326
    %v2380 = vadd.f32 %v1754, %v2331
    %v2381 = vadd.f32 %v1759, %v2336
    %v2382 = vadd.f32 %v1764, %v2341
    %v2383 = vadd.f32 %v1769, %v2346
    %v2384 = vadd.f32 %v1774, %v2351
    %v2385 = vadd.f32 %v1871, %v2316
    %v2386 = vadd.f32 %v1876, %v2321
    %v2387 = vadd.f32 %v1881, %v2326
    %v2388 = vadd.f32 %v1886, %v2331
    %v2389 = vadd.f32 %v1891, %v2336
    %v2390 = vadd.f32 %v1896, %v2341
    %v2391 = vadd.f32 %v1901, %v2346
    %v2392 = vadd.f32 %v1906, %v2351
    %v2393 = vadd.f32 %v2003, %v2316
    %v2394 = vadd.f32 %v2008, %v2321
    %v2395 = vadd.f32 %v2013, %v2326
    %v2396 = vadd.f32 %v2018, %v2331
    %v2397 = vadd.f32 %v2023, %v2336
    %v2398 = vadd.f32 %v2028, %v2341
    %v2399 = vadd.f32 %v2033, %v2346
    %v2400 = vadd.f32 %v2038, %v2351
    %v2401 = vadd.f32 %v2135, %v2316
    %v2402 = vadd.f32 %v2140, %v2321
    %v2403 = vadd.f32 %v2145, %v2326
    %v2404 = vadd.f32 %v2150, %v2331
    %v2405 = vadd.f32 %v2155, %v2336
    %v2406 = vadd.f32 %v2160, %v2341
    %v2407 = vadd.f32 %v2165, %v2346
    %v2408 = vadd.f32 %v2170, %v2351
    %v2409 = vadd.f32 %v2267, %v2316
    %v2410 = vadd.f32 %v2272, %v2321
    %v2411 = vadd.f32 %v2277, %v2326
    %v2412 = vadd.f32 %v2282, %v2331
    %v2413 = vadd.f32 %v2287, %v2336
    %v2414 = vadd.f32 %v2292, %v2341
    %v2415 = vadd.f32 %v2297, %v2346
    %v2416 = vadd.f32 %v2302, %v2351
    %v2417 = vtanh.pop %v2353
    %v2418 = vtanh.pop %v2354
    %v2419 = vtanh.pop %v2355
    %v2420 = vtanh.pop %v2356
    %v2421 = vtanh.pop %v2357
    %v2422 = vtanh.pop %v2358
    %v2423 = vtanh.pop %v2359
    %v2424 = vtanh.pop %v2360
    %v2425 = vtanh.pop %v2361
    %v2426 = vtanh.pop %v2362
    %v2427 = vtanh.pop %v2363
    %v2428 = vtanh.pop %v2364
    %v2429 = vtanh.pop %v2365
    %v2430 = vtanh.pop %v2366
    %v2431 = vtanh.pop %v2367
    %v2432 = vtanh.pop %v2368
    %v2433 = vtanh.pop %v2369
    %v2434 = vtanh.pop %v2370
    %v2435 = vtanh.pop %v2371
    %v2436 = vtanh.pop %v2372
    %v2437 = vtanh.pop %v2373
    %v2438 = vtanh.pop %v2374
    %v2439 = vtanh.pop %v2375
    %v2440 = vtanh.pop %v2376
    %v2441 = vtanh.pop %v2377
    %v2442 = vtanh.pop %v2378
    %v2443 = vtanh.pop %v2379
    %v2444 = vtanh.pop %v2380
    %v2445 = vtanh.pop %v2381
    %v2446 = vtanh.pop %v2382
    %v2447 = vtanh.pop %v2383
    %v2448 = vtanh.pop %v2384
    %v2449 = vtanh.pop %v2385
    %v2450 = vtanh.pop %v2386
    %v2451 = vtanh.pop %v2387
    %v2452 = vtanh.pop %v2388
    %v2453 = vtanh.pop %v2389
    %v2454 = vtanh.pop %v2390
    %v2455 = vtanh.pop %v2391
    %v2456 = vtanh.pop %v2392
    %v2457 = vtanh.pop %v2393
    %v2458 = vtanh.pop %v2394
    %v2459 = vtanh.pop %v2395
    %v2460 = vtanh.pop %v2396
    %v2461 = vtanh.pop %v2397
    %v2462 = vtanh.pop %v2398
    %v2463 = vtanh.pop %v2399
    %v2464 = vtanh.pop %v2400
    %v2465 = vtanh.pop %v2401
    %v2466 = vtanh.pop %v2402
    %v2467 = vtanh.pop %v2403
    %v2468 = vtanh.pop %v2404
    %v2469 = vtanh.pop %v2405
    %v2470 = vtanh.pop %v2406
    %v2471 = vtanh.pop %v2407
    %v2472 = vtanh.pop %v2408
    %v2473 = vtanh.pop %v2409
    %v2474 = vtanh.pop %v2410
    %v2475 = vtanh.pop %v2411
    %v2476 = vtanh.pop %v2412
    %v2477 = vtanh.pop %v2413
    %v2478 = vtanh.pop %v2414
    %v2479 = vtanh.pop %v2415
    %v2480 = vtanh.pop %v2416
    %v2481 = vld [vmem:[%s5] sm:$0xff]
    %v2482 = vld [vmem:[%s5 + $0x8] sm:$0xff]
    %v2483 = vld [vmem:[%s5 + $0x10] sm:$0xff]
    %v2484 = vld [vmem:[%s5 + $0x18] sm:$0xff]
    %v2485 = vld [vmem:[%s5 + $0x20] sm:$0xff]
    %v2486 = vld [vmem:[%s5 + $0x28] sm:$0xff]
    %v2487 = vld [vmem:[%s5 + $0x30] sm:$0xff]
    %v2488 = vld [vmem:[%s5 + $0x38] sm:$0xff]
    %v2489 = vld [vmem:[%s6] sm:$0xff]
    %2491 = vset.pattern.permute.xlu0 0
    %2492 = vperm.xlu0 %2491, %v2489
    %v2493 = vpop.permute.xlu0 %2492
    %vm2495 = vcmask 261120
    %v2497 = vsel %vm2495, %v2481, 0
    %2499 = vmatprep.subr.mxu0 0.0
    %2500 = vmatpush1.msra.mxu0 0.0
    %2501 = vmatprep.subr.mxu0 0.0
    %2502 = vmatpush1.msra.mxu0 0.0
    %2503 = vmatprep.subr.mxu0 0.0
    %2504 = vmatpush1.msra.mxu0 0.0
    %2505 = vmatprep.subr.mxu0 0.0
    %2506 = vmatpush1.msra.mxu0 0.0
    %2507 = vmatprep.subr.mxu0 0.0
    %2508 = vmatpush1.msra.mxu0 0.0
    %2509 = vmatprep.subr.mxu0 0.0
    %2510 = vmatpush1.msra.mxu0 0.0
    %2511 = vmatprep.subr.mxu0 0.0
    %2512 = vmatpush1.msra.mxu0 0.0
    %2513 = vmatprep.subr.mxu0 0.0
    %2514 = vmatpush1.msra.mxu0 0.0
    %2515 = vmatprep.subr.mxu0 0.0
    %2516 = vmatpush1.msra.mxu0 0.0
    %2517 = vmatprep.subr.mxu0 0.0
    %2518 = vmatpush1.msra.mxu0 0.0
    %2519 = vmatprep.subr.mxu0 0.0
    %2520 = vmatpush1.msra.mxu0 0.0
    %2521 = vmatprep.subr.mxu0 0.0
    %2522 = vmatpush1.msra.mxu0 0.0
    %2523 = vmatprep.subr.mxu0 0.0
    %2524 = vmatpush1.msra.mxu0 %v2420
    %2525 = vmatprep.subr.mxu0 0.0
    %2526 = vmatpush1.msra.mxu0 %v2419
    %2527 = vmatprep.subr.mxu0 0.0
    %2528 = vmatpush1.msra.mxu0 %v2418
    %2529 = vmatprep.subr.mxu0 0.0
    %2530 = vmatpush1.msra.mxu0 %v2417
    %2531 = vmatprep.subr.mxu0 0.0
    %2532 = vmatpush2.msra.mxu0 0.0
    %2533 = vmatprep.subr.mxu0 0.0
    %2534 = vmatpush2.msra.mxu0 0.0
    %2535 = vmatprep.subr.mxu0 0.0
    %2536 = vmatpush2.msra.mxu0 0.0
    %2537 = vmatprep.subr.mxu0 0.0
    %2538 = vmatpush2.msra.mxu0 0.0
    %2539 = vmatprep.subr.mxu0 0.0
    %2540 = vmatpush2.msra.mxu0 0.0
    %2541 = vmatprep.subr.mxu0 0.0
    %2542 = vmatpush2.msra.mxu0 0.0
    %2543 = vmatprep.subr.mxu0 0.0
    %2544 = vmatpush2.msra.mxu0 0.0
    %2545 = vmatprep.subr.mxu0 0.0
    %2546 = vmatpush2.msra.mxu0 0.0
    %2547 = vmatprep.subr.mxu0 0.0
    %2548 = vmatpush2.msra.mxu0 0.0
    %2549 = vmatprep.subr.mxu0 0.0
    %2550 = vmatpush2.msra.mxu0 0.0
    %2551 = vmatprep.subr.mxu0 0.0
    %2552 = vmatpush2.msra.mxu0 0.0
    %2553 = vmatprep.subr.mxu0 0.0
    %2554 = vmatpush2.msra.mxu0 0.0
    %2555 = vmatprep.subr.mxu0 0.0
    %2556 = vmatpush2.msra.mxu0 0.0
    %2557 = vmatprep.subr.mxu0 0.0
    %2558 = vmatpush2.msra.mxu0 0.0
    %2559 = vmatprep.subr.mxu0 0.0
    %2560 = vmatpush2.msra.mxu0 0.0
    %2561 = vmatprep.subr.mxu0 0.0
    %2562 = vmatpush2.msra.mxu0 0.0
    %2563 = vmatprep.mubr.f32.mxu0 0.0
    %2564 = vmatmul.mubr.f32.gmra.mxu0 %v2497
    %v2565 = vpop.f32.mrf.mxu0
    %v2566 = vadd.f32 %v2493, %v2565
    %v2567 = vpop.f32.mrf.mxu0
    %2568 = vdwg.mxu0
    %v2570 = vsel %vm2495, %v2482, 0
    %2572 = vmatprep.subr.mxu0 0.0
    %2573 = vmatpush1.msra.mxu0 0.0
    %2574 = vmatprep.subr.mxu0 0.0
    %2575 = vmatpush1.msra.mxu0 0.0
    %2576 = vmatprep.subr.mxu0 0.0
    %2577 = vmatpush1.msra.mxu0 0.0
    %2578 = vmatprep.subr.mxu0 0.0
    %2579 = vmatpush1.msra.mxu0 0.0
    %2580 = vmatprep.subr.mxu0 0.0
    %2581 = vmatpush1.msra.mxu0 0.0
    %2582 = vmatprep.subr.mxu0 0.0
    %2583 = vmatpush1.msra.mxu0 0.0
    %2584 = vmatprep.subr.mxu0 0.0
    %2585 = vmatpush1.msra.mxu0 0.0
    %2586 = vmatprep.subr.mxu0 0.0
    %2587 = vmatpush1.msra.mxu0 0.0
    %2588 = vmatprep.subr.mxu0 0.0
    %2589 = vmatpush1.msra.mxu0 0.0
    %2590 = vmatprep.subr.mxu0 0.0
    %2591 = vmatpush1.msra.mxu0 0.0
    %2592 = vmatprep.subr.mxu0 0.0
    %2593 = vmatpush1.msra.mxu0 0.0
    %2594 = vmatprep.subr.mxu0 0.0
    %2595 = vmatpush1.msra.mxu0 0.0
    %2596 = vmatprep.subr.mxu0 0.0
    %2597 = vmatpush1.msra.mxu0 %v2428
    %2598 = vmatprep.subr.mxu0 0.0
    %2599 = vmatpush1.msra.mxu0 %v2427
    %2600 = vmatprep.subr.mxu0 0.0
    %2601 = vmatpush1.msra.mxu0 %v2426
    %2602 = vmatprep.subr.mxu0 0.0
    %2603 = vmatpush1.msra.mxu0 %v2425
    %2604 = vmatprep.subr.mxu0 0.0
    %2605 = vmatpush2.msra.mxu0 0.0
    %2606 = vmatprep.subr.mxu0 0.0
    %2607 = vmatpush2.msra.mxu0 0.0
    %2608 = vmatprep.subr.mxu0 0.0
    %2609 = vmatpush2.msra.mxu0 0.0
    %2610 = vmatprep.subr.mxu0 0.0
    %2611 = vmatpush2.msra.mxu0 0.0
    %2612 = vmatprep.subr.mxu0 0.0
    %2613 = vmatpush2.msra.mxu0 0.0
    %2614 = vmatprep.subr.mxu0 0.0
    %2615 = vmatpush2.msra.mxu0 0.0
    %2616 = vmatprep.subr.mxu0 0.0
    %2617 = vmatpush2.msra.mxu0 0.0
    %2618 = vmatprep.subr.mxu0 0.0
    %2619 = vmatpush2.msra.mxu0 0.0
    %2620 = vmatprep.subr.mxu0 0.0
    %2621 = vmatpush2.msra.mxu0 0.0
    %2622 = vmatprep.subr.mxu0 0.0
    %2623 = vmatpush2.msra.mxu0 0.0
    %2624 = vmatprep.subr.mxu0 0.0
    %2625 = vmatpush2.msra.mxu0 0.0
    %2626 = vmatprep.subr.mxu0 0.0
    %2627 = vmatpush2.msra.mxu0 0.0
    %2628 = vmatprep.subr.mxu0 0.0
    %2629 = vmatpush2.msra.mxu0 0.0
    %2630 = vmatprep.subr.mxu0 0.0
    %2631 = vmatpush2.msra.mxu0 0.0
    %2632 = vmatprep.subr.mxu0 0.0
    %2633 = vmatpush2.msra.mxu0 0.0
    %2634 = vmatprep.subr.mxu0 0.0
    %2635 = vmatpush2.msra.mxu0 0.0
    %2636 = vmatprep.mubr.f32.mxu0 0.0
    %2637 = vmatmul.mubr.f32.gmra.mxu0 %v2570
    %v2638 = vpop.f32.mrf.mxu0
    %v2639 = vadd.f32 %v2493, %v2638
    %v2640 = vpop.f32.mrf.mxu0
    %2641 = vdwg.mxu0
    %v2643 = vsel %vm2495, %v2483, 0
    %2645 = vmatprep.subr.mxu0 0.0
    %2646 = vmatpush1.msra.mxu0 0.0
    %2647 = vmatprep.subr.mxu0 0.0
    %2648 = vmatpush1.msra.mxu0 0.0
    %2649 = vmatprep.subr.mxu0 0.0
    %2650 = vmatpush1.msra.mxu0 0.0
    %2651 = vmatprep.subr.mxu0 0.0
    %2652 = vmatpush1.msra.mxu0 0.0
    %2653 = vmatprep.subr.mxu0 0.0
    %2654 = vmatpush1.msra.mxu0 0.0
    %2655 = vmatprep.subr.mxu0 0.0
    %2656 = vmatpush1.msra.mxu0 0.0
    %2657 = vmatprep.subr.mxu0 0.0
    %2658 = vmatpush1.msra.mxu0 0.0
    %2659 = vmatprep.subr.mxu0 0.0
    %2660 = vmatpush1.msra.mxu0 0.0
    %2661 = vmatprep.subr.mxu0 0.0
    %2662 = vmatpush1.msra.mxu0 0.0
    %2663 = vmatprep.subr.mxu0 0.0
    %2664 = vmatpush1.msra.mxu0 0.0
    %2665 = vmatprep.subr.mxu0 0.0
    %2666 = vmatpush1.msra.mxu0 0.0
    %2667 = vmatprep.subr.mxu0 0.0
    %2668 = vmatpush1.msra.mxu0 0.0
    %2669 = vmatprep.subr.mxu0 0.0
    %2670 = vmatpush1.msra.mxu0 %v2436
    %2671 = vmatprep.subr.mxu0 0.0
    %2672 = vmatpush1.msra.mxu0 %v2435
    %2673 = vmatprep.subr.mxu0 0.0
    %2674 = vmatpush1.msra.mxu0 %v2434
    %2675 = vmatprep.subr.mxu0 0.0
    %2676 = vmatpush1.msra.mxu0 %v2433
    %2677 = vmatprep.subr.mxu0 0.0
    %2678 = vmatpush2.msra.mxu0 0.0
    %2679 = vmatprep.subr.mxu0 0.0
    %2680 = vmatpush2.msra.mxu0 0.0
    %2681 = vmatprep.subr.mxu0 0.0
    %2682 = vmatpush2.msra.mxu0 0.0
    %2683 = vmatprep.subr.mxu0 0.0
    %2684 = vmatpush2.msra.mxu0 0.0
    %2685 = vmatprep.subr.mxu0 0.0
    %2686 = vmatpush2.msra.mxu0 0.0
    %2687 = vmatprep.subr.mxu0 0.0
    %2688 = vmatpush2.msra.mxu0 0.0
    %2689 = vmatprep.subr.mxu0 0.0
    %2690 = vmatpush2.msra.mxu0 0.0
    %2691 = vmatprep.subr.mxu0 0.0
    %2692 = vmatpush2.msra.mxu0 0.0
    %2693 = vmatprep.subr.mxu0 0.0
    %2694 = vmatpush2.msra.mxu0 0.0
    %2695 = vmatprep.subr.mxu0 0.0
    %2696 = vmatpush2.msra.mxu0 0.0
    %2697 = vmatprep.subr.mxu0 0.0
    %2698 = vmatpush2.msra.mxu0 0.0
    %2699 = vmatprep.subr.mxu0 0.0
    %2700 = vmatpush2.msra.mxu0 0.0
    %2701 = vmatprep.subr.mxu0 0.0
    %2702 = vmatpush2.msra.mxu0 0.0
    %2703 = vmatprep.subr.mxu0 0.0
    %2704 = vmatpush2.msra.mxu0 0.0
    %2705 = vmatprep.subr.mxu0 0.0
    %2706 = vmatpush2.msra.mxu0 0.0
    %2707 = vmatprep.subr.mxu0 0.0
    %2708 = vmatpush2.msra.mxu0 0.0
    %2709 = vmatprep.mubr.f32.mxu0 0.0
    %2710 = vmatmul.mubr.f32.gmra.mxu0 %v2643
    %v2711 = vpop.f32.mrf.mxu0
    %v2712 = vadd.f32 %v2493, %v2711
    %v2713 = vpop.f32.mrf.mxu0
    %2714 = vdwg.mxu0
    %v2716 = vsel %vm2495, %v2484, 0
    %2718 = vmatprep.subr.mxu0 0.0
    %2719 = vmatpush1.msra.mxu0 0.0
    %2720 = vmatprep.subr.mxu0 0.0
    %2721 = vmatpush1.msra.mxu0 0.0
    %2722 = vmatprep.subr.mxu0 0.0
    %2723 = vmatpush1.msra.mxu0 0.0
    %2724 = vmatprep.subr.mxu0 0.0
    %2725 = vmatpush1.msra.mxu0 0.0
    %2726 = vmatprep.subr.mxu0 0.0
    %2727 = vmatpush1.msra.mxu0 0.0
    %2728 = vmatprep.subr.mxu0 0.0
    %2729 = vmatpush1.msra.mxu0 0.0
    %2730 = vmatprep.subr.mxu0 0.0
    %2731 = vmatpush1.msra.mxu0 0.0
    %2732 = vmatprep.subr.mxu0 0.0
    %2733 = vmatpush1.msra.mxu0 0.0
    %2734 = vmatprep.subr.mxu0 0.0
    %2735 = vmatpush1.msra.mxu0 0.0
    %2736 = vmatprep.subr.mxu0 0.0
    %2737 = vmatpush1.msra.mxu0 0.0
    %2738 = vmatprep.subr.mxu0 0.0
    %2739 = vmatpush1.msra.mxu0 0.0
    %2740 = vmatprep.subr.mxu0 0.0
    %2741 = vmatpush1.msra.mxu0 0.0
    %2742 = vmatprep.subr.mxu0 0.0
    %2743 = vmatpush1.msra.mxu0 %v2444
    %2744 = vmatprep.subr.mxu0 0.0
    %2745 = vmatpush1.msra.mxu0 %v2443
    %2746 = vmatprep.subr.mxu0 0.0
    %2747 = vmatpush1.msra.mxu0 %v2442
    %2748 = vmatprep.subr.mxu0 0.0
    %2749 = vmatpush1.msra.mxu0 %v2441
    %2750 = vmatprep.subr.mxu0 0.0
    %2751 = vmatpush2.msra.mxu0 0.0
    %2752 = vmatprep.subr.mxu0 0.0
    %2753 = vmatpush2.msra.mxu0 0.0
    %2754 = vmatprep.subr.mxu0 0.0
    %2755 = vmatpush2.msra.mxu0 0.0
    %2756 = vmatprep.subr.mxu0 0.0
    %2757 = vmatpush2.msra.mxu0 0.0
    %2758 = vmatprep.subr.mxu0 0.0
    %2759 = vmatpush2.msra.mxu0 0.0
    %2760 = vmatprep.subr.mxu0 0.0
    %2761 = vmatpush2.msra.mxu0 0.0
    %2762 = vmatprep.subr.mxu0 0.0
    %2763 = vmatpush2.msra.mxu0 0.0
    %2764 = vmatprep.subr.mxu0 0.0
    %2765 = vmatpush2.msra.mxu0 0.0
    %2766 = vmatprep.subr.mxu0 0.0
    %2767 = vmatpush2.msra.mxu0 0.0
    %2768 = vmatprep.subr.mxu0 0.0
    %2769 = vmatpush2.msra.mxu0 0.0
    %2770 = vmatprep.subr.mxu0 0.0
    %2771 = vmatpush2.msra.mxu0 0.0
    %2772 = vmatprep.subr.mxu0 0.0
    %2773 = vmatpush2.msra.mxu0 0.0
    %2774 = vmatprep.subr.mxu0 0.0
    %2775 = vmatpush2.msra.mxu0 0.0
    %2776 = vmatprep.subr.mxu0 0.0
    %2777 = vmatpush2.msra.mxu0 0.0
    %2778 = vmatprep.subr.mxu0 0.0
    %2779 = vmatpush2.msra.mxu0 0.0
    %2780 = vmatprep.subr.mxu0 0.0
    %2781 = vmatpush2.msra.mxu0 0.0
    %2782 = vmatprep.mubr.f32.mxu0 0.0
    %2783 = vmatmul.mubr.f32.gmra.mxu0 %v2716
    %v2784 = vpop.f32.mrf.mxu0
    %v2785 = vadd.f32 %v2493, %v2784
    %v2786 = vpop.f32.mrf.mxu0
    %2787 = vdwg.mxu0
    %v2789 = vsel %vm2495, %v2485, 0
    %2791 = vmatprep.subr.mxu0 0.0
    %2792 = vmatpush1.msra.mxu0 0.0
    %2793 = vmatprep.subr.mxu0 0.0
    %2794 = vmatpush1.msra.mxu0 0.0
    %2795 = vmatprep.subr.mxu0 0.0
    %2796 = vmatpush1.msra.mxu0 0.0
    %2797 = vmatprep.subr.mxu0 0.0
    %2798 = vmatpush1.msra.mxu0 0.0
    %2799 = vmatprep.subr.mxu0 0.0
    %2800 = vmatpush1.msra.mxu0 0.0
    %2801 = vmatprep.subr.mxu0 0.0
    %2802 = vmatpush1.msra.mxu0 0.0
    %2803 = vmatprep.subr.mxu0 0.0
    %2804 = vmatpush1.msra.mxu0 0.0
    %2805 = vmatprep.subr.mxu0 0.0
    %2806 = vmatpush1.msra.mxu0 0.0
    %2807 = vmatprep.subr.mxu0 0.0
    %2808 = vmatpush1.msra.mxu0 0.0
    %2809 = vmatprep.subr.mxu0 0.0
    %2810 = vmatpush1.msra.mxu0 0.0
    %2811 = vmatprep.subr.mxu0 0.0
    %2812 = vmatpush1.msra.mxu0 0.0
    %2813 = vmatprep.subr.mxu0 0.0
    %2814 = vmatpush1.msra.mxu0 0.0
    %2815 = vmatprep.subr.mxu0 0.0
    %2816 = vmatpush1.msra.mxu0 %v2452
    %2817 = vmatprep.subr.mxu0 0.0
    %2818 = vmatpush1.msra.mxu0 %v2451
    %2819 = vmatprep.subr.mxu0 0.0
    %2820 = vmatpush1.msra.mxu0 %v2450
    %2821 = vmatprep.subr.mxu0 0.0
    %2822 = vmatpush1.msra.mxu0 %v2449
    %2823 = vmatprep.subr.mxu0 0.0
    %2824 = vmatpush2.msra.mxu0 0.0
    %2825 = vmatprep.subr.mxu0 0.0
    %2826 = vmatpush2.msra.mxu0 0.0
    %2827 = vmatprep.subr.mxu0 0.0
    %2828 = vmatpush2.msra.mxu0 0.0
    %2829 = vmatprep.subr.mxu0 0.0
    %2830 = vmatpush2.msra.mxu0 0.0
    %2831 = vmatprep.subr.mxu0 0.0
    %2832 = vmatpush2.msra.mxu0 0.0
    %2833 = vmatprep.subr.mxu0 0.0
    %2834 = vmatpush2.msra.mxu0 0.0
    %2835 = vmatprep.subr.mxu0 0.0
    %2836 = vmatpush2.msra.mxu0 0.0
    %2837 = vmatprep.subr.mxu0 0.0
    %2838 = vmatpush2.msra.mxu0 0.0
    %2839 = vmatprep.subr.mxu0 0.0
    %2840 = vmatpush2.msra.mxu0 0.0
    %2841 = vmatprep.subr.mxu0 0.0
    %2842 = vmatpush2.msra.mxu0 0.0
    %2843 = vmatprep.subr.mxu0 0.0
    %2844 = vmatpush2.msra.mxu0 0.0
    %2845 = vmatprep.subr.mxu0 0.0
    %2846 = vmatpush2.msra.mxu0 0.0
    %2847 = vmatprep.subr.mxu0 0.0
    %2848 = vmatpush2.msra.mxu0 0.0
    %2849 = vmatprep.subr.mxu0 0.0
    %2850 = vmatpush2.msra.mxu0 0.0
    %2851 = vmatprep.subr.mxu0 0.0
    %2852 = vmatpush2.msra.mxu0 0.0
    %2853 = vmatprep.subr.mxu0 0.0
    %2854 = vmatpush2.msra.mxu0 0.0
    %2855 = vmatprep.mubr.f32.mxu0 0.0
    %2856 = vmatmul.mubr.f32.gmra.mxu0 %v2789
    %v2857 = vpop.f32.mrf.mxu0
    %v2858 = vadd.f32 %v2493, %v2857
    %v2859 = vpop.f32.mrf.mxu0
    %2860 = vdwg.mxu0
    %v2862 = vsel %vm2495, %v2486, 0
    %2864 = vmatprep.subr.mxu0 0.0
    %2865 = vmatpush1.msra.mxu0 0.0
    %2866 = vmatprep.subr.mxu0 0.0
    %2867 = vmatpush1.msra.mxu0 0.0
    %2868 = vmatprep.subr.mxu0 0.0
    %2869 = vmatpush1.msra.mxu0 0.0
    %2870 = vmatprep.subr.mxu0 0.0
    %2871 = vmatpush1.msra.mxu0 0.0
    %2872 = vmatprep.subr.mxu0 0.0
    %2873 = vmatpush1.msra.mxu0 0.0
    %2874 = vmatprep.subr.mxu0 0.0
    %2875 = vmatpush1.msra.mxu0 0.0
    %2876 = vmatprep.subr.mxu0 0.0
    %2877 = vmatpush1.msra.mxu0 0.0
    %2878 = vmatprep.subr.mxu0 0.0
    %2879 = vmatpush1.msra.mxu0 0.0
    %2880 = vmatprep.subr.mxu0 0.0
    %2881 = vmatpush1.msra.mxu0 0.0
    %2882 = vmatprep.subr.mxu0 0.0
    %2883 = vmatpush1.msra.mxu0 0.0
    %2884 = vmatprep.subr.mxu0 0.0
    %2885 = vmatpush1.msra.mxu0 0.0
    %2886 = vmatprep.subr.mxu0 0.0
    %2887 = vmatpush1.msra.mxu0 0.0
    %2888 = vmatprep.subr.mxu0 0.0
    %2889 = vmatpush1.msra.mxu0 %v2460
    %2890 = vmatprep.subr.mxu0 0.0
    %2891 = vmatpush1.msra.mxu0 %v2459
    %2892 = vmatprep.subr.mxu0 0.0
    %2893 = vmatpush1.msra.mxu0 %v2458
    %2894 = vmatprep.subr.mxu0 0.0
    %2895 = vmatpush1.msra.mxu0 %v2457
    %2896 = vmatprep.subr.mxu0 0.0
    %2897 = vmatpush2.msra.mxu0 0.0
    %2898 = vmatprep.subr.mxu0 0.0
    %2899 = vmatpush2.msra.mxu0 0.0
    %2900 = vmatprep.subr.mxu0 0.0
    %2901 = vmatpush2.msra.mxu0 0.0
    %2902 = vmatprep.subr.mxu0 0.0
    %2903 = vmatpush2.msra.mxu0 0.0
    %2904 = vmatprep.subr.mxu0 0.0
    %2905 = vmatpush2.msra.mxu0 0.0
    %2906 = vmatprep.subr.mxu0 0.0
    %2907 = vmatpush2.msra.mxu0 0.0
    %2908 = vmatprep.subr.mxu0 0.0
    %2909 = vmatpush2.msra.mxu0 0.0
    %2910 = vmatprep.subr.mxu0 0.0
    %2911 = vmatpush2.msra.mxu0 0.0
    %2912 = vmatprep.subr.mxu0 0.0
    %2913 = vmatpush2.msra.mxu0 0.0
    %2914 = vmatprep.subr.mxu0 0.0
    %2915 = vmatpush2.msra.mxu0 0.0
    %2916 = vmatprep.subr.mxu0 0.0
    %2917 = vmatpush2.msra.mxu0 0.0
    %2918 = vmatprep.subr.mxu0 0.0
    %2919 = vmatpush2.msra.mxu0 0.0
    %2920 = vmatprep.subr.mxu0 0.0
    %2921 = vmatpush2.msra.mxu0 0.0
    %2922 = vmatprep.subr.mxu0 0.0
    %2923 = vmatpush2.msra.mxu0 0.0
    %2924 = vmatprep.subr.mxu0 0.0
    %2925 = vmatpush2.msra.mxu0 0.0
    %2926 = vmatprep.subr.mxu0 0.0
    %2927 = vmatpush2.msra.mxu0 0.0
    %2928 = vmatprep.mubr.f32.mxu0 0.0
    %2929 = vmatmul.mubr.f32.gmra.mxu0 %v2862
    %v2930 = vpop.f32.mrf.mxu0
    %v2931 = vadd.f32 %v2493, %v2930
    %v2932 = vpop.f32.mrf.mxu0
    %2933 = vdwg.mxu0
    %v2935 = vsel %vm2495, %v2487, 0
    %2937 = vmatprep.subr.mxu0 0.0
    %2938 = vmatpush1.msra.mxu0 0.0
    %2939 = vmatprep.subr.mxu0 0.0
    %2940 = vmatpush1.msra.mxu0 0.0
    %2941 = vmatprep.subr.mxu0 0.0
    %2942 = vmatpush1.msra.mxu0 0.0
    %2943 = vmatprep.subr.mxu0 0.0
    %2944 = vmatpush1.msra.mxu0 0.0
    %2945 = vmatprep.subr.mxu0 0.0
    %2946 = vmatpush1.msra.mxu0 0.0
    %2947 = vmatprep.subr.mxu0 0.0
    %2948 = vmatpush1.msra.mxu0 0.0
    %2949 = vmatprep.subr.mxu0 0.0
    %2950 = vmatpush1.msra.mxu0 0.0
    %2951 = vmatprep.subr.mxu0 0.0
    %2952 = vmatpush1.msra.mxu0 0.0
    %2953 = vmatprep.subr.mxu0 0.0
    %2954 = vmatpush1.msra.mxu0 0.0
    %2955 = vmatprep.subr.mxu0 0.0
    %2956 = vmatpush1.msra.mxu0 0.0
    %2957 = vmatprep.subr.mxu0 0.0
    %2958 = vmatpush1.msra.mxu0 0.0
    %2959 = vmatprep.subr.mxu0 0.0
    %2960 = vmatpush1.msra.mxu0 0.0
    %2961 = vmatprep.subr.mxu0 0.0
    %2962 = vmatpush1.msra.mxu0 %v2468
    %2963 = vmatprep.subr.mxu0 0.0
    %2964 = vmatpush1.msra.mxu0 %v2467
    %2965 = vmatprep.subr.mxu0 0.0
    %2966 = vmatpush1.msra.mxu0 %v2466
    %2967 = vmatprep.subr.mxu0 0.0
    %2968 = vmatpush1.msra.mxu0 %v2465
    %2969 = vmatprep.subr.mxu0 0.0
    %2970 = vmatpush2.msra.mxu0 0.0
    %2971 = vmatprep.subr.mxu0 0.0
    %2972 = vmatpush2.msra.mxu0 0.0
    %2973 = vmatprep.subr.mxu0 0.0
    %2974 = vmatpush2.msra.mxu0 0.0
    %2975 = vmatprep.subr.mxu0 0.0
    %2976 = vmatpush2.msra.mxu0 0.0
    %2977 = vmatprep.subr.mxu0 0.0
    %2978 = vmatpush2.msra.mxu0 0.0
    %2979 = vmatprep.subr.mxu0 0.0
    %2980 = vmatpush2.msra.mxu0 0.0
    %2981 = vmatprep.subr.mxu0 0.0
    %2982 = vmatpush2.msra.mxu0 0.0
    %2983 = vmatprep.subr.mxu0 0.0
    %2984 = vmatpush2.msra.mxu0 0.0
    %2985 = vmatprep.subr.mxu0 0.0
    %2986 = vmatpush2.msra.mxu0 0.0
    %2987 = vmatprep.subr.mxu0 0.0
    %2988 = vmatpush2.msra.mxu0 0.0
    %2989 = vmatprep.subr.mxu0 0.0
    %2990 = vmatpush2.msra.mxu0 0.0
    %2991 = vmatprep.subr.mxu0 0.0
    %2992 = vmatpush2.msra.mxu0 0.0
    %2993 = vmatprep.subr.mxu0 0.0
    %2994 = vmatpush2.msra.mxu0 0.0
    %2995 = vmatprep.subr.mxu0 0.0
    %2996 = vmatpush2.msra.mxu0 0.0
    %2997 = vmatprep.subr.mxu0 0.0
    %2998 = vmatpush2.msra.mxu0 0.0
    %2999 = vmatprep.subr.mxu0 0.0
    %3000 = vmatpush2.msra.mxu0 0.0
    %3001 = vmatprep.mubr.f32.mxu0 0.0
    %3002 = vmatmul.mubr.f32.gmra.mxu0 %v2935
    %v3003 = vpop.f32.mrf.mxu0
    %v3004 = vadd.f32 %v2493, %v3003
    %v3005 = vpop.f32.mrf.mxu0
    %3006 = vdwg.mxu0
    %v3008 = vsel %vm2495, %v2488, 0
    %3010 = vmatprep.subr.mxu0 0.0
    %3011 = vmatpush1.msra.mxu0 0.0
    %3012 = vmatprep.subr.mxu0 0.0
    %3013 = vmatpush1.msra.mxu0 0.0
    %3014 = vmatprep.subr.mxu0 0.0
    %3015 = vmatpush1.msra.mxu0 0.0
    %3016 = vmatprep.subr.mxu0 0.0
    %3017 = vmatpush1.msra.mxu0 0.0
    %3018 = vmatprep.subr.mxu0 0.0
    %3019 = vmatpush1.msra.mxu0 0.0
    %3020 = vmatprep.subr.mxu0 0.0
    %3021 = vmatpush1.msra.mxu0 0.0
    %3022 = vmatprep.subr.mxu0 0.0
    %3023 = vmatpush1.msra.mxu0 0.0
    %3024 = vmatprep.subr.mxu0 0.0
    %3025 = vmatpush1.msra.mxu0 0.0
    %3026 = vmatprep.subr.mxu0 0.0
    %3027 = vmatpush1.msra.mxu0 0.0
    %3028 = vmatprep.subr.mxu0 0.0
    %3029 = vmatpush1.msra.mxu0 0.0
    %3030 = vmatprep.subr.mxu0 0.0
    %3031 = vmatpush1.msra.mxu0 0.0
    %3032 = vmatprep.subr.mxu0 0.0
    %3033 = vmatpush1.msra.mxu0 0.0
    %3034 = vmatprep.subr.mxu0 0.0
    %3035 = vmatpush1.msra.mxu0 %v2476
    %3036 = vmatprep.subr.mxu0 0.0
    %3037 = vmatpush1.msra.mxu0 %v2475
    %3038 = vmatprep.subr.mxu0 0.0
    %3039 = vmatpush1.msra.mxu0 %v2474
    %3040 = vmatprep.subr.mxu0 0.0
    %3041 = vmatpush1.msra.mxu0 %v2473
    %3042 = vmatprep.subr.mxu0 0.0
    %3043 = vmatpush2.msra.mxu0 0.0
    %3044 = vmatprep.subr.mxu0 0.0
    %3045 = vmatpush2.msra.mxu0 0.0
    %3046 = vmatprep.subr.mxu0 0.0
    %3047 = vmatpush2.msra.mxu0 0.0
    %3048 = vmatprep.subr.mxu0 0.0
    %3049 = vmatpush2.msra.mxu0 0.0
    %3050 = vmatprep.subr.mxu0 0.0
    %3051 = vmatpush2.msra.mxu0 0.0
    %3052 = vmatprep.subr.mxu0 0.0
    %3053 = vmatpush2.msra.mxu0 0.0
    %3054 = vmatprep.subr.mxu0 0.0
    %3055 = vmatpush2.msra.mxu0 0.0
    %3056 = vmatprep.subr.mxu0 0.0
    %3057 = vmatpush2.msra.mxu0 0.0
    %3058 = vmatprep.subr.mxu0 0.0
    %3059 = vmatpush2.msra.mxu0 0.0
    %3060 = vmatprep.subr.mxu0 0.0
    %3061 = vmatpush2.msra.mxu0 0.0
    %3062 = vmatprep.subr.mxu0 0.0
    %3063 = vmatpush2.msra.mxu0 0.0
    %3064 = vmatprep.subr.mxu0 0.0
    %3065 = vmatpush2.msra.mxu0 0.0
    %3066 = vmatprep.subr.mxu0 0.0
    %3067 = vmatpush2.msra.mxu0 0.0
    %3068 = vmatprep.subr.mxu0 0.0
    %3069 = vmatpush2.msra.mxu0 0.0
    %3070 = vmatprep.subr.mxu0 0.0
    %3071 = vmatpush2.msra.mxu0 0.0
    %3072 = vmatprep.subr.mxu0 0.0
    %3073 = vmatpush2.msra.mxu0 0.0
    %3074 = vmatprep.mubr.f32.mxu0 0.0
    %3075 = vmatmul.mubr.f32.gmra.mxu0 %v3008
    %v3076 = vpop.f32.mrf.mxu0
    %v3077 = vadd.f32 %v2493, %v3076
    %v3078 = vpop.f32.mrf.mxu0
    %3079 = vdwg.mxu0
    %v3080 = vld [vmem:[%s7] sm:$0x7]
    %v3081 = vld [vmem:[%s7 + $0x4] sm:$0x7]
    %v3082 = vld [vmem:[%s7 + $0x8] sm:$0x7]
    %v3083 = vld [vmem:[%s7 + $0xc] sm:$0x7]
    %v3084 = vld [vmem:[%s7 + $0x10] sm:$0x7]
    %v3085 = vld [vmem:[%s7 + $0x14] sm:$0x7]
    %v3086 = vld [vmem:[%s7 + $0x18] sm:$0x7]
    %v3087 = vld [vmem:[%s7 + $0x1c] sm:$0x7]
    %v3088 = vld [vmem:[%s8] sm:$0x7]
    %3090 = vset.pattern.permute.xlu0 0
    %3091 = vperm.xlu0 %3090, %v3088
    %v3092 = vpop.permute.xlu0 %3091
    %v3095 = vsel %vm2495, %v3080, 0
    %3097 = vmatprep.subr.mxu0 0.0
    %3098 = vmatpush1.msra.mxu0 0.0
    %3099 = vmatprep.subr.mxu0 0.0
    %3100 = vmatpush1.msra.mxu0 0.0
    %3101 = vmatprep.subr.mxu0 0.0
    %3102 = vmatpush1.msra.mxu0 0.0
    %3103 = vmatprep.subr.mxu0 0.0
    %3104 = vmatpush1.msra.mxu0 0.0
    %3105 = vmatprep.subr.mxu0 0.0
    %3106 = vmatpush1.msra.mxu0 0.0
    %3107 = vmatprep.subr.mxu0 0.0
    %3108 = vmatpush1.msra.mxu0 0.0
    %3109 = vmatprep.subr.mxu0 0.0
    %3110 = vmatpush1.msra.mxu0 0.0
    %3111 = vmatprep.subr.mxu0 0.0
    %3112 = vmatpush1.msra.mxu0 0.0
    %3113 = vmatprep.subr.mxu0 0.0
    %3114 = vmatpush1.msra.mxu0 0.0
    %3115 = vmatprep.subr.mxu0 0.0
    %3116 = vmatpush1.msra.mxu0 0.0
    %3117 = vmatprep.subr.mxu0 0.0
    %3118 = vmatpush1.msra.mxu0 0.0
    %3119 = vmatprep.subr.mxu0 0.0
    %3120 = vmatpush1.msra.mxu0 0.0
    %3121 = vmatprep.subr.mxu0 0.0
    %3122 = vmatpush1.msra.mxu0 %v2424
    %3123 = vmatprep.subr.mxu0 0.0
    %3124 = vmatpush1.msra.mxu0 %v2423
    %3125 = vmatprep.subr.mxu0 0.0
    %3126 = vmatpush1.msra.mxu0 %v2422
    %3127 = vmatprep.subr.mxu0 0.0
    %3128 = vmatpush1.msra.mxu0 %v2421
    %3129 = vmatprep.subr.mxu0 0.0
    %3130 = vmatpush2.msra.mxu0 0.0
    %3131 = vmatprep.subr.mxu0 0.0
    %3132 = vmatpush2.msra.mxu0 0.0
    %3133 = vmatprep.subr.mxu0 0.0
    %3134 = vmatpush2.msra.mxu0 0.0
    %3135 = vmatprep.subr.mxu0 0.0
    %3136 = vmatpush2.msra.mxu0 0.0
    %3137 = vmatprep.subr.mxu0 0.0
    %3138 = vmatpush2.msra.mxu0 0.0
    %3139 = vmatprep.subr.mxu0 0.0
    %3140 = vmatpush2.msra.mxu0 0.0
    %3141 = vmatprep.subr.mxu0 0.0
    %3142 = vmatpush2.msra.mxu0 0.0
    %3143 = vmatprep.subr.mxu0 0.0
    %3144 = vmatpush2.msra.mxu0 0.0
    %3145 = vmatprep.subr.mxu0 0.0
    %3146 = vmatpush2.msra.mxu0 0.0
    %3147 = vmatprep.subr.mxu0 0.0
    %3148 = vmatpush2.msra.mxu0 0.0
    %3149 = vmatprep.subr.mxu0 0.0
    %3150 = vmatpush2.msra.mxu0 0.0
    %3151 = vmatprep.subr.mxu0 0.0
    %3152 = vmatpush2.msra.mxu0 0.0
    %3153 = vmatprep.subr.mxu0 0.0
    %3154 = vmatpush2.msra.mxu0 0.0
    %3155 = vmatprep.subr.mxu0 0.0
    %3156 = vmatpush2.msra.mxu0 0.0
    %3157 = vmatprep.subr.mxu0 0.0
    %3158 = vmatpush2.msra.mxu0 0.0
    %3159 = vmatprep.subr.mxu0 0.0
    %3160 = vmatpush2.msra.mxu0 0.0
    %3161 = vmatprep.mubr.f32.mxu0 0.0
    %3162 = vmatmul.mubr.f32.gmra.mxu0 %v3095
    %v3163 = vpop.f32.mrf.mxu0
    %v3164 = vadd.f32 %v3092, %v3163
    %v3165 = vpop.f32.mrf.mxu0
    %3166 = vdwg.mxu0
    %v3168 = vsel %vm2495, %v3081, 0
    %3170 = vmatprep.subr.mxu0 0.0
    %3171 = vmatpush1.msra.mxu0 0.0
    %3172 = vmatprep.subr.mxu0 0.0
    %3173 = vmatpush1.msra.mxu0 0.0
    %3174 = vmatprep.subr.mxu0 0.0
    %3175 = vmatpush1.msra.mxu0 0.0
    %3176 = vmatprep.subr.mxu0 0.0
    %3177 = vmatpush1.msra.mxu0 0.0
    %3178 = vmatprep.subr.mxu0 0.0
    %3179 = vmatpush1.msra.mxu0 0.0
    %3180 = vmatprep.subr.mxu0 0.0
    %3181 = vmatpush1.msra.mxu0 0.0
    %3182 = vmatprep.subr.mxu0 0.0
    %3183 = vmatpush1.msra.mxu0 0.0
    %3184 = vmatprep.subr.mxu0 0.0
    %3185 = vmatpush1.msra.mxu0 0.0
    %3186 = vmatprep.subr.mxu0 0.0
    %3187 = vmatpush1.msra.mxu0 0.0
    %3188 = vmatprep.subr.mxu0 0.0
    %3189 = vmatpush1.msra.mxu0 0.0
    %3190 = vmatprep.subr.mxu0 0.0
    %3191 = vmatpush1.msra.mxu0 0.0
    %3192 = vmatprep.subr.mxu0 0.0
    %3193 = vmatpush1.msra.mxu0 0.0
    %3194 = vmatprep.subr.mxu0 0.0
    %3195 = vmatpush1.msra.mxu0 %v2432
    %3196 = vmatprep.subr.mxu0 0.0
    %3197 = vmatpush1.msra.mxu0 %v2431
    %3198 = vmatprep.subr.mxu0 0.0
    %3199 = vmatpush1.msra.mxu0 %v2430
    %3200 = vmatprep.subr.mxu0 0.0
    %3201 = vmatpush1.msra.mxu0 %v2429
    %3202 = vmatprep.subr.mxu0 0.0
    %3203 = vmatpush2.msra.mxu0 0.0
    %3204 = vmatprep.subr.mxu0 0.0
    %3205 = vmatpush2.msra.mxu0 0.0
    %3206 = vmatprep.subr.mxu0 0.0
    %3207 = vmatpush2.msra.mxu0 0.0
    %3208 = vmatprep.subr.mxu0 0.0
    %3209 = vmatpush2.msra.mxu0 0.0
    %3210 = vmatprep.subr.mxu0 0.0
    %3211 = vmatpush2.msra.mxu0 0.0
    %3212 = vmatprep.subr.mxu0 0.0
    %3213 = vmatpush2.msra.mxu0 0.0
    %3214 = vmatprep.subr.mxu0 0.0
    %3215 = vmatpush2.msra.mxu0 0.0
    %3216 = vmatprep.subr.mxu0 0.0
    %3217 = vmatpush2.msra.mxu0 0.0
    %3218 = vmatprep.subr.mxu0 0.0
    %3219 = vmatpush2.msra.mxu0 0.0
    %3220 = vmatprep.subr.mxu0 0.0
    %3221 = vmatpush2.msra.mxu0 0.0
    %3222 = vmatprep.subr.mxu0 0.0
    %3223 = vmatpush2.msra.mxu0 0.0
    %3224 = vmatprep.subr.mxu0 0.0
    %3225 = vmatpush2.msra.mxu0 0.0
    %3226 = vmatprep.subr.mxu0 0.0
    %3227 = vmatpush2.msra.mxu0 0.0
    %3228 = vmatprep.subr.mxu0 0.0
    %3229 = vmatpush2.msra.mxu0 0.0
    %3230 = vmatprep.subr.mxu0 0.0
    %3231 = vmatpush2.msra.mxu0 0.0
    %3232 = vmatprep.subr.mxu0 0.0
    %3233 = vmatpush2.msra.mxu0 0.0
    %3234 = vmatprep.mubr.f32.mxu0 0.0
    %3235 = vmatmul.mubr.f32.gmra.mxu0 %v3168
    %v3236 = vpop.f32.mrf.mxu0
    %v3237 = vadd.f32 %v3092, %v3236
    %v3238 = vpop.f32.mrf.mxu0
    %3239 = vdwg.mxu0
    %v3241 = vsel %vm2495, %v3082, 0
    %3243 = vmatprep.subr.mxu0 0.0
    %3244 = vmatpush1.msra.mxu0 0.0
    %3245 = vmatprep.subr.mxu0 0.0
    %3246 = vmatpush1.msra.mxu0 0.0
    %3247 = vmatprep.subr.mxu0 0.0
    %3248 = vmatpush1.msra.mxu0 0.0
    %3249 = vmatprep.subr.mxu0 0.0
    %3250 = vmatpush1.msra.mxu0 0.0
    %3251 = vmatprep.subr.mxu0 0.0
    %3252 = vmatpush1.msra.mxu0 0.0
    %3253 = vmatprep.subr.mxu0 0.0
    %3254 = vmatpush1.msra.mxu0 0.0
    %3255 = vmatprep.subr.mxu0 0.0
    %3256 = vmatpush1.msra.mxu0 0.0
    %3257 = vmatprep.subr.mxu0 0.0
    %3258 = vmatpush1.msra.mxu0 0.0
    %3259 = vmatprep.subr.mxu0 0.0
    %3260 = vmatpush1.msra.mxu0 0.0
    %3261 = vmatprep.subr.mxu0 0.0
    %3262 = vmatpush1.msra.mxu0 0.0
    %3263 = vmatprep.subr.mxu0 0.0
    %3264 = vmatpush1.msra.mxu0 0.0
    %3265 = vmatprep.subr.mxu0 0.0
    %3266 = vmatpush1.msra.mxu0 0.0
    %3267 = vmatprep.subr.mxu0 0.0
    %3268 = vmatpush1.msra.mxu0 %v2440
    %3269 = vmatprep.subr.mxu0 0.0
    %3270 = vmatpush1.msra.mxu0 %v2439
    %3271 = vmatprep.subr.mxu0 0.0
    %3272 = vmatpush1.msra.mxu0 %v2438
    %3273 = vmatprep.subr.mxu0 0.0
    %3274 = vmatpush1.msra.mxu0 %v2437
    %3275 = vmatprep.subr.mxu0 0.0
    %3276 = vmatpush2.msra.mxu0 0.0
    %3277 = vmatprep.subr.mxu0 0.0
    %3278 = vmatpush2.msra.mxu0 0.0
    %3279 = vmatprep.subr.mxu0 0.0
    %3280 = vmatpush2.msra.mxu0 0.0
    %3281 = vmatprep.subr.mxu0 0.0
    %3282 = vmatpush2.msra.mxu0 0.0
    %3283 = vmatprep.subr.mxu0 0.0
    %3284 = vmatpush2.msra.mxu0 0.0
    %3285 = vmatprep.subr.mxu0 0.0
    %3286 = vmatpush2.msra.mxu0 0.0
    %3287 = vmatprep.subr.mxu0 0.0
    %3288 = vmatpush2.msra.mxu0 0.0
    %3289 = vmatprep.subr.mxu0 0.0
    %3290 = vmatpush2.msra.mxu0 0.0
    %3291 = vmatprep.subr.mxu0 0.0
    %3292 = vmatpush2.msra.mxu0 0.0
    %3293 = vmatprep.subr.mxu0 0.0
    %3294 = vmatpush2.msra.mxu0 0.0
    %3295 = vmatprep.subr.mxu0 0.0
    %3296 = vmatpush2.msra.mxu0 0.0
    %3297 = vmatprep.subr.mxu0 0.0
    %3298 = vmatpush2.msra.mxu0 0.0
    %3299 = vmatprep.subr.mxu0 0.0
    %3300 = vmatpush2.msra.mxu0 0.0
    %3301 = vmatprep.subr.mxu0 0.0
    %3302 = vmatpush2.msra.mxu0 0.0
    %3303 = vmatprep.subr.mxu0 0.0
    %3304 = vmatpush2.msra.mxu0 0.0
    %3305 = vmatprep.subr.mxu0 0.0
    %3306 = vmatpush2.msra.mxu0 0.0
    %3307 = vmatprep.mubr.f32.mxu0 0.0
    %3308 = vmatmul.mubr.f32.gmra.mxu0 %v3241
    %v3309 = vpop.f32.mrf.mxu0
    %v3310 = vadd.f32 %v3092, %v3309
    %v3311 = vpop.f32.mrf.mxu0
    %3312 = vdwg.mxu0
    %v3314 = vsel %vm2495, %v3083, 0
    %3316 = vmatprep.subr.mxu0 0.0
    %3317 = vmatpush1.msra.mxu0 0.0
    %3318 = vmatprep.subr.mxu0 0.0
    %3319 = vmatpush1.msra.mxu0 0.0
    %3320 = vmatprep.subr.mxu0 0.0
    %3321 = vmatpush1.msra.mxu0 0.0
    %3322 = vmatprep.subr.mxu0 0.0
    %3323 = vmatpush1.msra.mxu0 0.0
    %3324 = vmatprep.subr.mxu0 0.0
    %3325 = vmatpush1.msra.mxu0 0.0
    %3326 = vmatprep.subr.mxu0 0.0
    %3327 = vmatpush1.msra.mxu0 0.0
    %3328 = vmatprep.subr.mxu0 0.0
    %3329 = vmatpush1.msra.mxu0 0.0
    %3330 = vmatprep.subr.mxu0 0.0
    %3331 = vmatpush1.msra.mxu0 0.0
    %3332 = vmatprep.subr.mxu0 0.0
    %3333 = vmatpush1.msra.mxu0 0.0
    %3334 = vmatprep.subr.mxu0 0.0
    %3335 = vmatpush1.msra.mxu0 0.0
    %3336 = vmatprep.subr.mxu0 0.0
    %3337 = vmatpush1.msra.mxu0 0.0
    %3338 = vmatprep.subr.mxu0 0.0
    %3339 = vmatpush1.msra.mxu0 0.0
    %3340 = vmatprep.subr.mxu0 0.0
    %3341 = vmatpush1.msra.mxu0 %v2448
    %3342 = vmatprep.subr.mxu0 0.0
    %3343 = vmatpush1.msra.mxu0 %v2447
    %3344 = vmatprep.subr.mxu0 0.0
    %3345 = vmatpush1.msra.mxu0 %v2446
    %3346 = vmatprep.subr.mxu0 0.0
    %3347 = vmatpush1.msra.mxu0 %v2445
    %3348 = vmatprep.subr.mxu0 0.0
    %3349 = vmatpush2.msra.mxu0 0.0
    %3350 = vmatprep.subr.mxu0 0.0
    %3351 = vmatpush2.msra.mxu0 0.0
    %3352 = vmatprep.subr.mxu0 0.0
    %3353 = vmatpush2.msra.mxu0 0.0
    %3354 = vmatprep.subr.mxu0 0.0
    %3355 = vmatpush2.msra.mxu0 0.0
    %3356 = vmatprep.subr.mxu0 0.0
    %3357 = vmatpush2.msra.mxu0 0.0
    %3358 = vmatprep.subr.mxu0 0.0
    %3359 = vmatpush2.msra.mxu0 0.0
    %3360 = vmatprep.subr.mxu0 0.0
    %3361 = vmatpush2.msra.mxu0 0.0
    %3362 = vmatprep.subr.mxu0 0.0
    %3363 = vmatpush2.msra.mxu0 0.0
    %3364 = vmatprep.subr.mxu0 0.0
    %3365 = vmatpush2.msra.mxu0 0.0
    %3366 = vmatprep.subr.mxu0 0.0
    %3367 = vmatpush2.msra.mxu0 0.0
    %3368 = vmatprep.subr.mxu0 0.0
    %3369 = vmatpush2.msra.mxu0 0.0
    %3370 = vmatprep.subr.mxu0 0.0
    %3371 = vmatpush2.msra.mxu0 0.0
    %3372 = vmatprep.subr.mxu0 0.0
    %3373 = vmatpush2.msra.mxu0 0.0
    %3374 = vmatprep.subr.mxu0 0.0
    %3375 = vmatpush2.msra.mxu0 0.0
    %3376 = vmatprep.subr.mxu0 0.0
    %3377 = vmatpush2.msra.mxu0 0.0
    %3378 = vmatprep.subr.mxu0 0.0
    %3379 = vmatpush2.msra.mxu0 0.0
    %3380 = vmatprep.mubr.f32.mxu0 0.0
    %3381 = vmatmul.mubr.f32.gmra.mxu0 %v3314
    %v3382 = vpop.f32.mrf.mxu0
    %v3383 = vadd.f32 %v3092, %v3382
    %v3384 = vpop.f32.mrf.mxu0
    %3385 = vdwg.mxu0
    %v3387 = vsel %vm2495, %v3084, 0
    %3389 = vmatprep.subr.mxu0 0.0
    %3390 = vmatpush1.msra.mxu0 0.0
    %3391 = vmatprep.subr.mxu0 0.0
    %3392 = vmatpush1.msra.mxu0 0.0
    %3393 = vmatprep.subr.mxu0 0.0
    %3394 = vmatpush1.msra.mxu0 0.0
    %3395 = vmatprep.subr.mxu0 0.0
    %3396 = vmatpush1.msra.mxu0 0.0
    %3397 = vmatprep.subr.mxu0 0.0
    %3398 = vmatpush1.msra.mxu0 0.0
    %3399 = vmatprep.subr.mxu0 0.0
    %3400 = vmatpush1.msra.mxu0 0.0
    %3401 = vmatprep.subr.mxu0 0.0
    %3402 = vmatpush1.msra.mxu0 0.0
    %3403 = vmatprep.subr.mxu0 0.0
    %3404 = vmatpush1.msra.mxu0 0.0
    %3405 = vmatprep.subr.mxu0 0.0
    %3406 = vmatpush1.msra.mxu0 0.0
    %3407 = vmatprep.subr.mxu0 0.0
    %3408 = vmatpush1.msra.mxu0 0.0
    %3409 = vmatprep.subr.mxu0 0.0
    %3410 = vmatpush1.msra.mxu0 0.0
    %3411 = vmatprep.subr.mxu0 0.0
    %3412 = vmatpush1.msra.mxu0 0.0
    %3413 = vmatprep.subr.mxu0 0.0
    %3414 = vmatpush1.msra.mxu0 %v2456
    %3415 = vmatprep.subr.mxu0 0.0
    %3416 = vmatpush1.msra.mxu0 %v2455
    %3417 = vmatprep.subr.mxu0 0.0
    %3418 = vmatpush1.msra.mxu0 %v2454
    %3419 = vmatprep.subr.mxu0 0.0
    %3420 = vmatpush1.msra.mxu0 %v2453
    %3421 = vmatprep.subr.mxu0 0.0
    %3422 = vmatpush2.msra.mxu0 0.0
    %3423 = vmatprep.subr.mxu0 0.0
    %3424 = vmatpush2.msra.mxu0 0.0
    %3425 = vmatprep.subr.mxu0 0.0
    %3426 = vmatpush2.msra.mxu0 0.0
    %3427 = vmatprep.subr.mxu0 0.0
    %3428 = vmatpush2.msra.mxu0 0.0
    %3429 = vmatprep.subr.mxu0 0.0
    %3430 = vmatpush2.msra.mxu0 0.0
    %3431 = vmatprep.subr.mxu0 0.0
    %3432 = vmatpush2.msra.mxu0 0.0
    %3433 = vmatprep.subr.mxu0 0.0
    %3434 = vmatpush2.msra.mxu0 0.0
    %3435 = vmatprep.subr.mxu0 0.0
    %3436 = vmatpush2.msra.mxu0 0.0
    %3437 = vmatprep.subr.mxu0 0.0
    %3438 = vmatpush2.msra.mxu0 0.0
    %3439 = vmatprep.subr.mxu0 0.0
    %3440 = vmatpush2.msra.mxu0 0.0
    %3441 = vmatprep.subr.mxu0 0.0
    %3442 = vmatpush2.msra.mxu0 0.0
    %3443 = vmatprep.subr.mxu0 0.0
    %3444 = vmatpush2.msra.mxu0 0.0
    %3445 = vmatprep.subr.mxu0 0.0
    %3446 = vmatpush2.msra.mxu0 0.0
    %3447 = vmatprep.subr.mxu0 0.0
    %3448 = vmatpush2.msra.mxu0 0.0
    %3449 = vmatprep.subr.mxu0 0.0
    %3450 = vmatpush2.msra.mxu0 0.0
    %3451 = vmatprep.subr.mxu0 0.0
    %3452 = vmatpush2.msra.mxu0 0.0
    %3453 = vmatprep.mubr.f32.mxu0 0.0
    %3454 = vmatmul.mubr.f32.gmra.mxu0 %v3387
    %v3455 = vpop.f32.mrf.mxu0
    %v3456 = vadd.f32 %v3092, %v3455
    %v3457 = vpop.f32.mrf.mxu0
    %3458 = vdwg.mxu0
    %v3460 = vsel %vm2495, %v3085, 0
    %3462 = vmatprep.subr.mxu0 0.0
    %3463 = vmatpush1.msra.mxu0 0.0
    %3464 = vmatprep.subr.mxu0 0.0
    %3465 = vmatpush1.msra.mxu0 0.0
    %3466 = vmatprep.subr.mxu0 0.0
    %3467 = vmatpush1.msra.mxu0 0.0
    %3468 = vmatprep.subr.mxu0 0.0
    %3469 = vmatpush1.msra.mxu0 0.0
    %3470 = vmatprep.subr.mxu0 0.0
    %3471 = vmatpush1.msra.mxu0 0.0
    %3472 = vmatprep.subr.mxu0 0.0
    %3473 = vmatpush1.msra.mxu0 0.0
    %3474 = vmatprep.subr.mxu0 0.0
    %3475 = vmatpush1.msra.mxu0 0.0
    %3476 = vmatprep.subr.mxu0 0.0
    %3477 = vmatpush1.msra.mxu0 0.0
    %3478 = vmatprep.subr.mxu0 0.0
    %3479 = vmatpush1.msra.mxu0 0.0
    %3480 = vmatprep.subr.mxu0 0.0
    %3481 = vmatpush1.msra.mxu0 0.0
    %3482 = vmatprep.subr.mxu0 0.0
    %3483 = vmatpush1.msra.mxu0 0.0
    %3484 = vmatprep.subr.mxu0 0.0
    %3485 = vmatpush1.msra.mxu0 0.0
    %3486 = vmatprep.subr.mxu0 0.0
    %3487 = vmatpush1.msra.mxu0 %v2464
    %3488 = vmatprep.subr.mxu0 0.0
    %3489 = vmatpush1.msra.mxu0 %v2463
    %3490 = vmatprep.subr.mxu0 0.0
    %3491 = vmatpush1.msra.mxu0 %v2462
    %3492 = vmatprep.subr.mxu0 0.0
    %3493 = vmatpush1.msra.mxu0 %v2461
    %3494 = vmatprep.subr.mxu0 0.0
    %3495 = vmatpush2.msra.mxu0 0.0
    %3496 = vmatprep.subr.mxu0 0.0
    %3497 = vmatpush2.msra.mxu0 0.0
    %3498 = vmatprep.subr.mxu0 0.0
    %3499 = vmatpush2.msra.mxu0 0.0
    %3500 = vmatprep.subr.mxu0 0.0
    %3501 = vmatpush2.msra.mxu0 0.0
    %3502 = vmatprep.subr.mxu0 0.0
    %3503 = vmatpush2.msra.mxu0 0.0
    %3504 = vmatprep.subr.mxu0 0.0
    %3505 = vmatpush2.msra.mxu0 0.0
    %3506 = vmatprep.subr.mxu0 0.0
    %3507 = vmatpush2.msra.mxu0 0.0
    %3508 = vmatprep.subr.mxu0 0.0
    %3509 = vmatpush2.msra.mxu0 0.0
    %3510 = vmatprep.subr.mxu0 0.0
    %3511 = vmatpush2.msra.mxu0 0.0
    %3512 = vmatprep.subr.mxu0 0.0
    %3513 = vmatpush2.msra.mxu0 0.0
    %3514 = vmatprep.subr.mxu0 0.0
    %3515 = vmatpush2.msra.mxu0 0.0
    %3516 = vmatprep.subr.mxu0 0.0
    %3517 = vmatpush2.msra.mxu0 0.0
    %3518 = vmatprep.subr.mxu0 0.0
    %3519 = vmatpush2.msra.mxu0 0.0
    %3520 = vmatprep.subr.mxu0 0.0
    %3521 = vmatpush2.msra.mxu0 0.0
    %3522 = vmatprep.subr.mxu0 0.0
    %3523 = vmatpush2.msra.mxu0 0.0
    %3524 = vmatprep.subr.mxu0 0.0
    %3525 = vmatpush2.msra.mxu0 0.0
    %3526 = vmatprep.mubr.f32.mxu0 0.0
    %3527 = vmatmul.mubr.f32.gmra.mxu0 %v3460
    %v3528 = vpop.f32.mrf.mxu0
    %v3529 = vadd.f32 %v3092, %v3528
    %v3530 = vpop.f32.mrf.mxu0
    %3531 = vdwg.mxu0
    %v3533 = vsel %vm2495, %v3086, 0
    %3535 = vmatprep.subr.mxu0 0.0
    %3536 = vmatpush1.msra.mxu0 0.0
    %3537 = vmatprep.subr.mxu0 0.0
    %3538 = vmatpush1.msra.mxu0 0.0
    %3539 = vmatprep.subr.mxu0 0.0
    %3540 = vmatpush1.msra.mxu0 0.0
    %3541 = vmatprep.subr.mxu0 0.0
    %3542 = vmatpush1.msra.mxu0 0.0
    %3543 = vmatprep.subr.mxu0 0.0
    %3544 = vmatpush1.msra.mxu0 0.0
    %3545 = vmatprep.subr.mxu0 0.0
    %3546 = vmatpush1.msra.mxu0 0.0
    %3547 = vmatprep.subr.mxu0 0.0
    %3548 = vmatpush1.msra.mxu0 0.0
    %3549 = vmatprep.subr.mxu0 0.0
    %3550 = vmatpush1.msra.mxu0 0.0
    %3551 = vmatprep.subr.mxu0 0.0
    %3552 = vmatpush1.msra.mxu0 0.0
    %3553 = vmatprep.subr.mxu0 0.0
    %3554 = vmatpush1.msra.mxu0 0.0
    %3555 = vmatprep.subr.mxu0 0.0
    %3556 = vmatpush1.msra.mxu0 0.0
    %3557 = vmatprep.subr.mxu0 0.0
    %3558 = vmatpush1.msra.mxu0 0.0
    %3559 = vmatprep.subr.mxu0 0.0
    %3560 = vmatpush1.msra.mxu0 %v2472
    %3561 = vmatprep.subr.mxu0 0.0
    %3562 = vmatpush1.msra.mxu0 %v2471
    %3563 = vmatprep.subr.mxu0 0.0
    %3564 = vmatpush1.msra.mxu0 %v2470
    %3565 = vmatprep.subr.mxu0 0.0
    %3566 = vmatpush1.msra.mxu0 %v2469
    %3567 = vmatprep.subr.mxu0 0.0
    %3568 = vmatpush2.msra.mxu0 0.0
    %3569 = vmatprep.subr.mxu0 0.0
    %3570 = vmatpush2.msra.mxu0 0.0
    %3571 = vmatprep.subr.mxu0 0.0
    %3572 = vmatpush2.msra.mxu0 0.0
    %3573 = vmatprep.subr.mxu0 0.0
    %3574 = vmatpush2.msra.mxu0 0.0
    %3575 = vmatprep.subr.mxu0 0.0
    %3576 = vmatpush2.msra.mxu0 0.0
    %3577 = vmatprep.subr.mxu0 0.0
    %3578 = vmatpush2.msra.mxu0 0.0
    %3579 = vmatprep.subr.mxu0 0.0
    %3580 = vmatpush2.msra.mxu0 0.0
    %3581 = vmatprep.subr.mxu0 0.0
    %3582 = vmatpush2.msra.mxu0 0.0
    %3583 = vmatprep.subr.mxu0 0.0
    %3584 = vmatpush2.msra.mxu0 0.0
    %3585 = vmatprep.subr.mxu0 0.0
    %3586 = vmatpush2.msra.mxu0 0.0
    %3587 = vmatprep.subr.mxu0 0.0
    %3588 = vmatpush2.msra.mxu0 0.0
    %3589 = vmatprep.subr.mxu0 0.0
    %3590 = vmatpush2.msra.mxu0 0.0
    %3591 = vmatprep.subr.mxu0 0.0
    %3592 = vmatpush2.msra.mxu0 0.0
    %3593 = vmatprep.subr.mxu0 0.0
    %3594 = vmatpush2.msra.mxu0 0.0
    %3595 = vmatprep.subr.mxu0 0.0
    %3596 = vmatpush2.msra.mxu0 0.0
    %3597 = vmatprep.subr.mxu0 0.0
    %3598 = vmatpush2.msra.mxu0 0.0
    %3599 = vmatprep.mubr.f32.mxu0 0.0
    %3600 = vmatmul.mubr.f32.gmra.mxu0 %v3533
    %v3601 = vpop.f32.mrf.mxu0
    %v3602 = vadd.f32 %v3092, %v3601
    %v3603 = vpop.f32.mrf.mxu0
    %3604 = vdwg.mxu0
    %v3606 = vsel %vm2495, %v3087, 0
    %3608 = vmatprep.subr.mxu0 0.0
    %3609 = vmatpush1.msra.mxu0 0.0
    %3610 = vmatprep.subr.mxu0 0.0
    %3611 = vmatpush1.msra.mxu0 0.0
    %3612 = vmatprep.subr.mxu0 0.0
    %3613 = vmatpush1.msra.mxu0 0.0
    %3614 = vmatprep.subr.mxu0 0.0
    %3615 = vmatpush1.msra.mxu0 0.0
    %3616 = vmatprep.subr.mxu0 0.0
    %3617 = vmatpush1.msra.mxu0 0.0
    %3618 = vmatprep.subr.mxu0 0.0
    %3619 = vmatpush1.msra.mxu0 0.0
    %3620 = vmatprep.subr.mxu0 0.0
    %3621 = vmatpush1.msra.mxu0 0.0
    %3622 = vmatprep.subr.mxu0 0.0
    %3623 = vmatpush1.msra.mxu0 0.0
    %3624 = vmatprep.subr.mxu0 0.0
    %3625 = vmatpush1.msra.mxu0 0.0
    %3626 = vmatprep.subr.mxu0 0.0
    %3627 = vmatpush1.msra.mxu0 0.0
    %3628 = vmatprep.subr.mxu0 0.0
    %3629 = vmatpush1.msra.mxu0 0.0
    %3630 = vmatprep.subr.mxu0 0.0
    %3631 = vmatpush1.msra.mxu0 0.0
    %3632 = vmatprep.subr.mxu0 0.0
    %3633 = vmatpush1.msra.mxu0 %v2480
    %3634 = vmatprep.subr.mxu0 0.0
    %3635 = vmatpush1.msra.mxu0 %v2479
    %3636 = vmatprep.subr.mxu0 0.0
    %3637 = vmatpush1.msra.mxu0 %v2478
    %3638 = vmatprep.subr.mxu0 0.0
    %3639 = vmatpush1.msra.mxu0 %v2477
    %3640 = vmatprep.subr.mxu0 0.0
    %3641 = vmatpush2.msra.mxu0 0.0
    %3642 = vmatprep.subr.mxu0 0.0
    %3643 = vmatpush2.msra.mxu0 0.0
    %3644 = vmatprep.subr.mxu0 0.0
    %3645 = vmatpush2.msra.mxu0 0.0
    %3646 = vmatprep.subr.mxu0 0.0
    %3647 = vmatpush2.msra.mxu0 0.0
    %3648 = vmatprep.subr.mxu0 0.0
    %3649 = vmatpush2.msra.mxu0 0.0
    %3650 = vmatprep.subr.mxu0 0.0
    %3651 = vmatpush2.msra.mxu0 0.0
    %3652 = vmatprep.subr.mxu0 0.0
    %3653 = vmatpush2.msra.mxu0 0.0
    %3654 = vmatprep.subr.mxu0 0.0
    %3655 = vmatpush2.msra.mxu0 0.0
    %3656 = vmatprep.subr.mxu0 0.0
    %3657 = vmatpush2.msra.mxu0 0.0
    %3658 = vmatprep.subr.mxu0 0.0
    %3659 = vmatpush2.msra.mxu0 0.0
    %3660 = vmatprep.subr.mxu0 0.0
    %3661 = vmatpush2.msra.mxu0 0.0
    %3662 = vmatprep.subr.mxu0 0.0
    %3663 = vmatpush2.msra.mxu0 0.0
    %3664 = vmatprep.subr.mxu0 0.0
    %3665 = vmatpush2.msra.mxu0 0.0
    %3666 = vmatprep.subr.mxu0 0.0
    %3667 = vmatpush2.msra.mxu0 0.0
    %3668 = vmatprep.subr.mxu0 0.0
    %3669 = vmatpush2.msra.mxu0 0.0
    %3670 = vmatprep.subr.mxu0 0.0
    %3671 = vmatpush2.msra.mxu0 0.0
    %3672 = vmatprep.mubr.f32.mxu0 0.0
    %3673 = vmatmul.mubr.f32.gmra.mxu0 %v3606
    %v3674 = vpop.f32.mrf.mxu0
    %v3675 = vadd.f32 %v3092, %v3674
    %v3676 = vpop.f32.mrf.mxu0
    %3677 = vdwg.mxu0
    %v3678 = vsel %vm214, %v3164, -inf
    %v3679 = vrot.slane %v3678, 4
    %v3680 = vmax.f32 %v3678, %v3679
    %v3681 = vrot.slane %v3680, 2
    %v3682 = vmax.f32 %v3680, %v3681
    %v3683 = vrot.slane %v3682, 1
    %v3684 = vmax.f32 %v3682, %v3683
    %v3685 = vsel %vm214, %v3237, -inf
    %v3686 = vrot.slane %v3685, 4
    %v3687 = vmax.f32 %v3685, %v3686
    %v3688 = vrot.slane %v3687, 2
    %v3689 = vmax.f32 %v3687, %v3688
    %v3690 = vrot.slane %v3689, 1
    %v3691 = vmax.f32 %v3689, %v3690
    %v3692 = vsel %vm214, %v3310, -inf
    %v3693 = vrot.slane %v3692, 4
    %v3694 = vmax.f32 %v3692, %v3693
    %v3695 = vrot.slane %v3694, 2
    %v3696 = vmax.f32 %v3694, %v3695
    %v3697 = vrot.slane %v3696, 1
    %v3698 = vmax.f32 %v3696, %v3697
    %v3699 = vsel %vm214, %v3383, -inf
    %v3700 = vrot.slane %v3699, 4
    %v3701 = vmax.f32 %v3699, %v3700
    %v3702 = vrot.slane %v3701, 2
    %v3703 = vmax.f32 %v3701, %v3702
    %v3704 = vrot.slane %v3703, 1
    %v3705 = vmax.f32 %v3703, %v3704
    %v3706 = vsel %vm214, %v3456, -inf
    %v3707 = vrot.slane %v3706, 4
    %v3708 = vmax.f32 %v3706, %v3707
    %v3709 = vrot.slane %v3708, 2
    %v3710 = vmax.f32 %v3708, %v3709
    %v3711 = vrot.slane %v3710, 1
    %v3712 = vmax.f32 %v3710, %v3711
    %v3713 = vsel %vm214, %v3529, -inf
    %v3714 = vrot.slane %v3713, 4
    %v3715 = vmax.f32 %v3713, %v3714
    %v3716 = vrot.slane %v3715, 2
    %v3717 = vmax.f32 %v3715, %v3716
    %v3718 = vrot.slane %v3717, 1
    %v3719 = vmax.f32 %v3717, %v3718
    %v3720 = vsel %vm214, %v3602, -inf
    %v3721 = vrot.slane %v3720, 4
    %v3722 = vmax.f32 %v3720, %v3721
    %v3723 = vrot.slane %v3722, 2
    %v3724 = vmax.f32 %v3722, %v3723
    %v3725 = vrot.slane %v3724, 1
    %v3726 = vmax.f32 %v3724, %v3725
    %v3727 = vsel %vm214, %v3675, -inf
    %v3728 = vrot.slane %v3727, 4
    %v3729 = vmax.f32 %v3727, %v3728
    %v3730 = vrot.slane %v3729, 2
    %v3731 = vmax.f32 %v3729, %v3730
    %v3732 = vrot.slane %v3731, 1
    %v3733 = vmax.f32 %v3731, %v3732
    %v3734 = vsub.f32 %v3164, %v3684
    %v3735 = vsub.f32 %v3237, %v3691
    %v3736 = vsub.f32 %v3310, %v3698
    %v3737 = vsub.f32 %v3383, %v3705
    %v3738 = vsub.f32 %v3456, %v3712
    %v3739 = vsub.f32 %v3529, %v3719
    %v3740 = vsub.f32 %v3602, %v3726
    %v3741 = vsub.f32 %v3675, %v3733
    %v3742 = vmul.f32 %v3734, 1.442695
    %v3743 = vpow.pop %v3742
    %v3744 = vmul.f32 %v3735, 1.442695
    %v3745 = vpow.pop %v3744
    %v3746 = vmul.f32 %v3736, 1.442695
    %v3747 = vpow.pop %v3746
    %v3748 = vmul.f32 %v3737, 1.442695
    %v3749 = vpow.pop %v3748
    %v3750 = vmul.f32 %v3738, 1.442695
    %v3751 = vpow.pop %v3750
    %v3752 = vmul.f32 %v3739, 1.442695
    %v3753 = vpow.pop %v3752
    %v3754 = vmul.f32 %v3740, 1.442695
    %v3755 = vpow.pop %v3754
    %v3756 = vmul.f32 %v3741, 1.442695
    %v3757 = vpow.pop %v3756
    %v3758 = vsel %vm214, %v3743, 0.0
    %v3759 = vrot.slane %v3758, 4
    %v3760 = vadd.f32 %v3758, %v3759
    %v3761 = vrot.slane %v3760, 2
    %v3762 = vadd.f32 %v3760, %v3761
    %v3763 = vrot.slane %v3762, 1
    %v3764 = vadd.f32 %v3762, %v3763
    %v3765 = vsel %vm214, %v3745, 0.0
    %v3766 = vrot.slane %v3765, 4
    %v3767 = vadd.f32 %v3765, %v3766
    %v3768 = vrot.slane %v3767, 2
    %v3769 = vadd.f32 %v3767, %v3768
    %v3770 = vrot.slane %v3769, 1
    %v3771 = vadd.f32 %v3769, %v3770
    %v3772 = vsel %vm214, %v3747, 0.0
    %v3773 = vrot.slane %v3772, 4
    %v3774 = vadd.f32 %v3772, %v3773
    %v3775 = vrot.slane %v3774, 2
    %v3776 = vadd.f32 %v3774, %v3775
    %v3777 = vrot.slane %v3776, 1
    %v3778 = vadd.f32 %v3776, %v3777
    %v3779 = vsel %vm214, %v3749, 0.0
    %v3780 = vrot.slane %v3779, 4
    %v3781 = vadd.f32 %v3779, %v3780
    %v3782 = vrot.slane %v3781, 2
    %v3783 = vadd.f32 %v3781, %v3782
    %v3784 = vrot.slane %v3783, 1
    %v3785 = vadd.f32 %v3783, %v3784
    %v3786 = vsel %vm214, %v3751, 0.0
    %v3787 = vrot.slane %v3786, 4
    %v3788 = vadd.f32 %v3786, %v3787
    %v3789 = vrot.slane %v3788, 2
    %v3790 = vadd.f32 %v3788, %v3789
    %v3791 = vrot.slane %v3790, 1
    %v3792 = vadd.f32 %v3790, %v3791
    %v3793 = vsel %vm214, %v3753, 0.0
    %v3794 = vrot.slane %v3793, 4
    %v3795 = vadd.f32 %v3793, %v3794
    %v3796 = vrot.slane %v3795, 2
    %v3797 = vadd.f32 %v3795, %v3796
    %v3798 = vrot.slane %v3797, 1
    %v3799 = vadd.f32 %v3797, %v3798
    %v3800 = vsel %vm214, %v3755, 0.0
    %v3801 = vrot.slane %v3800, 4
    %v3802 = vadd.f32 %v3800, %v3801
    %v3803 = vrot.slane %v3802, 2
    %v3804 = vadd.f32 %v3802, %v3803
    %v3805 = vrot.slane %v3804, 1
    %v3806 = vadd.f32 %v3804, %v3805
    %v3807 = vsel %vm214, %v3757, 0.0
    %v3808 = vrot.slane %v3807, 4
    %v3809 = vadd.f32 %v3807, %v3808
    %v3810 = vrot.slane %v3809, 2
    %v3811 = vadd.f32 %v3809, %v3810
    %v3812 = vrot.slane %v3811, 1
    %v3813 = vadd.f32 %v3811, %v3812
    %v3814 = vrcp.pop %v3764
    %v3815 = vrcp.pop %v3771
    %v3816 = vrcp.pop %v3778
    %v3817 = vrcp.pop %v3785
    %v3818 = vrcp.pop %v3792
    %v3819 = vrcp.pop %v3799
    %v3820 = vrcp.pop %v3806
    %v3821 = vrcp.pop %v3813
    %v3822 = vmul.f32 %v3743, %v3814
    %v3823 = vmul.f32 %v3745, %v3815
    %v3824 = vmul.f32 %v3747, %v3816
    %v3825 = vmul.f32 %v3749, %v3817
    %v3826 = vmul.f32 %v3751, %v3818
    %v3827 = vmul.f32 %v3753, %v3819
    %v3828 = vmul.f32 %v3755, %v3820
    %v3829 = vmul.f32 %v3757, %v3821
    %v3832 = vunpack.c.l.s4 1966171168
    %v3833 = vunpack.c.0.s8 %v3832
    %v3834 = vlaneseq
    %v3835 = vshrl.u32 %v3834, 7
    %v3836 = vsub.s32 %v3833, %v3835
    %v3837 = vrot.slane %v3822, %v3836
    %v3838 = vcombine.high %v3837, %v3837
    %v3840 = vunpack.c.l.s4 1966171168
    %v3841 = vunpack.c.0.s8 %v3840
    %v3842 = vlaneseq
    %v3843 = vshrl.u32 %v3842, 7
    %v3844 = vsub.s32 %v3841, %v3843
    %v3845 = vrot.slane %v3837, %v3844
    %v3847 = vunpack.c.l.s4 1966171168
    %v3848 = vunpack.c.0.s8 %v3847
    %v3849 = vlaneseq
    %v3850 = vshrl.u32 %v3849, 7
    %v3851 = vsub.s32 %v3848, %v3850
    %v3852 = vrot.slane %v3838, %v3851
    %v3853 = vcombine.high %v3845, %v3845
    %v3854 = vlaneseq
    %v3855 = vshrl.u32 %v3854, 7
    %v3856 = vsub.s32 0, %v3855
    %v3857 = vrot.slane %v3845, %v3856
    %v3858 = vlaneseq
    %v3859 = vshrl.u32 %v3858, 7
    %v3860 = vsub.s32 0, %v3859
    %v3861 = vrot.slane %v3852, %v3860
    %v3862 = vlaneseq
    %v3863 = vshrl.u32 %v3862, 7
    %v3864 = vsub.s32 0, %v3863
    %v3865 = vrot.slane %v3853, %v3864
    %v3869 = vmul.f32 %v3857, %v2566
    %v3870 = vmul.f32 %v3861, %v2566
    %v3871 = vmul.f32 %v3865, %v2566
    %v3874 = vunpack.c.l.s4 1966171168
    %v3875 = vunpack.c.0.s8 %v3874
    %v3876 = vlaneseq
    %v3877 = vshrl.u32 %v3876, 7
    %v3878 = vsub.s32 %v3875, %v3877
    %v3879 = vrot.slane %v3823, %v3878
    %v3880 = vcombine.high %v3879, %v3879
    %v3882 = vunpack.c.l.s4 1966171168
    %v3883 = vunpack.c.0.s8 %v3882
    %v3884 = vlaneseq
    %v3885 = vshrl.u32 %v3884, 7
    %v3886 = vsub.s32 %v3883, %v3885
    %v3887 = vrot.slane %v3879, %v3886
    %v3889 = vunpack.c.l.s4 1966171168
    %v3890 = vunpack.c.0.s8 %v3889
    %v3891 = vlaneseq
    %v3892 = vshrl.u32 %v3891, 7
    %v3893 = vsub.s32 %v3890, %v3892
    %v3894 = vrot.slane %v3880, %v3893
    %v3895 = vcombine.high %v3887, %v3887
    %v3896 = vlaneseq
    %v3897 = vshrl.u32 %v3896, 7
    %v3898 = vsub.s32 0, %v3897
    %v3899 = vrot.slane %v3887, %v3898
    %v3900 = vlaneseq
    %v3901 = vshrl.u32 %v3900, 7
    %v3902 = vsub.s32 0, %v3901
    %v3903 = vrot.slane %v3894, %v3902
    %v3904 = vlaneseq
    %v3905 = vshrl.u32 %v3904, 7
    %v3906 = vsub.s32 0, %v3905
    %v3907 = vrot.slane %v3895, %v3906
    %v3911 = vmul.f32 %v3899, %v2639
    %v3912 = vmul.f32 %v3903, %v2639
    %v3913 = vmul.f32 %v3907, %v2639
    %v3914 = vadd.f32 %v3869, %v3911
    %v3915 = vadd.f32 %v3870, %v3912
    %v3916 = vadd.f32 %v3871, %v3913
    %v3917 = vadd.f32 %v3822, %v3823
    %v3920 = vunpack.c.l.s4 1966171168
    %v3921 = vunpack.c.0.s8 %v3920
    %v3922 = vlaneseq
    %v3923 = vshrl.u32 %v3922, 7
    %v3924 = vsub.s32 %v3921, %v3923
    %v3925 = vrot.slane %v3824, %v3924
    %v3926 = vcombine.high %v3925, %v3925
    %v3928 = vunpack.c.l.s4 1966171168
    %v3929 = vunpack.c.0.s8 %v3928
    %v3930 = vlaneseq
    %v3931 = vshrl.u32 %v3930, 7
    %v3932 = vsub.s32 %v3929, %v3931
    %v3933 = vrot.slane %v3925, %v3932
    %v3935 = vunpack.c.l.s4 1966171168
    %v3936 = vunpack.c.0.s8 %v3935
    %v3937 = vlaneseq
    %v3938 = vshrl.u32 %v3937, 7
    %v3939 = vsub.s32 %v3936, %v3938
    %v3940 = vrot.slane %v3926, %v3939
    %v3941 = vcombine.high %v3933, %v3933
    %v3942 = vlaneseq
    %v3943 = vshrl.u32 %v3942, 7
    %v3944 = vsub.s32 0, %v3943
    %v3945 = vrot.slane %v3933, %v3944
    %v3946 = vlaneseq
    %v3947 = vshrl.u32 %v3946, 7
    %v3948 = vsub.s32 0, %v3947
    %v3949 = vrot.slane %v3940, %v3948
    %v3950 = vlaneseq
    %v3951 = vshrl.u32 %v3950, 7
    %v3952 = vsub.s32 0, %v3951
    %v3953 = vrot.slane %v3941, %v3952
    %v3957 = vmul.f32 %v3945, %v2712
    %v3958 = vmul.f32 %v3949, %v2712
    %v3959 = vmul.f32 %v3953, %v2712
    %v3960 = vadd.f32 %v3914, %v3957
    %v3961 = vadd.f32 %v3915, %v3958
    %v3962 = vadd.f32 %v3916, %v3959
    %v3963 = vadd.f32 %v3917, %v3824
    %v3966 = vunpack.c.l.s4 1966171168
    %v3967 = vunpack.c.0.s8 %v3966
    %v3968 = vlaneseq
    %v3969 = vshrl.u32 %v3968, 7
    %v3970 = vsub.s32 %v3967, %v3969
    %v3971 = vrot.slane %v3825, %v3970
    %v3972 = vcombine.high %v3971, %v3971
    %v3974 = vunpack.c.l.s4 1966171168
    %v3975 = vunpack.c.0.s8 %v3974
    %v3976 = vlaneseq
    %v3977 = vshrl.u32 %v3976, 7
    %v3978 = vsub.s32 %v3975, %v3977
    %v3979 = vrot.slane %v3971, %v3978
    %v3981 = vunpack.c.l.s4 1966171168
    %v3982 = vunpack.c.0.s8 %v3981
    %v3983 = vlaneseq
    %v3984 = vshrl.u32 %v3983, 7
    %v3985 = vsub.s32 %v3982, %v3984
    %v3986 = vrot.slane %v3972, %v3985
    %v3987 = vcombine.high %v3979, %v3979
    %v3988 = vlaneseq
    %v3989 = vshrl.u32 %v3988, 7
    %v3990 = vsub.s32 0, %v3989
    %v3991 = vrot.slane %v3979, %v3990
    %v3992 = vlaneseq
    %v3993 = vshrl.u32 %v3992, 7
    %v3994 = vsub.s32 0, %v3993
    %v3995 = vrot.slane %v3986, %v3994
    %v3996 = vlaneseq
    %v3997 = vshrl.u32 %v3996, 7
    %v3998 = vsub.s32 0, %v3997
    %v3999 = vrot.slane %v3987, %v3998
    %v4003 = vmul.f32 %v3991, %v2785
    %v4004 = vmul.f32 %v3995, %v2785
    %v4005 = vmul.f32 %v3999, %v2785
    %v4006 = vadd.f32 %v3960, %v4003
    %v4007 = vadd.f32 %v3961, %v4004
    %v4008 = vadd.f32 %v3962, %v4005
    %v4009 = vadd.f32 %v3963, %v3825
    %v4012 = vunpack.c.l.s4 1966171168
    %v4013 = vunpack.c.0.s8 %v4012
    %v4014 = vlaneseq
    %v4015 = vshrl.u32 %v4014, 7
    %v4016 = vsub.s32 %v4013, %v4015
    %v4017 = vrot.slane %v3826, %v4016
    %v4018 = vcombine.high %v4017, %v4017
    %v4020 = vunpack.c.l.s4 1966171168
    %v4021 = vunpack.c.0.s8 %v4020
    %v4022 = vlaneseq
    %v4023 = vshrl.u32 %v4022, 7
    %v4024 = vsub.s32 %v4021, %v4023
    %v4025 = vrot.slane %v4017, %v4024
    %v4027 = vunpack.c.l.s4 1966171168
    %v4028 = vunpack.c.0.s8 %v4027
    %v4029 = vlaneseq
    %v4030 = vshrl.u32 %v4029, 7
    %v4031 = vsub.s32 %v4028, %v4030
    %v4032 = vrot.slane %v4018, %v4031
    %v4033 = vcombine.high %v4025, %v4025
    %v4034 = vlaneseq
    %v4035 = vshrl.u32 %v4034, 7
    %v4036 = vsub.s32 0, %v4035
    %v4037 = vrot.slane %v4025, %v4036
    %v4038 = vlaneseq
    %v4039 = vshrl.u32 %v4038, 7
    %v4040 = vsub.s32 0, %v4039
    %v4041 = vrot.slane %v4032, %v4040
    %v4042 = vlaneseq
    %v4043 = vshrl.u32 %v4042, 7
    %v4044 = vsub.s32 0, %v4043
    %v4045 = vrot.slane %v4033, %v4044
    %v4049 = vmul.f32 %v4037, %v2858
    %v4050 = vmul.f32 %v4041, %v2858
    %v4051 = vmul.f32 %v4045, %v2858
    %v4052 = vadd.f32 %v4006, %v4049
    %v4053 = vadd.f32 %v4007, %v4050
    %v4054 = vadd.f32 %v4008, %v4051
    %v4055 = vadd.f32 %v4009, %v3826
    %v4058 = vunpack.c.l.s4 1966171168
    %v4059 = vunpack.c.0.s8 %v4058
    %v4060 = vlaneseq
    %v4061 = vshrl.u32 %v4060, 7
    %v4062 = vsub.s32 %v4059, %v4061
    %v4063 = vrot.slane %v3827, %v4062
    %v4064 = vcombine.high %v4063, %v4063
    %v4066 = vunpack.c.l.s4 1966171168
    %v4067 = vunpack.c.0.s8 %v4066
    %v4068 = vlaneseq
    %v4069 = vshrl.u32 %v4068, 7
    %v4070 = vsub.s32 %v4067, %v4069
    %v4071 = vrot.slane %v4063, %v4070
    %v4073 = vunpack.c.l.s4 1966171168
    %v4074 = vunpack.c.0.s8 %v4073
    %v4075 = vlaneseq
    %v4076 = vshrl.u32 %v4075, 7
    %v4077 = vsub.s32 %v4074, %v4076
    %v4078 = vrot.slane %v4064, %v4077
    %v4079 = vcombine.high %v4071, %v4071
    %v4080 = vlaneseq
    %v4081 = vshrl.u32 %v4080, 7
    %v4082 = vsub.s32 0, %v4081
    %v4083 = vrot.slane %v4071, %v4082
    %v4084 = vlaneseq
    %v4085 = vshrl.u32 %v4084, 7
    %v4086 = vsub.s32 0, %v4085
    %v4087 = vrot.slane %v4078, %v4086
    %v4088 = vlaneseq
    %v4089 = vshrl.u32 %v4088, 7
    %v4090 = vsub.s32 0, %v4089
    %v4091 = vrot.slane %v4079, %v4090
    %v4095 = vmul.f32 %v4083, %v2931
    %v4096 = vmul.f32 %v4087, %v2931
    %v4097 = vmul.f32 %v4091, %v2931
    %v4098 = vadd.f32 %v4052, %v4095
    %v4099 = vadd.f32 %v4053, %v4096
    %v4100 = vadd.f32 %v4054, %v4097
    %v4101 = vadd.f32 %v4055, %v3827
    %v4104 = vunpack.c.l.s4 1966171168
    %v4105 = vunpack.c.0.s8 %v4104
    %v4106 = vlaneseq
    %v4107 = vshrl.u32 %v4106, 7
    %v4108 = vsub.s32 %v4105, %v4107
    %v4109 = vrot.slane %v3828, %v4108
    %v4110 = vcombine.high %v4109, %v4109
    %v4112 = vunpack.c.l.s4 1966171168
    %v4113 = vunpack.c.0.s8 %v4112
    %v4114 = vlaneseq
    %v4115 = vshrl.u32 %v4114, 7
    %v4116 = vsub.s32 %v4113, %v4115
    %v4117 = vrot.slane %v4109, %v4116
    %v4119 = vunpack.c.l.s4 1966171168
    %v4120 = vunpack.c.0.s8 %v4119
    %v4121 = vlaneseq
    %v4122 = vshrl.u32 %v4121, 7
    %v4123 = vsub.s32 %v4120, %v4122
    %v4124 = vrot.slane %v4110, %v4123
    %v4125 = vcombine.high %v4117, %v4117
    %v4126 = vlaneseq
    %v4127 = vshrl.u32 %v4126, 7
    %v4128 = vsub.s32 0, %v4127
    %v4129 = vrot.slane %v4117, %v4128
    %v4130 = vlaneseq
    %v4131 = vshrl.u32 %v4130, 7
    %v4132 = vsub.s32 0, %v4131
    %v4133 = vrot.slane %v4124, %v4132
    %v4134 = vlaneseq
    %v4135 = vshrl.u32 %v4134, 7
    %v4136 = vsub.s32 0, %v4135
    %v4137 = vrot.slane %v4125, %v4136
    %v4141 = vmul.f32 %v4129, %v3004
    %v4142 = vmul.f32 %v4133, %v3004
    %v4143 = vmul.f32 %v4137, %v3004
    %v4144 = vadd.f32 %v4098, %v4141
    %v4145 = vadd.f32 %v4099, %v4142
    %v4146 = vadd.f32 %v4100, %v4143
    %v4147 = vadd.f32 %v4101, %v3828
    %v4150 = vunpack.c.l.s4 1966171168
    %v4151 = vunpack.c.0.s8 %v4150
    %v4152 = vlaneseq
    %v4153 = vshrl.u32 %v4152, 7
    %v4154 = vsub.s32 %v4151, %v4153
    %v4155 = vrot.slane %v3829, %v4154
    %v4156 = vcombine.high %v4155, %v4155
    %v4158 = vunpack.c.l.s4 1966171168
    %v4159 = vunpack.c.0.s8 %v4158
    %v4160 = vlaneseq
    %v4161 = vshrl.u32 %v4160, 7
    %v4162 = vsub.s32 %v4159, %v4161
    %v4163 = vrot.slane %v4155, %v4162
    %v4165 = vunpack.c.l.s4 1966171168
    %v4166 = vunpack.c.0.s8 %v4165
    %v4167 = vlaneseq
    %v4168 = vshrl.u32 %v4167, 7
    %v4169 = vsub.s32 %v4166, %v4168
    %v4170 = vrot.slane %v4156, %v4169
    %v4171 = vcombine.high %v4163, %v4163
    %v4172 = vlaneseq
    %v4173 = vshrl.u32 %v4172, 7
    %v4174 = vsub.s32 0, %v4173
    %v4175 = vrot.slane %v4163, %v4174
    %v4176 = vlaneseq
    %v4177 = vshrl.u32 %v4176, 7
    %v4178 = vsub.s32 0, %v4177
    %v4179 = vrot.slane %v4170, %v4178
    %v4180 = vlaneseq
    %v4181 = vshrl.u32 %v4180, 7
    %v4182 = vsub.s32 0, %v4181
    %v4183 = vrot.slane %v4171, %v4182
    %v4187 = vmul.f32 %v4175, %v3077
    %v4188 = vmul.f32 %v4179, %v3077
    %v4189 = vmul.f32 %v4183, %v3077
    %v4190 = vadd.f32 %v4144, %v4187
    %v4191 = vadd.f32 %v4145, %v4188
    %v4192 = vadd.f32 %v4146, %v4189
    %v4193 = vadd.f32 %v4147, %v3829
    %v4194 = vadd.f32 %v4193, 1e-08
    %v4195 = vrcp.pop %v4194
    %v4198 = vunpack.c.l.s4 1966171168
    %v4199 = vunpack.c.0.s8 %v4198
    %v4200 = vlaneseq
    %v4201 = vshrl.u32 %v4200, 7
    %v4202 = vsub.s32 %v4199, %v4201
    %v4203 = vrot.slane %v4195, %v4202
    %v4204 = vcombine.high %v4203, %v4203
    %v4206 = vunpack.c.l.s4 1966171168
    %v4207 = vunpack.c.0.s8 %v4206
    %v4208 = vlaneseq
    %v4209 = vshrl.u32 %v4208, 7
    %v4210 = vsub.s32 %v4207, %v4209
    %v4211 = vrot.slane %v4203, %v4210
    %v4213 = vunpack.c.l.s4 1966171168
    %v4214 = vunpack.c.0.s8 %v4213
    %v4215 = vlaneseq
    %v4216 = vshrl.u32 %v4215, 7
    %v4217 = vsub.s32 %v4214, %v4216
    %v4218 = vrot.slane %v4204, %v4217
    %v4219 = vcombine.high %v4211, %v4211
    %v4220 = vlaneseq
    %v4221 = vshrl.u32 %v4220, 7
    %v4222 = vsub.s32 0, %v4221
    %v4223 = vrot.slane %v4211, %v4222
    %v4224 = vlaneseq
    %v4225 = vshrl.u32 %v4224, 7
    %v4226 = vsub.s32 0, %v4225
    %v4227 = vrot.slane %v4218, %v4226
    %v4228 = vlaneseq
    %v4229 = vshrl.u32 %v4228, 7
    %v4230 = vsub.s32 0, %v4229
    %v4231 = vrot.slane %v4219, %v4230
    %v4235 = vmul.f32 %v4190, %v4223
    %v4236 = vmul.f32 %v4191, %v4227
    %v4237 = vmul.f32 %v4192, %v4231
    %v4238 = vld [vmem:[%s9] sm:$0xff]
    %v4239 = vld [vmem:[%s9 + $0x8] sm:$0xff]
    %v4240 = vld [vmem:[%s9 + $0x10] sm:$0xff]
    %v4241 = vld [vmem:[%s9 + $0x18] sm:$0xff]
    %v4242 = vld [vmem:[%s9 + $0x20] sm:$0xff]
    %v4243 = vld [vmem:[%s9 + $0x28] sm:$0xff]
    %v4244 = vld [vmem:[%s9 + $0x30] sm:$0xff]
    %v4245 = vld [vmem:[%s9 + $0x38] sm:$0xff]
    %v4246 = vld [vmem:[%s9 + $0x40] sm:$0xff]
    %v4247 = vld [vmem:[%s9 + $0x48] sm:$0xff]
    %v4248 = vld [vmem:[%s9 + $0x50] sm:$0xff]
    %v4249 = vld [vmem:[%s9 + $0x58] sm:$0xff]
    %v4250 = vld [vmem:[%s9 + $0x60] sm:$0xff]
    %v4251 = vld [vmem:[%s9 + $0x68] sm:$0xff]
    %v4252 = vld [vmem:[%s9 + $0x70] sm:$0xff]
    %v4253 = vld [vmem:[%s9 + $0x78] sm:$0xff]
    %v4254 = vld [vmem:[%s9 + $0x80] sm:$0xff]
    %v4255 = vld [vmem:[%s9 + $0x88] sm:$0xff]
    %v4256 = vld [vmem:[%s9 + $0x90] sm:$0xff]
    %v4257 = vld [vmem:[%s9 + $0x98] sm:$0xff]
    %v4258 = vld [vmem:[%s9 + $0xa0] sm:$0xff]
    %v4259 = vld [vmem:[%s9 + $0xa8] sm:$0xff]
    %v4260 = vld [vmem:[%s9 + $0xb0] sm:$0xff]
    %v4261 = vld [vmem:[%s9 + $0xb8] sm:$0xff]
    %v4262 = vld [vmem:[%s10] sm:$0xff]
    %v4263 = vld [vmem:[%s10 + $0x8] sm:$0xff]
    %v4264 = vld [vmem:[%s10 + $0x10] sm:$0xff]
    %v4265 = vld [vmem:[%s10 + $0x18] sm:$0xff]
    %v4266 = vld [vmem:[%s10 + $0x20] sm:$0xff]
    %v4267 = vld [vmem:[%s10 + $0x28] sm:$0xff]
    %v4268 = vld [vmem:[%s10 + $0x30] sm:$0xff]
    %v4269 = vld [vmem:[%s10 + $0x38] sm:$0xff]
    %4271 = vset.pattern.permute.xlu0 0
    %4272 = vperm.xlu0 %4271, %v4262
    %v4273 = vpop.permute.xlu0 %4272
    %4276 = vset.pattern.permute.xlu0 0
    %4277 = vperm.xlu0 %4276, %v4263
    %v4278 = vpop.permute.xlu0 %4277
    %4281 = vset.pattern.permute.xlu0 0
    %4282 = vperm.xlu0 %4281, %v4264
    %v4283 = vpop.permute.xlu0 %4282
    %4286 = vset.pattern.permute.xlu0 0
    %4287 = vperm.xlu0 %4286, %v4265
    %v4288 = vpop.permute.xlu0 %4287
    %4291 = vset.pattern.permute.xlu0 0
    %4292 = vperm.xlu0 %4291, %v4266
    %v4293 = vpop.permute.xlu0 %4292
    %4296 = vset.pattern.permute.xlu0 0
    %4297 = vperm.xlu0 %4296, %v4267
    %v4298 = vpop.permute.xlu0 %4297
    %4301 = vset.pattern.permute.xlu0 0
    %4302 = vperm.xlu0 %4301, %v4268
    %v4303 = vpop.permute.xlu0 %4302
    %4306 = vset.pattern.permute.xlu0 0
    %4307 = vperm.xlu0 %4306, %v4269
    %v4308 = vpop.permute.xlu0 %4307
    %vm4310 = vcmask 64512
    %v4312 = vsel %vm4310, %v4238, 0
    %v4315 = vsel %vm4310, %v4239, 0
    %v4318 = vsel %vm4310, %v4240, 0
    %v4321 = vsel %vm4310, %v4241, 0
    %v4324 = vsel %vm4310, %v4242, 0
    %v4327 = vsel %vm4310, %v4243, 0
    %v4330 = vsel %vm4310, %v4244, 0
    %v4333 = vsel %vm4310, %v4245, 0
    %4335 = vmatprep.subr.mxu0 0.0
    %4336 = vmatpush1.msra.mxu0 0.0
    %4337 = vmatprep.subr.mxu0 0.0
    %4338 = vmatpush1.msra.mxu0 0.0
    %4339 = vmatprep.subr.mxu0 0.0
    %4340 = vmatpush1.msra.mxu0 0.0
    %4341 = vmatprep.subr.mxu0 0.0
    %4342 = vmatpush1.msra.mxu0 0.0
    %4343 = vmatprep.subr.mxu0 0.0
    %4344 = vmatpush1.msra.mxu0 0.0
    %4345 = vmatprep.subr.mxu0 0.0
    %4346 = vmatpush1.msra.mxu0 0.0
    %4347 = vmatprep.subr.mxu0 0.0
    %4348 = vmatpush1.msra.mxu0 0.0
    %4349 = vmatprep.subr.mxu0 0.0
    %4350 = vmatpush1.msra.mxu0 0.0
    %4351 = vmatprep.subr.mxu0 0.0
    %4352 = vmatpush1.msra.mxu0 0.0
    %4353 = vmatprep.subr.mxu0 0.0
    %4354 = vmatpush1.msra.mxu0 0.0
    %4355 = vmatprep.subr.mxu0 0.0
    %4356 = vmatpush1.msra.mxu0 0.0
    %4357 = vmatprep.subr.mxu0 0.0
    %4358 = vmatpush1.msra.mxu0 0.0
    %4359 = vmatprep.subr.mxu0 0.0
    %4360 = vmatpush1.msra.mxu0 0.0
    %4361 = vmatprep.subr.mxu0 0.0
    %4362 = vmatpush1.msra.mxu0 0.0
    %4363 = vmatprep.subr.mxu0 0.0
    %4364 = vmatpush1.msra.mxu0 0.0
    %4365 = vmatprep.subr.mxu0 0.0
    %4366 = vmatpush1.msra.mxu0 %v4235
    %4367 = vmatprep.subr.mxu0 0.0
    %4368 = vmatpush2.msra.mxu0 0.0
    %4369 = vmatprep.subr.mxu0 0.0
    %4370 = vmatpush2.msra.mxu0 0.0
    %4371 = vmatprep.subr.mxu0 0.0
    %4372 = vmatpush2.msra.mxu0 0.0
    %4373 = vmatprep.subr.mxu0 0.0
    %4374 = vmatpush2.msra.mxu0 0.0
    %4375 = vmatprep.subr.mxu0 0.0
    %4376 = vmatpush2.msra.mxu0 0.0
    %4377 = vmatprep.subr.mxu0 0.0
    %4378 = vmatpush2.msra.mxu0 0.0
    %4379 = vmatprep.subr.mxu0 0.0
    %4380 = vmatpush2.msra.mxu0 0.0
    %4381 = vmatprep.subr.mxu0 0.0
    %4382 = vmatpush2.msra.mxu0 0.0
    %4383 = vmatprep.subr.mxu0 0.0
    %4384 = vmatpush2.msra.mxu0 0.0
    %4385 = vmatprep.subr.mxu0 0.0
    %4386 = vmatpush2.msra.mxu0 0.0
    %4387 = vmatprep.subr.mxu0 0.0
    %4388 = vmatpush2.msra.mxu0 0.0
    %4389 = vmatprep.subr.mxu0 0.0
    %4390 = vmatpush2.msra.mxu0 0.0
    %4391 = vmatprep.subr.mxu0 0.0
    %4392 = vmatpush2.msra.mxu0 0.0
    %4393 = vmatprep.subr.mxu0 0.0
    %4394 = vmatpush2.msra.mxu0 0.0
    %4395 = vmatprep.subr.mxu0 0.0
    %4396 = vmatpush2.msra.mxu0 0.0
    %4397 = vmatprep.subr.mxu0 0.0
    %4398 = vmatpush2.msra.mxu0 0.0
    %4399 = vmatprep.mubr.f32.mxu0 0.0
    %4400 = vmatmul.mubr.f32.gmra.mxu0 %v4312
    %v4401 = vpop.f32.mrf.mxu0
    %v4402 = vadd.f32 %v4273, %v4401
    %v4403 = vpop.f32.mrf.mxu0
    %4404 = vmatprep.mubr.f32.mxu0 0.0
    %4405 = vmatmul.mubr.f32.gmra.mxu0 %v4315
    %v4406 = vpop.f32.mrf.mxu0
    %v4407 = vadd.f32 %v4278, %v4406
    %v4408 = vpop.f32.mrf.mxu0
    %4409 = vmatprep.mubr.f32.mxu0 0.0
    %4410 = vmatmul.mubr.f32.gmra.mxu0 %v4318
    %v4411 = vpop.f32.mrf.mxu0
    %v4412 = vadd.f32 %v4283, %v4411
    %v4413 = vpop.f32.mrf.mxu0
    %4414 = vmatprep.mubr.f32.mxu0 0.0
    %4415 = vmatmul.mubr.f32.gmra.mxu0 %v4321
    %v4416 = vpop.f32.mrf.mxu0
    %v4417 = vadd.f32 %v4288, %v4416
    %v4418 = vpop.f32.mrf.mxu0
    %4419 = vmatprep.mubr.f32.mxu0 0.0
    %4420 = vmatmul.mubr.f32.gmra.mxu0 %v4324
    %v4421 = vpop.f32.mrf.mxu0
    %v4422 = vadd.f32 %v4293, %v4421
    %v4423 = vpop.f32.mrf.mxu0
    %4424 = vmatprep.mubr.f32.mxu0 0.0
    %4425 = vmatmul.mubr.f32.gmra.mxu0 %v4327
    %v4426 = vpop.f32.mrf.mxu0
    %v4427 = vadd.f32 %v4298, %v4426
    %v4428 = vpop.f32.mrf.mxu0
    %4429 = vmatprep.mubr.f32.mxu0 0.0
    %4430 = vmatmul.mubr.f32.gmra.mxu0 %v4330
    %v4431 = vpop.f32.mrf.mxu0
    %v4432 = vadd.f32 %v4303, %v4431
    %v4433 = vpop.f32.mrf.mxu0
    %4434 = vmatprep.mubr.f32.mxu0 0.0
    %4435 = vmatmul.mubr.f32.gmra.mxu0 %v4333
    %v4436 = vpop.f32.mrf.mxu0
    %v4437 = vadd.f32 %v4308, %v4436
    %v4438 = vpop.f32.mrf.mxu0
    %4439 = vdwg.mxu0
    %v4441 = vsel %vm4310, %v4246, 0
    %v4444 = vsel %vm4310, %v4247, 0
    %v4447 = vsel %vm4310, %v4248, 0
    %v4450 = vsel %vm4310, %v4249, 0
    %v4453 = vsel %vm4310, %v4250, 0
    %v4456 = vsel %vm4310, %v4251, 0
    %v4459 = vsel %vm4310, %v4252, 0
    %v4462 = vsel %vm4310, %v4253, 0
    %4464 = vmatprep.subr.mxu0 0.0
    %4465 = vmatpush1.msra.mxu0 0.0
    %4466 = vmatprep.subr.mxu0 0.0
    %4467 = vmatpush1.msra.mxu0 0.0
    %4468 = vmatprep.subr.mxu0 0.0
    %4469 = vmatpush1.msra.mxu0 0.0
    %4470 = vmatprep.subr.mxu0 0.0
    %4471 = vmatpush1.msra.mxu0 0.0
    %4472 = vmatprep.subr.mxu0 0.0
    %4473 = vmatpush1.msra.mxu0 0.0
    %4474 = vmatprep.subr.mxu0 0.0
    %4475 = vmatpush1.msra.mxu0 0.0
    %4476 = vmatprep.subr.mxu0 0.0
    %4477 = vmatpush1.msra.mxu0 0.0
    %4478 = vmatprep.subr.mxu0 0.0
    %4479 = vmatpush1.msra.mxu0 0.0
    %4480 = vmatprep.subr.mxu0 0.0
    %4481 = vmatpush1.msra.mxu0 0.0
    %4482 = vmatprep.subr.mxu0 0.0
    %4483 = vmatpush1.msra.mxu0 0.0
    %4484 = vmatprep.subr.mxu0 0.0
    %4485 = vmatpush1.msra.mxu0 0.0
    %4486 = vmatprep.subr.mxu0 0.0
    %4487 = vmatpush1.msra.mxu0 0.0
    %4488 = vmatprep.subr.mxu0 0.0
    %4489 = vmatpush1.msra.mxu0 0.0
    %4490 = vmatprep.subr.mxu0 0.0
    %4491 = vmatpush1.msra.mxu0 0.0
    %4492 = vmatprep.subr.mxu0 0.0
    %4493 = vmatpush1.msra.mxu0 0.0
    %4494 = vmatprep.subr.mxu0 0.0
    %4495 = vmatpush1.msra.mxu0 %v4236
    %4496 = vmatprep.subr.mxu0 0.0
    %4497 = vmatpush2.msra.mxu0 0.0
    %4498 = vmatprep.subr.mxu0 0.0
    %4499 = vmatpush2.msra.mxu0 0.0
    %4500 = vmatprep.subr.mxu0 0.0
    %4501 = vmatpush2.msra.mxu0 0.0
    %4502 = vmatprep.subr.mxu0 0.0
    %4503 = vmatpush2.msra.mxu0 0.0
    %4504 = vmatprep.subr.mxu0 0.0
    %4505 = vmatpush2.msra.mxu0 0.0
    %4506 = vmatprep.subr.mxu0 0.0
    %4507 = vmatpush2.msra.mxu0 0.0
    %4508 = vmatprep.subr.mxu0 0.0
    %4509 = vmatpush2.msra.mxu0 0.0
    %4510 = vmatprep.subr.mxu0 0.0
    %4511 = vmatpush2.msra.mxu0 0.0
    %4512 = vmatprep.subr.mxu0 0.0
    %4513 = vmatpush2.msra.mxu0 0.0
    %4514 = vmatprep.subr.mxu0 0.0
    %4515 = vmatpush2.msra.mxu0 0.0
    %4516 = vmatprep.subr.mxu0 0.0
    %4517 = vmatpush2.msra.mxu0 0.0
    %4518 = vmatprep.subr.mxu0 0.0
    %4519 = vmatpush2.msra.mxu0 0.0
    %4520 = vmatprep.subr.mxu0 0.0
    %4521 = vmatpush2.msra.mxu0 0.0
    %4522 = vmatprep.subr.mxu0 0.0
    %4523 = vmatpush2.msra.mxu0 0.0
    %4524 = vmatprep.subr.mxu0 0.0
    %4525 = vmatpush2.msra.mxu0 0.0
    %4526 = vmatprep.subr.mxu0 0.0
    %4527 = vmatpush2.msra.mxu0 0.0
    %4528 = vmatprep.mubr.f32.mxu0 0.0
    %4529 = vmatmul.mubr.f32.gmra.mxu0 %v4441
    %v4530 = vpop.f32.mrf.mxu0
    %v4531 = vadd.f32 %v4273, %v4530
    %v4532 = vpop.f32.mrf.mxu0
    %4533 = vmatprep.mubr.f32.mxu0 0.0
    %4534 = vmatmul.mubr.f32.gmra.mxu0 %v4444
    %v4535 = vpop.f32.mrf.mxu0
    %v4536 = vadd.f32 %v4278, %v4535
    %v4537 = vpop.f32.mrf.mxu0
    %4538 = vmatprep.mubr.f32.mxu0 0.0
    %4539 = vmatmul.mubr.f32.gmra.mxu0 %v4447
    %v4540 = vpop.f32.mrf.mxu0
    %v4541 = vadd.f32 %v4283, %v4540
    %v4542 = vpop.f32.mrf.mxu0
    %4543 = vmatprep.mubr.f32.mxu0 0.0
    %4544 = vmatmul.mubr.f32.gmra.mxu0 %v4450
    %v4545 = vpop.f32.mrf.mxu0
    %v4546 = vadd.f32 %v4288, %v4545
    %v4547 = vpop.f32.mrf.mxu0
    %4548 = vmatprep.mubr.f32.mxu0 0.0
    %4549 = vmatmul.mubr.f32.gmra.mxu0 %v4453
    %v4550 = vpop.f32.mrf.mxu0
    %v4551 = vadd.f32 %v4293, %v4550
    %v4552 = vpop.f32.mrf.mxu0
    %4553 = vmatprep.mubr.f32.mxu0 0.0
    %4554 = vmatmul.mubr.f32.gmra.mxu0 %v4456
    %v4555 = vpop.f32.mrf.mxu0
    %v4556 = vadd.f32 %v4298, %v4555
    %v4557 = vpop.f32.mrf.mxu0
    %4558 = vmatprep.mubr.f32.mxu0 0.0
    %4559 = vmatmul.mubr.f32.gmra.mxu0 %v4459
    %v4560 = vpop.f32.mrf.mxu0
    %v4561 = vadd.f32 %v4303, %v4560
    %v4562 = vpop.f32.mrf.mxu0
    %4563 = vmatprep.mubr.f32.mxu0 0.0
    %4564 = vmatmul.mubr.f32.gmra.mxu0 %v4462
    %v4565 = vpop.f32.mrf.mxu0
    %v4566 = vadd.f32 %v4308, %v4565
    %v4567 = vpop.f32.mrf.mxu0
    %4568 = vdwg.mxu0
    %v4570 = vsel %vm4310, %v4254, 0
    %v4573 = vsel %vm4310, %v4255, 0
    %v4576 = vsel %vm4310, %v4256, 0
    %v4579 = vsel %vm4310, %v4257, 0
    %v4582 = vsel %vm4310, %v4258, 0
    %v4585 = vsel %vm4310, %v4259, 0
    %v4588 = vsel %vm4310, %v4260, 0
    %v4591 = vsel %vm4310, %v4261, 0
    %4593 = vmatprep.subr.mxu0 0.0
    %4594 = vmatpush1.msra.mxu0 0.0
    %4595 = vmatprep.subr.mxu0 0.0
    %4596 = vmatpush1.msra.mxu0 0.0
    %4597 = vmatprep.subr.mxu0 0.0
    %4598 = vmatpush1.msra.mxu0 0.0
    %4599 = vmatprep.subr.mxu0 0.0
    %4600 = vmatpush1.msra.mxu0 0.0
    %4601 = vmatprep.subr.mxu0 0.0
    %4602 = vmatpush1.msra.mxu0 0.0
    %4603 = vmatprep.subr.mxu0 0.0
    %4604 = vmatpush1.msra.mxu0 0.0
    %4605 = vmatprep.subr.mxu0 0.0
    %4606 = vmatpush1.msra.mxu0 0.0
    %4607 = vmatprep.subr.mxu0 0.0
    %4608 = vmatpush1.msra.mxu0 0.0
    %4609 = vmatprep.subr.mxu0 0.0
    %4610 = vmatpush1.msra.mxu0 0.0
    %4611 = vmatprep.subr.mxu0 0.0
    %4612 = vmatpush1.msra.mxu0 0.0
    %4613 = vmatprep.subr.mxu0 0.0
    %4614 = vmatpush1.msra.mxu0 0.0
    %4615 = vmatprep.subr.mxu0 0.0
    %4616 = vmatpush1.msra.mxu0 0.0
    %4617 = vmatprep.subr.mxu0 0.0
    %4618 = vmatpush1.msra.mxu0 0.0
    %4619 = vmatprep.subr.mxu0 0.0
    %4620 = vmatpush1.msra.mxu0 0.0
    %4621 = vmatprep.subr.mxu0 0.0
    %4622 = vmatpush1.msra.mxu0 0.0
    %4623 = vmatprep.subr.mxu0 0.0
    %4624 = vmatpush1.msra.mxu0 %v4237
    %4625 = vmatprep.subr.mxu0 0.0
    %4626 = vmatpush2.msra.mxu0 0.0
    %4627 = vmatprep.subr.mxu0 0.0
    %4628 = vmatpush2.msra.mxu0 0.0
    %4629 = vmatprep.subr.mxu0 0.0
    %4630 = vmatpush2.msra.mxu0 0.0
    %4631 = vmatprep.subr.mxu0 0.0
    %4632 = vmatpush2.msra.mxu0 0.0
    %4633 = vmatprep.subr.mxu0 0.0
    %4634 = vmatpush2.msra.mxu0 0.0
    %4635 = vmatprep.subr.mxu0 0.0
    %4636 = vmatpush2.msra.mxu0 0.0
    %4637 = vmatprep.subr.mxu0 0.0
    %4638 = vmatpush2.msra.mxu0 0.0
    %4639 = vmatprep.subr.mxu0 0.0
    %4640 = vmatpush2.msra.mxu0 0.0
    %4641 = vmatprep.subr.mxu0 0.0
    %4642 = vmatpush2.msra.mxu0 0.0
    %4643 = vmatprep.subr.mxu0 0.0
    %4644 = vmatpush2.msra.mxu0 0.0
    %4645 = vmatprep.subr.mxu0 0.0
    %4646 = vmatpush2.msra.mxu0 0.0
    %4647 = vmatprep.subr.mxu0 0.0
    %4648 = vmatpush2.msra.mxu0 0.0
    %4649 = vmatprep.subr.mxu0 0.0
    %4650 = vmatpush2.msra.mxu0 0.0
    %4651 = vmatprep.subr.mxu0 0.0
    %4652 = vmatpush2.msra.mxu0 0.0
    %4653 = vmatprep.subr.mxu0 0.0
    %4654 = vmatpush2.msra.mxu0 0.0
    %4655 = vmatprep.subr.mxu0 0.0
    %4656 = vmatpush2.msra.mxu0 0.0
    %4657 = vmatprep.mubr.f32.mxu0 0.0
    %4658 = vmatmul.mubr.f32.gmra.mxu0 %v4570
    %v4659 = vpop.f32.mrf.mxu0
    %v4660 = vadd.f32 %v4273, %v4659
    %v4661 = vpop.f32.mrf.mxu0
    %4662 = vmatprep.mubr.f32.mxu0 0.0
    %4663 = vmatmul.mubr.f32.gmra.mxu0 %v4573
    %v4664 = vpop.f32.mrf.mxu0
    %v4665 = vadd.f32 %v4278, %v4664
    %v4666 = vpop.f32.mrf.mxu0
    %4667 = vmatprep.mubr.f32.mxu0 0.0
    %4668 = vmatmul.mubr.f32.gmra.mxu0 %v4576
    %v4669 = vpop.f32.mrf.mxu0
    %v4670 = vadd.f32 %v4283, %v4669
    %v4671 = vpop.f32.mrf.mxu0
    %4672 = vmatprep.mubr.f32.mxu0 0.0
    %4673 = vmatmul.mubr.f32.gmra.mxu0 %v4579
    %v4674 = vpop.f32.mrf.mxu0
    %v4675 = vadd.f32 %v4288, %v4674
    %v4676 = vpop.f32.mrf.mxu0
    %4677 = vmatprep.mubr.f32.mxu0 0.0
    %4678 = vmatmul.mubr.f32.gmra.mxu0 %v4582
    %v4679 = vpop.f32.mrf.mxu0
    %v4680 = vadd.f32 %v4293, %v4679
    %v4681 = vpop.f32.mrf.mxu0
    %4682 = vmatprep.mubr.f32.mxu0 0.0
    %4683 = vmatmul.mubr.f32.gmra.mxu0 %v4585
    %v4684 = vpop.f32.mrf.mxu0
    %v4685 = vadd.f32 %v4298, %v4684
    %v4686 = vpop.f32.mrf.mxu0
    %4687 = vmatprep.mubr.f32.mxu0 0.0
    %4688 = vmatmul.mubr.f32.gmra.mxu0 %v4588
    %v4689 = vpop.f32.mrf.mxu0
    %v4690 = vadd.f32 %v4303, %v4689
    %v4691 = vpop.f32.mrf.mxu0
    %4692 = vmatprep.mubr.f32.mxu0 0.0
    %4693 = vmatmul.mubr.f32.gmra.mxu0 %v4591
    %v4694 = vpop.f32.mrf.mxu0
    %v4695 = vadd.f32 %v4308, %v4694
    %v4696 = vpop.f32.mrf.mxu0
    %4697 = vdwg.mxu0
    %v4698 = vtanh.pop %v4402
    %v4699 = vtanh.pop %v4407
    %v4700 = vtanh.pop %v4412
    %v4701 = vtanh.pop %v4417
    %v4702 = vtanh.pop %v4422
    %v4703 = vtanh.pop %v4427
    %v4704 = vtanh.pop %v4432
    %v4705 = vtanh.pop %v4437
    %v4706 = vtanh.pop %v4531
    %v4707 = vtanh.pop %v4536
    %v4708 = vtanh.pop %v4541
    %v4709 = vtanh.pop %v4546
    %v4710 = vtanh.pop %v4551
    %v4711 = vtanh.pop %v4556
    %v4712 = vtanh.pop %v4561
    %v4713 = vtanh.pop %v4566
    %v4714 = vtanh.pop %v4660
    %v4715 = vtanh.pop %v4665
    %v4716 = vtanh.pop %v4670
    %v4717 = vtanh.pop %v4675
    %v4718 = vtanh.pop %v4680
    %v4719 = vtanh.pop %v4685
    %v4720 = vtanh.pop %v4690
    %v4721 = vtanh.pop %v4695
    %v4722 = vld [vmem:[%s11] sm:$0xff]
    %v4723 = vld [vmem:[%s11 + $0x8] sm:$0xff]
    %v4724 = vld [vmem:[%s11 + $0x10] sm:$0xff]
    %v4725 = vld [vmem:[%s12] sm:$0xff]
    %4727 = vset.pattern.permute.xlu0 0
    %4728 = vperm.xlu0 %4727, %v4725
    %v4729 = vpop.permute.xlu0 %4728
    %vm4731 = vcmask 523264
    %v4733 = vsel %vm4731, %v4722, 0
    %4735 = vmatprep.subr.mxu0 0.0
    %4736 = vmatpush1.msra.mxu0 0.0
    %4737 = vmatprep.subr.mxu0 0.0
    %4738 = vmatpush1.msra.mxu0 0.0
    %4739 = vmatprep.subr.mxu0 0.0
    %4740 = vmatpush1.msra.mxu0 0.0
    %4741 = vmatprep.subr.mxu0 0.0
    %4742 = vmatpush1.msra.mxu0 0.0
    %4743 = vmatprep.subr.mxu0 0.0
    %4744 = vmatpush1.msra.mxu0 0.0
    %4745 = vmatprep.subr.mxu0 0.0
    %4746 = vmatpush1.msra.mxu0 0.0
    %4747 = vmatprep.subr.mxu0 0.0
    %4748 = vmatpush1.msra.mxu0 0.0
    %4749 = vmatprep.subr.mxu0 0.0
    %4750 = vmatpush1.msra.mxu0 0.0
    %4751 = vmatprep.subr.mxu0 0.0
    %4752 = vmatpush1.msra.mxu0 %v4705
    %4753 = vmatprep.subr.mxu0 0.0
    %4754 = vmatpush1.msra.mxu0 %v4704
    %4755 = vmatprep.subr.mxu0 0.0
    %4756 = vmatpush1.msra.mxu0 %v4703
    %4757 = vmatprep.subr.mxu0 0.0
    %4758 = vmatpush1.msra.mxu0 %v4702
    %4759 = vmatprep.subr.mxu0 0.0
    %4760 = vmatpush1.msra.mxu0 %v4701
    %4761 = vmatprep.subr.mxu0 0.0
    %4762 = vmatpush1.msra.mxu0 %v4700
    %4763 = vmatprep.subr.mxu0 0.0
    %4764 = vmatpush1.msra.mxu0 %v4699
    %4765 = vmatprep.subr.mxu0 0.0
    %4766 = vmatpush1.msra.mxu0 %v4698
    %4767 = vmatprep.subr.mxu0 0.0
    %4768 = vmatpush2.msra.mxu0 0.0
    %4769 = vmatprep.subr.mxu0 0.0
    %4770 = vmatpush2.msra.mxu0 0.0
    %4771 = vmatprep.subr.mxu0 0.0
    %4772 = vmatpush2.msra.mxu0 0.0
    %4773 = vmatprep.subr.mxu0 0.0
    %4774 = vmatpush2.msra.mxu0 0.0
    %4775 = vmatprep.subr.mxu0 0.0
    %4776 = vmatpush2.msra.mxu0 0.0
    %4777 = vmatprep.subr.mxu0 0.0
    %4778 = vmatpush2.msra.mxu0 0.0
    %4779 = vmatprep.subr.mxu0 0.0
    %4780 = vmatpush2.msra.mxu0 0.0
    %4781 = vmatprep.subr.mxu0 0.0
    %4782 = vmatpush2.msra.mxu0 0.0
    %4783 = vmatprep.subr.mxu0 0.0
    %4784 = vmatpush2.msra.mxu0 0.0
    %4785 = vmatprep.subr.mxu0 0.0
    %4786 = vmatpush2.msra.mxu0 0.0
    %4787 = vmatprep.subr.mxu0 0.0
    %4788 = vmatpush2.msra.mxu0 0.0
    %4789 = vmatprep.subr.mxu0 0.0
    %4790 = vmatpush2.msra.mxu0 0.0
    %4791 = vmatprep.subr.mxu0 0.0
    %4792 = vmatpush2.msra.mxu0 0.0
    %4793 = vmatprep.subr.mxu0 0.0
    %4794 = vmatpush2.msra.mxu0 0.0
    %4795 = vmatprep.subr.mxu0 0.0
    %4796 = vmatpush2.msra.mxu0 0.0
    %4797 = vmatprep.subr.mxu0 0.0
    %4798 = vmatpush2.msra.mxu0 0.0
    %4799 = vmatprep.mubr.f32.mxu0 0.0
    %4800 = vmatmul.mubr.f32.gmra.mxu0 %v4733
    %v4801 = vpop.f32.mrf.mxu0
    %v4802 = vadd.f32 %v4729, %v4801
    %v4803 = vpop.f32.mrf.mxu0
    %4804 = vdwg.mxu0
    %v4806 = vsel %vm4731, %v4723, 0
    %4808 = vmatprep.subr.mxu0 0.0
    %4809 = vmatpush1.msra.mxu0 0.0
    %4810 = vmatprep.subr.mxu0 0.0
    %4811 = vmatpush1.msra.mxu0 0.0
    %4812 = vmatprep.subr.mxu0 0.0
    %4813 = vmatpush1.msra.mxu0 0.0
    %4814 = vmatprep.subr.mxu0 0.0
    %4815 = vmatpush1.msra.mxu0 0.0
    %4816 = vmatprep.subr.mxu0 0.0
    %4817 = vmatpush1.msra.mxu0 0.0
    %4818 = vmatprep.subr.mxu0 0.0
    %4819 = vmatpush1.msra.mxu0 0.0
    %4820 = vmatprep.subr.mxu0 0.0
    %4821 = vmatpush1.msra.mxu0 0.0
    %4822 = vmatprep.subr.mxu0 0.0
    %4823 = vmatpush1.msra.mxu0 0.0
    %4824 = vmatprep.subr.mxu0 0.0
    %4825 = vmatpush1.msra.mxu0 %v4713
    %4826 = vmatprep.subr.mxu0 0.0
    %4827 = vmatpush1.msra.mxu0 %v4712
    %4828 = vmatprep.subr.mxu0 0.0
    %4829 = vmatpush1.msra.mxu0 %v4711
    %4830 = vmatprep.subr.mxu0 0.0
    %4831 = vmatpush1.msra.mxu0 %v4710
    %4832 = vmatprep.subr.mxu0 0.0
    %4833 = vmatpush1.msra.mxu0 %v4709
    %4834 = vmatprep.subr.mxu0 0.0
    %4835 = vmatpush1.msra.mxu0 %v4708
    %4836 = vmatprep.subr.mxu0 0.0
    %4837 = vmatpush1.msra.mxu0 %v4707
    %4838 = vmatprep.subr.mxu0 0.0
    %4839 = vmatpush1.msra.mxu0 %v4706
    %4840 = vmatprep.subr.mxu0 0.0
    %4841 = vmatpush2.msra.mxu0 0.0
    %4842 = vmatprep.subr.mxu0 0.0
    %4843 = vmatpush2.msra.mxu0 0.0
    %4844 = vmatprep.subr.mxu0 0.0
    %4845 = vmatpush2.msra.mxu0 0.0
    %4846 = vmatprep.subr.mxu0 0.0
    %4847 = vmatpush2.msra.mxu0 0.0
    %4848 = vmatprep.subr.mxu0 0.0
    %4849 = vmatpush2.msra.mxu0 0.0
    %4850 = vmatprep.subr.mxu0 0.0
    %4851 = vmatpush2.msra.mxu0 0.0
    %4852 = vmatprep.subr.mxu0 0.0
    %4853 = vmatpush2.msra.mxu0 0.0
    %4854 = vmatprep.subr.mxu0 0.0
    %4855 = vmatpush2.msra.mxu0 0.0
    %4856 = vmatprep.subr.mxu0 0.0
    %4857 = vmatpush2.msra.mxu0 0.0
    %4858 = vmatprep.subr.mxu0 0.0
    %4859 = vmatpush2.msra.mxu0 0.0
    %4860 = vmatprep.subr.mxu0 0.0
    %4861 = vmatpush2.msra.mxu0 0.0
    %4862 = vmatprep.subr.mxu0 0.0
    %4863 = vmatpush2.msra.mxu0 0.0
    %4864 = vmatprep.subr.mxu0 0.0
    %4865 = vmatpush2.msra.mxu0 0.0
    %4866 = vmatprep.subr.mxu0 0.0
    %4867 = vmatpush2.msra.mxu0 0.0
    %4868 = vmatprep.subr.mxu0 0.0
    %4869 = vmatpush2.msra.mxu0 0.0
    %4870 = vmatprep.subr.mxu0 0.0
    %4871 = vmatpush2.msra.mxu0 0.0
    %4872 = vmatprep.mubr.f32.mxu0 0.0
    %4873 = vmatmul.mubr.f32.gmra.mxu0 %v4806
    %v4874 = vpop.f32.mrf.mxu0
    %v4875 = vadd.f32 %v4729, %v4874
    %v4876 = vpop.f32.mrf.mxu0
    %4877 = vdwg.mxu0
    %v4879 = vsel %vm4731, %v4724, 0
    %4881 = vmatprep.subr.mxu0 0.0
    %4882 = vmatpush1.msra.mxu0 0.0
    %4883 = vmatprep.subr.mxu0 0.0
    %4884 = vmatpush1.msra.mxu0 0.0
    %4885 = vmatprep.subr.mxu0 0.0
    %4886 = vmatpush1.msra.mxu0 0.0
    %4887 = vmatprep.subr.mxu0 0.0
    %4888 = vmatpush1.msra.mxu0 0.0
    %4889 = vmatprep.subr.mxu0 0.0
    %4890 = vmatpush1.msra.mxu0 0.0
    %4891 = vmatprep.subr.mxu0 0.0
    %4892 = vmatpush1.msra.mxu0 0.0
    %4893 = vmatprep.subr.mxu0 0.0
    %4894 = vmatpush1.msra.mxu0 0.0
    %4895 = vmatprep.subr.mxu0 0.0
    %4896 = vmatpush1.msra.mxu0 0.0
    %4897 = vmatprep.subr.mxu0 0.0
    %4898 = vmatpush1.msra.mxu0 %v4721
    %4899 = vmatprep.subr.mxu0 0.0
    %4900 = vmatpush1.msra.mxu0 %v4720
    %4901 = vmatprep.subr.mxu0 0.0
    %4902 = vmatpush1.msra.mxu0 %v4719
    %4903 = vmatprep.subr.mxu0 0.0
    %4904 = vmatpush1.msra.mxu0 %v4718
    %4905 = vmatprep.subr.mxu0 0.0
    %4906 = vmatpush1.msra.mxu0 %v4717
    %4907 = vmatprep.subr.mxu0 0.0
    %4908 = vmatpush1.msra.mxu0 %v4716
    %4909 = vmatprep.subr.mxu0 0.0
    %4910 = vmatpush1.msra.mxu0 %v4715
    %4911 = vmatprep.subr.mxu0 0.0
    %4912 = vmatpush1.msra.mxu0 %v4714
    %4913 = vmatprep.subr.mxu0 0.0
    %4914 = vmatpush2.msra.mxu0 0.0
    %4915 = vmatprep.subr.mxu0 0.0
    %4916 = vmatpush2.msra.mxu0 0.0
    %4917 = vmatprep.subr.mxu0 0.0
    %4918 = vmatpush2.msra.mxu0 0.0
    %4919 = vmatprep.subr.mxu0 0.0
    %4920 = vmatpush2.msra.mxu0 0.0
    %4921 = vmatprep.subr.mxu0 0.0
    %4922 = vmatpush2.msra.mxu0 0.0
    %4923 = vmatprep.subr.mxu0 0.0
    %4924 = vmatpush2.msra.mxu0 0.0
    %4925 = vmatprep.subr.mxu0 0.0
    %4926 = vmatpush2.msra.mxu0 0.0
    %4927 = vmatprep.subr.mxu0 0.0
    %4928 = vmatpush2.msra.mxu0 0.0
    %4929 = vmatprep.subr.mxu0 0.0
    %4930 = vmatpush2.msra.mxu0 0.0
    %4931 = vmatprep.subr.mxu0 0.0
    %4932 = vmatpush2.msra.mxu0 0.0
    %4933 = vmatprep.subr.mxu0 0.0
    %4934 = vmatpush2.msra.mxu0 0.0
    %4935 = vmatprep.subr.mxu0 0.0
    %4936 = vmatpush2.msra.mxu0 0.0
    %4937 = vmatprep.subr.mxu0 0.0
    %4938 = vmatpush2.msra.mxu0 0.0
    %4939 = vmatprep.subr.mxu0 0.0
    %4940 = vmatpush2.msra.mxu0 0.0
    %4941 = vmatprep.subr.mxu0 0.0
    %4942 = vmatpush2.msra.mxu0 0.0
    %4943 = vmatprep.subr.mxu0 0.0
    %4944 = vmatpush2.msra.mxu0 0.0
    %4945 = vmatprep.mubr.f32.mxu0 0.0
    %4946 = vmatmul.mubr.f32.gmra.mxu0 %v4879
    %v4947 = vpop.f32.mrf.mxu0
    %v4948 = vadd.f32 %v4729, %v4947
    %v4949 = vpop.f32.mrf.mxu0
    %4950 = vdwg.mxu0
    %4951 = vst [vmem:[#allocation2] sm:$0xff] %v4802
    %4952 = vst [vmem:[#allocation2 + $0x8] sm:$0xff] %v4875
    %4953 = vst [vmem:[#allocation2 + $0x10] sm:$0xff] %v4948
    // Predicated region
    $region54: #{tpu_custom_call.1} parent=1 // pred_check
      _
    $region55: #{tpu_custom_call.1} parent=1 // pred_check_branch
      %4955 = sbr.rel (0) target = $region57
    $region56: #{tpu_custom_call.1} parent=1 // pred_region
      %s4957 = ssub.s32 384, 384
      %4958 = vsyncadd [#allocation3], %s4957
      %s4959 = sshll.u32 [#allocation2], 4
      %s4960 = int_to_ptr.vmem [resolvable:$true] %s4959
      %4965 = dma.vmem_to_hbm [thread:$0]  %s4960, 384, %s13, [#allocation3], 128, 128, 8
    $region57: #{tpu_custom_call.1} parent=1 // pred_fallthru
      _
    // Predicated region
    $region58: #{tpu_custom_call.1} parent=1 // pred_check
      _
    $region59: #{tpu_custom_call.1} parent=1 // pred_check_branch
      %4967 = sbr.rel (0) target = $region61
    $region60: #{tpu_custom_call.1} parent=1 // pred_region
      %4968 = dma.done [#allocation3], 384
    $region61: #{tpu_custom_call.1} parent=1 // pred_fallthru
      _
    %4969 = vsyncpa [#allocation3], 1

</llo_original>
